<compile_context>
chip_gen: v7x
topology: tpu7x:2x2x1
jax: 0.10.0
libtpu: 0.0.40
codegen_flags: <defaults>
</compile_context>

<pallas_src>
import numpy as np

import jax
import jax.numpy as jnp
from jax.experimental import pallas as pl
from jax.experimental.pallas import tpu as pltpu


BLOCK_B = 8   # images processed per grid step


# ----------------------------------------------------------------------------
# Fused LeNet kernel (runs once per block of B images; grid = (N/B,))
# ----------------------------------------------------------------------------
def _lenet_kernel(x_ref, t1_ref, b1_ref, sh1_ref, sw1_ref,
                  t2_ref, b2_ref, sh2_ref, sw2_ref, selb_ref,
                  w1f_ref, bf1_ref, w2f_ref, bf2_ref, w3f_ref, bf3_ref,
                  o_ref):
    f32, bf16 = jnp.float32, jnp.bfloat16

    x = x_ref[...]                              # [B*32, 32]; image b at rows b*32..
    n1 = x.shape[0] - 4                         # B*32 - 4 shifted-window rows

    # ---- conv1 + bias + ReLU: ONE K-stacked banded GEMM (K = 5*32) ----------
    lhs1 = jnp.concatenate([x[di:di + n1, :] for di in range(5)],
                           axis=1).astype(bf16)                    # [B*32-4, 160]
    acc1 = jnp.dot(lhs1, t1_ref[...], preferred_element_type=f32)  # [B*32-4, 168]
    y1 = jnp.maximum(acc1 + b1_ref[...], 0.0)
    # (rows r>=28 within each image are shift garbage; never selected below)

    # ---- maxpool1 2x2: row-pair selection GEMM + lane-pair selection GEMM ---
    rows1 = jnp.dot(sh1_ref[...], y1.astype(bf16),
                    preferred_element_type=f32)                    # [2*B*14, 168]
    h1q = rows1.shape[0] // 2
    vmax1 = jnp.maximum(rows1[:h1q, :], rows1[h1q:, :])            # [B*14, 168]
    cols1 = jnp.dot(vmax1.astype(bf16), sw1_ref[...],
                    preferred_element_type=f32)                    # [B*14, 168]
    p1 = jnp.maximum(cols1[:, :84], cols1[:, 84:])                 # [B*14, 6*14]

    # ---- conv2 + bias + ReLU: ONE K-stacked banded GEMM (K = 5*84) ----------
    n2 = p1.shape[0] - 4
    lhs2 = jnp.concatenate([p1[di:di + n2, :] for di in range(5)],
                           axis=1).astype(bf16)                    # [B*14-4, 420]
    acc2 = jnp.dot(lhs2, t2_ref[...], preferred_element_type=f32)  # [B*14-4, 160]
    y2 = jnp.maximum(acc2 + b2_ref[...], 0.0)

    # ---- maxpool2 2x2 -------------------------------------------------------
    rows2 = jnp.dot(sh2_ref[...], y2.astype(bf16),
                    preferred_element_type=f32)                    # [2*B*5, 160]
    h2q = rows2.shape[0] // 2
    vmax2 = jnp.maximum(rows2[:h2q, :], rows2[h2q:, :])            # [B*5, 160]
    cols2 = jnp.dot(vmax2.astype(bf16), sw2_ref[...],
                    preferred_element_type=f32)                    # [B*5, 160]
    p2 = jnp.maximum(cols2[:, :80], cols2[:, 80:])                 # [B*5, 16*5]

    # ---- flatten pooled features to one 400-wide row per image --------------
    n3 = p2.shape[0] - 4
    featf = jnp.concatenate([p2[h:h + n3, :] for h in range(5)],
                            axis=1).astype(bf16)                   # [B*5-4, 400]
    feat = jnp.dot(selb_ref[...], featf,
                   preferred_element_type=f32)                     # [B, 400]

    # ---- fc1 -> ReLU -> fc2 -> ReLU -> fc3 (single GEMM each, M = B) --------
    h1 = jnp.maximum(jnp.dot(feat.astype(bf16), w1f_ref[...],
                             preferred_element_type=f32) + bf1_ref[...], 0.0)
    h2 = jnp.maximum(jnp.dot(h1.astype(bf16), w2f_ref[...],
                             preferred_element_type=f32) + bf2_ref[...], 0.0)
    out = jnp.dot(h2.astype(bf16), w3f_ref[...],
                  preferred_element_type=f32) + bf3_ref[...]       # [B, 128]
    o_ref[...] = out


# ----------------------------------------------------------------------------
# Parameters (PyTorch layout) and one-time host-side preprocessing
# ----------------------------------------------------------------------------
def init_params(key):
    ks = jax.random.split(key, 10)
    s = 0.1
    return {
        "c1_w": s * jax.random.normal(ks[0], (6, 1, 5, 5), jnp.float32),
        "c1_b": s * jax.random.normal(ks[1], (6,), jnp.float32),
        "c2_w": s * jax.random.normal(ks[2], (16, 6, 5, 5), jnp.float32),
        "c2_b": s * jax.random.normal(ks[3], (16,), jnp.float32),
        "f1_w": s * jax.random.normal(ks[4], (120, 16 * 5 * 5), jnp.float32),
        "f1_b": s * jax.random.normal(ks[5], (120,), jnp.float32),
        "f2_w": s * jax.random.normal(ks[6], (84, 120), jnp.float32),
        "f2_b": s * jax.random.normal(ks[7], (84,), jnp.float32),
        "f3_w": s * jax.random.normal(ks[8], (36, 84), jnp.float32),  # len(match)=36
        "f3_b": s * jax.random.normal(ks[9], (36,), jnp.float32),
    }


def prepare_params(params, block_b=BLOCK_B):
    """One-time repack of PyTorch-layout weights into kernel GEMM operands."""
    B = block_b
    w1 = np.asarray(params["c1_w"], np.float32)     # [6,1,5,5]
    b1 = np.asarray(params["c1_b"], np.float32)
    w2 = np.asarray(params["c2_w"], np.float32)     # [16,6,5,5]
    b2 = np.asarray(params["c2_b"], np.float32)
    f1w = np.asarray(params["f1_w"], np.float32)    # [120,400]
    f1b = np.asarray(params["f1_b"], np.float32)
    f2w = np.asarray(params["f2_w"], np.float32)    # [84,120]
    f2b = np.asarray(params["f2_b"], np.float32)
    f3w = np.asarray(params["f3_w"], np.float32)    # [36,84]
    f3b = np.asarray(params["f3_b"], np.float32)

    # conv1 K-stacked Toeplitz: T1[di*32 + (j+dj), o*28 + j] = w1[o,0,di,dj]
    T1 = np.zeros((5 * 32, 6 * 28), np.float32)
    j1 = np.arange(28)
    for di in range(5):
        for o in range(6):
            for dj in range(5):
                T1[di * 32 + j1 + dj, o * 28 + j1] = w1[o, 0, di, dj]
    b1row = np.repeat(b1, 28)[None, :]              # [1, 168]

    # pool1 row-pair selection (block-diagonal over the B images of a step).
    SH1 = np.zeros((2 * B * 14, B * 32 - 4), np.float32)
    for b in range(B):
        for i in range(14):
            SH1[b * 14 + i, b * 32 + 2 * i] = 1.0
            SH1[B * 14 + b * 14 + i, b * 32 + 2 * i + 1] = 1.0
    # pool1 column-pair selection.
    SW1 = np.zeros((168, 168), np.float32)
    i14 = np.arange(14)
    for o in range(6):
        SW1[o * 28 + 2 * i14, o * 14 + i14] = 1.0
        SW1[o * 28 + 2 * i14 + 1, 84 + o * 14 + i14] = 1.0

    # conv2 K-stacked Toeplitz: T2[di*84 + c*14 + (j+dj), o*10+j] = w2[o,c,di,dj]
    T2 = np.zeros((5 * 84, 16 * 10), np.float32)
    j2 = np.arange(10)
    for di in range(5):
        for o in range(16):
            for c in range(6):
                for dj in range(5):
                    T2[di * 84 + c * 14 + j2 + dj, o * 10 + j2] = w2[o, c, di, dj]
    b2row = np.repeat(b2, 10)[None, :]              # [1, 160]

    SH2 = np.zeros((2 * B * 5, B * 14 - 4), np.float32)
    for b in range(B):
        for i in range(5):
            SH2[b * 5 + i, b * 14 + 2 * i] = 1.0
            SH2[B * 5 + b * 5 + i, b * 14 + 2 * i + 1] = 1.0
    SW2 = np.zeros((160, 160), np.float32)
    i5 = np.arange(5)
    for o in range(16):
        SW2[o * 10 + 2 * i5, o * 5 + i5] = 1.0
        SW2[o * 10 + 2 * i5 + 1, 80 + o * 5 + i5] = 1.0

    # Compaction matrix: keeps the one valid (stride-5) feature row per image.
    SELB = np.zeros((B, B * 5 - 4), np.float32)
    for b in range(B):
        SELB[b, b * 5] = 1.0

    # fc1 weights: W1full[h*80 + c*5 + w, k] = f1_w[k, c*25 + h*5 + w]
    W1full = f1w.reshape(120, 16, 5, 5).transpose(2, 1, 3, 0).reshape(400, 120)

    # fc3 weights/bias zero-padded to 128 output lanes (unmasked dense store).
    W3pad = np.zeros((84, 128), np.float32)
    W3pad[:, :36] = f3w.T
    b3pad = np.zeros((1, 128), np.float32)
    b3pad[0, :36] = f3b

    bf = lambda a: jnp.asarray(a, dtype=jnp.bfloat16)
    f32 = lambda a: jnp.asarray(a, dtype=jnp.float32)

    return dict(
        t1=bf(T1), b1=f32(b1row), sh1=bf(SH1), sw1=bf(SW1),
        t2=bf(T2), b2=f32(b2row), sh2=bf(SH2), sw2=bf(SW2),
        selb=bf(SELB),
        w1f=bf(np.ascontiguousarray(W1full)), bf1=f32(f1b[None, :]),
        w2f=bf(np.ascontiguousarray(f2w.T)), bf2=f32(f2b[None, :]),
        w3f=bf(W3pad), bf3=f32(b3pad),
    )


_PREP_ORDER = ("t1", "b1", "sh1", "sw1", "t2", "b2", "sh2", "sw2", "selb",
               "w1f", "bf1", "w2f", "bf2", "w3f", "bf3")


def _full_spec(arr):
    nd = arr.ndim
    return pl.BlockSpec(arr.shape, lambda i, _nd=nd: (0,) * _nd)


@jax.jit
def lenet_forward(prep, img):
    """img: [N, 1, 32, 32] float32 -> logits [N, 36]."""
    n = img.shape[0]
    bb = prep["selb"].shape[0]                    # images per grid step (static)
    n_pad = ((n + bb - 1) // bb) * bb
    x = img.reshape(n, 32, 32)
    if n_pad != n:                                # pad batch to a full block
        x = jnp.concatenate(
            [x, jnp.zeros((n_pad - n, 32, 32), x.dtype)], axis=0)
    x2d = x.reshape(n_pad * 32, 32)               # image b at rows b*32..b*32+31

    weights = [prep[k] for k in _PREP_ORDER]
    in_specs = [pl.BlockSpec((bb * 32, 32), lambda i: (i, 0))]
    # Grid-invariant weight blocks (constant index_map) stay resident in VMEM.
    # TODO(synk): if xprof shows these re-DMA'd per step, add
    #             pipeline_mode=pl.Buffered(1) to the weight specs.
    in_specs += [_full_spec(w) for w in weights]

    out = pl.pallas_call(
        _lenet_kernel,
        out_shape=jax.ShapeDtypeStruct((n_pad, 128), jnp.float32),
        grid=(n_pad // bb,),
        in_specs=in_specs,
        out_specs=pl.BlockSpec((bb, 128), lambda i: (i, 0)),
        compiler_params=pltpu.CompilerParams(
            dimension_semantics=("parallel",)),
    )(x2d, *weights)
    return out[:n, :36]


# ----------------------------------------------------------------------------
# Pure-JAX reference (PyTorch semantics, f32 HIGHEST precision)
# ----------------------------------------------------------------------------
def lenet_reference(params, img):
    dn = ("NCHW", "OIHW", "NCHW")
    hp = jax.lax.Precision.HIGHEST

    def pool2x2(x):
        n, c, h, w = x.shape
        return x.reshape(n, c, h // 2, 2, w // 2, 2).max(axis=(3, 5))

    x = jax.lax.conv_general_dilated(img, params["c1_w"], (1, 1), "VALID",
                                     dimension_numbers=dn, precision=hp)
    x = pool2x2(jnp.maximum(x + params["c1_b"][None, :, None, None], 0.0))
    x = jax.lax.conv_general_dilated(x, params["c2_w"], (1, 1), "VALID",
                                     dimension_numbers=dn, precision=hp)
    x = pool2x2(jnp.maximum(x + params["c2_b"][None, :, None, None], 0.0))
    feat = x.reshape(img.shape[0], -1)
    h1 = jnp.maximum(jnp.dot(feat, params["f1_w"].T, precision=hp)
                     + params["f1_b"], 0.0)
    h2 = jnp.maximum(jnp.dot(h1, params["f2_w"].T, precision=hp)
                     + params["f2_b"], 0.0)
    return jnp.dot(h2, params["f3_w"].T, precision=hp) + params["f3_b"]


if __name__ == "__main__":
    key = jax.random.PRNGKey(0)
    k_params, k_img = jax.random.split(key)
    params = init_params(k_params)
    prep = prepare_params(params, block_b=BLOCK_B)

    # LeNet needs 32x32 single-channel input (so conv features are 16*5*5).
    # 16 images -> 2 grid steps of 8 images each (keeps both v7x TCs busy
    # and gives every GEMM an M dimension 8x larger than the per-image kernel).
    img = jax.random.normal(k_img, (16, 1, 32, 32), jnp.float32)

    logits = lenet_forward(prep, img)
    jax.block_until_ready(logits)
    assert logits.shape == (16, 36) and logits.dtype == jnp.float32

    ref = lenet_reference(params, img)
    err = float(jnp.max(jnp.abs(logits - ref)))
    # Tolerance sized for bf16 MXU operands with f32 accumulation
    # (expected max abs error ~1e-2 at these activation scales).
    assert err < 5e-2, f"kernel/reference mismatch: max abs err {err}"
    print("KERNEL_OK")
</pallas_src>

<mosaic_0001>
module attributes {stable_mosaic.version = 11 : i64} {
  func.func @_lenet_kernel(%arg0: i32, %arg1: memref<256x32xf32, #tpu.memory_space<vmem>>, %arg2: memref<160x168xbf16, #tpu.memory_space<vmem>>, %arg3: memref<1x168xf32, #tpu.memory_space<vmem>>, %arg4: memref<224x252xbf16, #tpu.memory_space<vmem>>, %arg5: memref<168x168xbf16, #tpu.memory_space<vmem>>, %arg6: memref<420x160xbf16, #tpu.memory_space<vmem>>, %arg7: memref<1x160xf32, #tpu.memory_space<vmem>>, %arg8: memref<80x108xbf16, #tpu.memory_space<vmem>>, %arg9: memref<160x160xbf16, #tpu.memory_space<vmem>>, %arg10: memref<8x36xbf16, #tpu.memory_space<vmem>>, %arg11: memref<400x120xbf16, #tpu.memory_space<vmem>>, %arg12: memref<1x120xf32, #tpu.memory_space<vmem>>, %arg13: memref<120x84xbf16, #tpu.memory_space<vmem>>, %arg14: memref<1x84xf32, #tpu.memory_space<vmem>>, %arg15: memref<84x128xbf16, #tpu.memory_space<vmem>>, %arg16: memref<1x128xf32, #tpu.memory_space<vmem>>, %arg17: memref<8x128xf32, #tpu.memory_space<vmem>>) attributes {dimension_semantics = [#tpu.dimension_semantics<parallel>], iteration_bounds = array<i64: 2>, scalar_prefetch = 0 : i64, scratch_operands = 0 : i64, tpu.core_type = #tpu.core_type<tc>, window_params = [{transform_indices = @transform_0, window_bounds = array<i64: 256, 32>}, {pipeline_mode = #tpu.pipeline_mode<synchronous>, transform_indices = @transform_1, window_bounds = array<i64: 160, 168>}, {pipeline_mode = #tpu.pipeline_mode<synchronous>, transform_indices = @transform_2, window_bounds = array<i64: 1, 168>}, {pipeline_mode = #tpu.pipeline_mode<synchronous>, transform_indices = @transform_3, window_bounds = array<i64: 224, 252>}, {pipeline_mode = #tpu.pipeline_mode<synchronous>, transform_indices = @transform_4, window_bounds = array<i64: 168, 168>}, {pipeline_mode = #tpu.pipeline_mode<synchronous>, transform_indices = @transform_5, window_bounds = array<i64: 420, 160>}, {pipeline_mode = #tpu.pipeline_mode<synchronous>, transform_indices = @transform_6, window_bounds = array<i64: 1, 160>}, {pipeline_mode = #tpu.pipeline_mode<synchronous>, transform_indices = @transform_7, window_bounds = array<i64: 80, 108>}, {pipeline_mode = #tpu.pipeline_mode<synchronous>, transform_indices = @transform_8, window_bounds = array<i64: 160, 160>}, {pipeline_mode = #tpu.pipeline_mode<synchronous>, transform_indices = @transform_9, window_bounds = array<i64: 8, 36>}, {pipeline_mode = #tpu.pipeline_mode<synchronous>, transform_indices = @transform_10, window_bounds = array<i64: 400, 120>}, {pipeline_mode = #tpu.pipeline_mode<synchronous>, transform_indices = @transform_11, window_bounds = array<i64: 1, 120>}, {pipeline_mode = #tpu.pipeline_mode<synchronous>, transform_indices = @transform_12, window_bounds = array<i64: 120, 84>}, {pipeline_mode = #tpu.pipeline_mode<synchronous>, transform_indices = @transform_13, window_bounds = array<i64: 1, 84>}, {pipeline_mode = #tpu.pipeline_mode<synchronous>, transform_indices = @transform_14, window_bounds = array<i64: 84, 128>}, {pipeline_mode = #tpu.pipeline_mode<synchronous>, transform_indices = @transform_15, window_bounds = array<i64: 1, 128>}, {transform_indices = @transform_16, window_bounds = array<i64: 8, 128>}]} {
    %c0 = arith.constant 0 : index
    %c0_0 = arith.constant 0 : index
    %0 = vector.load %arg1[%c0, %c0_0] : memref<256x32xf32, #tpu.memory_space<vmem>>, vector<256x32xf32>
    %1 = vector.extract_strided_slice %0 {offsets = [0, 0], sizes = [252, 32], strides = [1, 1]} : vector<256x32xf32> to vector<252x32xf32>
    %2 = vector.extract_strided_slice %0 {offsets = [1, 0], sizes = [252, 32], strides = [1, 1]} : vector<256x32xf32> to vector<252x32xf32>
    %3 = vector.extract_strided_slice %0 {offsets = [2, 0], sizes = [252, 32], strides = [1, 1]} : vector<256x32xf32> to vector<252x32xf32>
    %4 = vector.extract_strided_slice %0 {offsets = [3, 0], sizes = [252, 32], strides = [1, 1]} : vector<256x32xf32> to vector<252x32xf32>
    %5 = vector.extract_strided_slice %0 {offsets = [4, 0], sizes = [252, 32], strides = [1, 1]} : vector<256x32xf32> to vector<252x32xf32>
    %6 = tpu.concatenate %1, %2, %3, %4, %5 in 1 : vector<252x32xf32>, vector<252x32xf32>, vector<252x32xf32>, vector<252x32xf32>, vector<252x32xf32> -> vector<252x160xf32>
    %7 = arith.truncf %6 : vector<252x160xf32> to vector<252x160xbf16>
    %c0_1 = arith.constant 0 : index
    %c0_2 = arith.constant 0 : index
    %8 = vector.load %arg2[%c0_1, %c0_2] : memref<160x168xbf16, #tpu.memory_space<vmem>>, vector<160x168xbf16>
    %cst = arith.constant dense<0.000000e+00> : vector<252x168xf32>
    %9 = tpu.matmul %7, %8, %cst {dimension_numbers = #tpu.dot_dimension_numbers<[1], [0], [0], [1], [0, 0, 1, 1], [], []>} : vector<252x160xbf16>, vector<160x168xbf16>, vector<252x168xf32> -> vector<252x168xf32>
    %c0_3 = arith.constant 0 : index
    %c0_4 = arith.constant 0 : index
    %10 = vector.load %arg3[%c0_3, %c0_4] : memref<1x168xf32, #tpu.memory_space<vmem>>, vector<1x168xf32>
    %11 = vector.broadcast %10 : vector<1x168xf32> to vector<252x168xf32>
    %12 = arith.addf %9, %11 : vector<252x168xf32>
    %cst_5 = arith.constant 0.000000e+00 : f32
    %13 = vector.broadcast %cst_5 : f32 to vector<252x168xf32>
    %14 = arith.maximumf %12, %13 : vector<252x168xf32>
    %c0_6 = arith.constant 0 : index
    %c0_7 = arith.constant 0 : index
    %15 = vector.load %arg4[%c0_6, %c0_7] : memref<224x252xbf16, #tpu.memory_space<vmem>>, vector<224x252xbf16>
    %16 = arith.truncf %14 : vector<252x168xf32> to vector<252x168xbf16>
    %cst_8 = arith.constant dense<0.000000e+00> : vector<224x168xf32>
    %17 = tpu.matmul %15, %16, %cst_8 {dimension_numbers = #tpu.dot_dimension_numbers<[1], [0], [0], [1], [0, 0, 1, 1], [], []>} : vector<224x252xbf16>, vector<252x168xbf16>, vector<224x168xf32> -> vector<224x168xf32>
    %18 = vector.extract_strided_slice %17 {offsets = [0, 0], sizes = [112, 168], strides = [1, 1]} : vector<224x168xf32> to vector<112x168xf32>
    %19 = vector.extract_strided_slice %17 {offsets = [112, 0], sizes = [112, 168], strides = [1, 1]} : vector<224x168xf32> to vector<112x168xf32>
    %20 = arith.maximumf %18, %19 : vector<112x168xf32>
    %21 = arith.truncf %20 : vector<112x168xf32> to vector<112x168xbf16>
    %c0_9 = arith.constant 0 : index
    %c0_10 = arith.constant 0 : index
    %22 = vector.load %arg5[%c0_9, %c0_10] : memref<168x168xbf16, #tpu.memory_space<vmem>>, vector<168x168xbf16>
    %cst_11 = arith.constant dense<0.000000e+00> : vector<112x168xf32>
    %23 = tpu.matmul %21, %22, %cst_11 {dimension_numbers = #tpu.dot_dimension_numbers<[1], [0], [0], [1], [0, 0, 1, 1], [], []>} : vector<112x168xbf16>, vector<168x168xbf16>, vector<112x168xf32> -> vector<112x168xf32>
    %24 = vector.extract_strided_slice %23 {offsets = [0, 0], sizes = [112, 84], strides = [1, 1]} : vector<112x168xf32> to vector<112x84xf32>
    %25 = vector.extract_strided_slice %23 {offsets = [0, 84], sizes = [112, 84], strides = [1, 1]} : vector<112x168xf32> to vector<112x84xf32>
    %26 = arith.maximumf %24, %25 : vector<112x84xf32>
    %27 = vector.extract_strided_slice %26 {offsets = [0, 0], sizes = [108, 84], strides = [1, 1]} : vector<112x84xf32> to vector<108x84xf32>
    %28 = vector.extract_strided_slice %26 {offsets = [1, 0], sizes = [108, 84], strides = [1, 1]} : vector<112x84xf32> to vector<108x84xf32>
    %29 = vector.extract_strided_slice %26 {offsets = [2, 0], sizes = [108, 84], strides = [1, 1]} : vector<112x84xf32> to vector<108x84xf32>
    %30 = vector.extract_strided_slice %26 {offsets = [3, 0], sizes = [108, 84], strides = [1, 1]} : vector<112x84xf32> to vector<108x84xf32>
    %31 = vector.extract_strided_slice %26 {offsets = [4, 0], sizes = [108, 84], strides = [1, 1]} : vector<112x84xf32> to vector<108x84xf32>
    %32 = tpu.concatenate %27, %28, %29, %30, %31 in 1 : vector<108x84xf32>, vector<108x84xf32>, vector<108x84xf32>, vector<108x84xf32>, vector<108x84xf32> -> vector<108x420xf32>
    %33 = arith.truncf %32 : vector<108x420xf32> to vector<108x420xbf16>
    %c0_12 = arith.constant 0 : index
    %c0_13 = arith.constant 0 : index
    %34 = vector.load %arg6[%c0_12, %c0_13] : memref<420x160xbf16, #tpu.memory_space<vmem>>, vector<420x160xbf16>
    %cst_14 = arith.constant dense<0.000000e+00> : vector<108x160xf32>
    %35 = tpu.matmul %33, %34, %cst_14 {dimension_numbers = #tpu.dot_dimension_numbers<[1], [0], [0], [1], [0, 0, 1, 1], [], []>} : vector<108x420xbf16>, vector<420x160xbf16>, vector<108x160xf32> -> vector<108x160xf32>
    %c0_15 = arith.constant 0 : index
    %c0_16 = arith.constant 0 : index
    %36 = vector.load %arg7[%c0_15, %c0_16] : memref<1x160xf32, #tpu.memory_space<vmem>>, vector<1x160xf32>
    %37 = vector.broadcast %36 : vector<1x160xf32> to vector<108x160xf32>
    %38 = arith.addf %35, %37 : vector<108x160xf32>
    %cst_17 = arith.constant 0.000000e+00 : f32
    %39 = vector.broadcast %cst_17 : f32 to vector<108x160xf32>
    %40 = arith.maximumf %38, %39 : vector<108x160xf32>
    %c0_18 = arith.constant 0 : index
    %c0_19 = arith.constant 0 : index
    %41 = vector.load %arg8[%c0_18, %c0_19] : memref<80x108xbf16, #tpu.memory_space<vmem>>, vector<80x108xbf16>
    %42 = arith.truncf %40 : vector<108x160xf32> to vector<108x160xbf16>
    %cst_20 = arith.constant dense<0.000000e+00> : vector<80x160xf32>
    %43 = tpu.matmul %41, %42, %cst_20 {dimension_numbers = #tpu.dot_dimension_numbers<[1], [0], [0], [1], [0, 0, 1, 1], [], []>} : vector<80x108xbf16>, vector<108x160xbf16>, vector<80x160xf32> -> vector<80x160xf32>
    %44 = vector.extract_strided_slice %43 {offsets = [0, 0], sizes = [40, 160], strides = [1, 1]} : vector<80x160xf32> to vector<40x160xf32>
    %45 = vector.extract_strided_slice %43 {offsets = [40, 0], sizes = [40, 160], strides = [1, 1]} : vector<80x160xf32> to vector<40x160xf32>
    %46 = arith.maximumf %44, %45 : vector<40x160xf32>
    %47 = arith.truncf %46 : vector<40x160xf32> to vector<40x160xbf16>
    %c0_21 = arith.constant 0 : index
    %c0_22 = arith.constant 0 : index
    %48 = vector.load %arg9[%c0_21, %c0_22] : memref<160x160xbf16, #tpu.memory_space<vmem>>, vector<160x160xbf16>
    %cst_23 = arith.constant dense<0.000000e+00> : vector<40x160xf32>
    %49 = tpu.matmul %47, %48, %cst_23 {dimension_numbers = #tpu.dot_dimension_numbers<[1], [0], [0], [1], [0, 0, 1, 1], [], []>} : vector<40x160xbf16>, vector<160x160xbf16>, vector<40x160xf32> -> vector<40x160xf32>
    %50 = vector.extract_strided_slice %49 {offsets = [0, 0], sizes = [40, 80], strides = [1, 1]} : vector<40x160xf32> to vector<40x80xf32>
    %51 = vector.extract_strided_slice %49 {offsets = [0, 80], sizes = [40, 80], strides = [1, 1]} : vector<40x160xf32> to vector<40x80xf32>
    %52 = arith.maximumf %50, %51 : vector<40x80xf32>
    %53 = vector.extract_strided_slice %52 {offsets = [0, 0], sizes = [36, 80], strides = [1, 1]} : vector<40x80xf32> to vector<36x80xf32>
    %54 = vector.extract_strided_slice %52 {offsets = [1, 0], sizes = [36, 80], strides = [1, 1]} : vector<40x80xf32> to vector<36x80xf32>
    %55 = vector.extract_strided_slice %52 {offsets = [2, 0], sizes = [36, 80], strides = [1, 1]} : vector<40x80xf32> to vector<36x80xf32>
    %56 = vector.extract_strided_slice %52 {offsets = [3, 0], sizes = [36, 80], strides = [1, 1]} : vector<40x80xf32> to vector<36x80xf32>
    %57 = vector.extract_strided_slice %52 {offsets = [4, 0], sizes = [36, 80], strides = [1, 1]} : vector<40x80xf32> to vector<36x80xf32>
    %58 = tpu.concatenate %53, %54, %55, %56, %57 in 1 : vector<36x80xf32>, vector<36x80xf32>, vector<36x80xf32>, vector<36x80xf32>, vector<36x80xf32> -> vector<36x400xf32>
    %59 = arith.truncf %58 : vector<36x400xf32> to vector<36x400xbf16>
    %c0_24 = arith.constant 0 : index
    %c0_25 = arith.constant 0 : index
    %60 = vector.load %arg10[%c0_24, %c0_25] : memref<8x36xbf16, #tpu.memory_space<vmem>>, vector<8x36xbf16>
    %cst_26 = arith.constant dense<0.000000e+00> : vector<8x400xf32>
    %61 = tpu.matmul %60, %59, %cst_26 {dimension_numbers = #tpu.dot_dimension_numbers<[1], [0], [0], [1], [0, 0, 1, 1], [], []>} : vector<8x36xbf16>, vector<36x400xbf16>, vector<8x400xf32> -> vector<8x400xf32>
    %62 = arith.truncf %61 : vector<8x400xf32> to vector<8x400xbf16>
    %c0_27 = arith.constant 0 : index
    %c0_28 = arith.constant 0 : index
    %63 = vector.load %arg11[%c0_27, %c0_28] : memref<400x120xbf16, #tpu.memory_space<vmem>>, vector<400x120xbf16>
    %cst_29 = arith.constant dense<0.000000e+00> : vector<8x120xf32>
    %64 = tpu.matmul %62, %63, %cst_29 {dimension_numbers = #tpu.dot_dimension_numbers<[1], [0], [0], [1], [0, 0, 1, 1], [], []>} : vector<8x400xbf16>, vector<400x120xbf16>, vector<8x120xf32> -> vector<8x120xf32>
    %c0_30 = arith.constant 0 : index
    %c0_31 = arith.constant 0 : index
    %65 = vector.load %arg12[%c0_30, %c0_31] : memref<1x120xf32, #tpu.memory_space<vmem>>, vector<1x120xf32>
    %66 = vector.broadcast %65 : vector<1x120xf32> to vector<8x120xf32>
    %67 = arith.addf %64, %66 : vector<8x120xf32>
    %cst_32 = arith.constant 0.000000e+00 : f32
    %68 = vector.broadcast %cst_32 : f32 to vector<8x120xf32>
    %69 = arith.maximumf %67, %68 : vector<8x120xf32>
    %70 = arith.truncf %69 : vector<8x120xf32> to vector<8x120xbf16>
    %c0_33 = arith.constant 0 : index
    %c0_34 = arith.constant 0 : index
    %71 = vector.load %arg13[%c0_33, %c0_34] : memref<120x84xbf16, #tpu.memory_space<vmem>>, vector<120x84xbf16>
    %cst_35 = arith.constant dense<0.000000e+00> : vector<8x84xf32>
    %72 = tpu.matmul %70, %71, %cst_35 {dimension_numbers = #tpu.dot_dimension_numbers<[1], [0], [0], [1], [0, 0, 1, 1], [], []>} : vector<8x120xbf16>, vector<120x84xbf16>, vector<8x84xf32> -> vector<8x84xf32>
    %c0_36 = arith.constant 0 : index
    %c0_37 = arith.constant 0 : index
    %73 = vector.load %arg14[%c0_36, %c0_37] : memref<1x84xf32, #tpu.memory_space<vmem>>, vector<1x84xf32>
    %74 = vector.broadcast %73 : vector<1x84xf32> to vector<8x84xf32>
    %75 = arith.addf %72, %74 : vector<8x84xf32>
    %cst_38 = arith.constant 0.000000e+00 : f32
    %76 = vector.broadcast %cst_38 : f32 to vector<8x84xf32>
    %77 = arith.maximumf %75, %76 : vector<8x84xf32>
    %78 = arith.truncf %77 : vector<8x84xf32> to vector<8x84xbf16>
    %c0_39 = arith.constant 0 : index
    %c0_40 = arith.constant 0 : index
    %79 = vector.load %arg15[%c0_39, %c0_40] : memref<84x128xbf16, #tpu.memory_space<vmem>>, vector<84x128xbf16>
    %cst_41 = arith.constant dense<0.000000e+00> : vector<8x128xf32>
    %80 = tpu.matmul %78, %79, %cst_41 {dimension_numbers = #tpu.dot_dimension_numbers<[1], [0], [0], [1], [0, 0, 1, 1], [], []>} : vector<8x84xbf16>, vector<84x128xbf16>, vector<8x128xf32> -> vector<8x128xf32>
    %c0_42 = arith.constant 0 : index
    %c0_43 = arith.constant 0 : index
    %81 = vector.load %arg16[%c0_42, %c0_43] : memref<1x128xf32, #tpu.memory_space<vmem>>, vector<1x128xf32>
    %82 = vector.broadcast %81 : vector<1x128xf32> to vector<8x128xf32>
    %83 = arith.addf %80, %82 : vector<8x128xf32>
    %c0_44 = arith.constant 0 : index
    %c0_45 = arith.constant 0 : index
    %84 = vector.load %arg17[%c0_44, %c0_45] : memref<8x128xf32, #tpu.memory_space<vmem>>, vector<8x128xf32>
    tpu.vector_store %arg17[%c0_44, %c0_45], %83 {strides = array<i32>} : memref<8x128xf32, #tpu.memory_space<vmem>>, vector<8x128xf32>,
    return
  }
  func.func @transform_0(%arg0: i32) -> (i32, i32) {
    %c0_i32 = arith.constant 0 : i32
    %c0_i32_0 = arith.constant 0 : i32
    return %arg0, %c0_i32 : i32, i32
  }
  func.func @transform_1(%arg0: i32) -> (i32, i32) {
    %c0_i32 = arith.constant 0 : i32
    %c0_i32_0 = arith.constant 0 : i32
    %c0_i32_1 = arith.constant 0 : i32
    return %c0_i32, %c0_i32_0 : i32, i32
  }
  func.func @transform_2(%arg0: i32) -> (i32, i32) {
    %c0_i32 = arith.constant 0 : i32
    %c0_i32_0 = arith.constant 0 : i32
    %c0_i32_1 = arith.constant 0 : i32
    return %c0_i32, %c0_i32_0 : i32, i32
  }
  func.func @transform_3(%arg0: i32) -> (i32, i32) {
    %c0_i32 = arith.constant 0 : i32
    %c0_i32_0 = arith.constant 0 : i32
    %c0_i32_1 = arith.constant 0 : i32
    return %c0_i32, %c0_i32_0 : i32, i32
  }
  func.func @transform_4(%arg0: i32) -> (i32, i32) {
    %c0_i32 = arith.constant 0 : i32
    %c0_i32_0 = arith.constant 0 : i32
    %c0_i32_1 = arith.constant 0 : i32
    return %c0_i32, %c0_i32_0 : i32, i32
  }
  func.func @transform_5(%arg0: i32) -> (i32, i32) {
    %c0_i32 = arith.constant 0 : i32
    %c0_i32_0 = arith.constant 0 : i32
    %c0_i32_1 = arith.constant 0 : i32
    return %c0_i32, %c0_i32_0 : i32, i32
  }
  func.func @transform_6(%arg0: i32) -> (i32, i32) {
    %c0_i32 = arith.constant 0 : i32
    %c0_i32_0 = arith.constant 0 : i32
    %c0_i32_1 = arith.constant 0 : i32
    return %c0_i32, %c0_i32_0 : i32, i32
  }
  func.func @transform_7(%arg0: i32) -> (i32, i32) {
    %c0_i32 = arith.constant 0 : i32
    %c0_i32_0 = arith.constant 0 : i32
    %c0_i32_1 = arith.constant 0 : i32
    return %c0_i32, %c0_i32_0 : i32, i32
  }
  func.func @transform_8(%arg0: i32) -> (i32, i32) {
    %c0_i32 = arith.constant 0 : i32
    %c0_i32_0 = arith.constant 0 : i32
    %c0_i32_1 = arith.constant 0 : i32
    return %c0_i32, %c0_i32_0 : i32, i32
  }
  func.func @transform_9(%arg0: i32) -> (i32, i32) {
    %c0_i32 = arith.constant 0 : i32
    %c0_i32_0 = arith.constant 0 : i32
    %c0_i32_1 = arith.constant 0 : i32
    return %c0_i32, %c0_i32_0 : i32, i32
  }
  func.func @transform_10(%arg0: i32) -> (i32, i32) {
    %c0_i32 = arith.constant 0 : i32
    %c0_i32_0 = arith.constant 0 : i32
    %c0_i32_1 = arith.constant 0 : i32
    return %c0_i32, %c0_i32_0 : i32, i32
  }
  func.func @transform_11(%arg0: i32) -> (i32, i32) {
    %c0_i32 = arith.constant 0 : i32
    %c0_i32_0 = arith.constant 0 : i32
    %c0_i32_1 = arith.constant 0 : i32
    return %c0_i32, %c0_i32_0 : i32, i32
  }
  func.func @transform_12(%arg0: i32) -> (i32, i32) {
    %c0_i32 = arith.constant 0 : i32
    %c0_i32_0 = arith.constant 0 : i32
    %c0_i32_1 = arith.constant 0 : i32
    return %c0_i32, %c0_i32_0 : i32, i32
  }
  func.func @transform_13(%arg0: i32) -> (i32, i32) {
    %c0_i32 = arith.constant 0 : i32
    %c0_i32_0 = arith.constant 0 : i32
    %c0_i32_1 = arith.constant 0 : i32
    return %c0_i32, %c0_i32_0 : i32, i32
  }
  func.func @transform_14(%arg0: i32) -> (i32, i32) {
    %c0_i32 = arith.constant 0 : i32
    %c0_i32_0 = arith.constant 0 : i32
    %c0_i32_1 = arith.constant 0 : i32
    return %c0_i32, %c0_i32_0 : i32, i32
  }
  func.func @transform_15(%arg0: i32) -> (i32, i32) {
    %c0_i32 = arith.constant 0 : i32
    %c0_i32_0 = arith.constant 0 : i32
    %c0_i32_1 = arith.constant 0 : i32
    return %c0_i32, %c0_i32_0 : i32, i32
  }
  func.func @transform_16(%arg0: i32) -> (i32, i32) {
    %c0_i32 = arith.constant 0 : i32
    %c0_i32_0 = arith.constant 0 : i32
    return %arg0, %c0_i32 : i32, i32
  }
}

</mosaic_0001>

<llo_original>
// kernel: lenet_forward.1
$region0: #{lenet_forward.1}
  #allocation0 [shape = 'u32[]', space=smem, size = 0x4, offset = 0x4, fixed_abs, tag = 'smem constant byte address 0x4 - core index']
  #allocation1 [shape = 'u32[144,128]{1,0:T(1,128)}', space=vmem, size = 0x12000, scoped, tag = 'internal scratch']
  %s0 = inlined_call_operand.vmem [shape: f32[512,32], index: 0, kind: input, shape index: {}]
  %s1 = inlined_call_operand.hbm [shape: bf16[160,168], index: 1, kind: input, shape index: {}]
  %s2 = inlined_call_operand.hbm [shape: f32[1,168], index: 2, kind: input, shape index: {}]
  %s3 = inlined_call_operand.vmem [shape: bf16[224,252], index: 3, kind: input, shape index: {}]
  %s4 = inlined_call_operand.vmem [shape: bf16[168,168], index: 4, kind: input, shape index: {}]
  %s5 = inlined_call_operand.vmem [shape: bf16[420,160], index: 5, kind: input, shape index: {}]
  %s6 = inlined_call_operand.hbm [shape: f32[1,160], index: 6, kind: input, shape index: {}]
  %s7 = inlined_call_operand.hbm [shape: bf16[80,108], index: 7, kind: input, shape index: {}]
  %s8 = inlined_call_operand.hbm [shape: bf16[160,160], index: 8, kind: input, shape index: {}]
  %s9 = inlined_call_operand.vmem [shape: bf16[8,36], index: 9, kind: input, shape index: {}]
  %s10 = inlined_call_operand.hbm [shape: bf16[400,120], index: 10, kind: input, shape index: {}]
  %s11 = inlined_call_operand.hbm [shape: f32[1,120], index: 11, kind: input, shape index: {}]
  %s12 = inlined_call_operand.vmem [shape: bf16[120,84], index: 12, kind: input, shape index: {}]
  %s13 = inlined_call_operand.hbm [shape: f32[1,84], index: 13, kind: input, shape index: {}]
  %s14 = inlined_call_operand.hbm [shape: bf16[84,128], index: 14, kind: input, shape index: {}]
  %s15 = inlined_call_operand.hbm [shape: f32[1,128], index: 15, kind: input, shape index: {}]
  %s16 = inlined_call_operand.hbm [shape: f32[16,128], index: 16, kind: output, shape index: {}]
  %s17 = sld [smem:[#allocation0]]
  $region137: #{lenet_forward.1} parent=0
    _
  %s19 = ssub.s32 1, %s17
  %s20 = scalar_select 0, %s19, %s17
  $region1: #{lenet_forward.1} parent=0
    #allocation2 [shape = 'u8[81920]{0}', space=vmem, size = 0x14000, scoped, tag = 'input window, operand 1, single buffered']
    #allocation3 [shape = 's32[2]{0}', space=sflag, size = 0x8, scoped, tag = 'scoped memory for lenet_forward.1']
    #allocation4 [shape = 's32[2]{0}', space=sflag, size = 0x8, scoped, tag = 'scoped memory for lenet_forward.1']
    #allocation5 [shape = 'u8[1024]{0}', space=vmem, size = 0x400, scoped, tag = 'input window, operand 2, single buffered']
    #allocation6 [shape = 's32[1]{0}', space=sflag, size = 0x4, scoped, tag = 'scoped memory for lenet_forward.1']
    #allocation7 [shape = 'u8[1024]{0}', space=vmem, size = 0x400, scoped, tag = 'input window, operand 6, single buffered']
    #allocation8 [shape = 'u8[20480]{0}', space=vmem, size = 0x5000, scoped, tag = 'input window, operand 7, single buffered']
    #allocation9 [shape = 's32[1]{0}', space=sflag, size = 0x4, scoped, tag = 'scoped memory for lenet_forward.1']
    #allocation10 [shape = 'u8[81920]{0}', space=vmem, size = 0x14000, scoped, tag = 'input window, operand 8, single buffered']
    #allocation11 [shape = 'u8[102400]{0}', space=vmem, size = 0x19000, scoped, tag = 'input window, operand 10, single buffered']
    #allocation12 [shape = 's32[1]{0}', space=sflag, size = 0x4, scoped, tag = 'scoped memory for lenet_forward.1']
    #allocation13 [shape = 'u8[512]{0}', space=vmem, size = 0x400, scoped, tag = 'input window, operand 11, single buffered']
    #allocation14 [shape = 'u8[512]{0}', space=vmem, size = 0x400, scoped, tag = 'input window, operand 13, single buffered']
    #allocation15 [shape = 's32[1]{0}', space=sflag, size = 0x4, scoped, tag = 'scoped memory for lenet_forward.1']
    #allocation16 [shape = 'u8[22528]{0}', space=vmem, size = 0x5800, scoped, tag = 'input window, operand 14, single buffered']
    #allocation17 [shape = 'u8[512]{0}', space=vmem, size = 0x400, scoped, tag = 'input window, operand 15, single buffered']
    #allocation18 [shape = 's32[1]{0}', space=sflag, size = 0x4, scoped, tag = 'scoped memory for lenet_forward.1']
    #allocation19 [shape = 'u8[8192]{0}', space=vmem, size = 0x2000, scoped, tag = 'output window, operand 0']
    %21 = vsyncpa [#allocation3], 0
    %22 = vsyncpa [#allocation6], 0
    %23 = vsyncpa [#allocation9], 0
    %24 = vsyncpa [#allocation12], 0
    %25 = vsyncpa [#allocation15], 0
    %26 = vsyncpa [#allocation18], 0
    %27 = vsyncpa [#allocation4], 0
    %s28 = scalar_lea.sflag [#allocation4], 1
    %29 = vsyncpa %s28, 0
    loop: start=0, step=1, limit=4
    $region2: #{lenet_forward.1} parent=1 // loop_pre_header
      _
    $region3: #{lenet_forward.1} parent=1 // loop_header
      %s31 = sphi 0, %s35
      %p32 = scmp.ge.s32.totalorder %s31, 4
      %s41 = sphi 0, %s43
      %s44 = sphi 0, %s41
      %s45 = sphi 0, %s44
      %s61 = sphi 0, %s45
      %s65 = sphi 0, %s65
      %s67 = sphi 0, %s65
      %s68 = sphi 0, %s67
      %s82 = sphi 0, %s68
      %s86 = sphi 0, %s86
      %s88 = sphi 0, %s86
      %s89 = sphi 0, %s88
      %s103 = sphi 0, %s89
      %s107 = sphi 0, %s107
      %s109 = sphi 0, %s107
      %s110 = sphi 0, %s109
      %s124 = sphi 0, %s110
      %s128 = sphi 0, %s128
      %s130 = sphi 0, %s128
      %s131 = sphi 0, %s130
      %s145 = sphi 0, %s131
      %s149 = sphi 0, %s149
      %s151 = sphi 0, %s149
      %s152 = sphi 0, %s151
      %s166 = sphi 0, %s152
      %s170 = sphi 0, %s170
      %s172 = sphi 0, %s170
      %s173 = sphi 0, %s172
      %s187 = sphi 0, %s173
      %s191 = sphi 0, %s191
      %s193 = sphi 0, %s191
      %s194 = sphi 0, %s193
      %s208 = sphi 0, %s194
      %s212 = sphi 0, %s212
      %s214 = sphi 0, %s212
      %s215 = sphi 0, %s214
      %s229 = sphi 0, %s215
      %s233 = sphi 0, %s233
      %s235 = sphi 0, %s233
      %s236 = sphi 0, %s235
      %s250 = sphi 0, %s236
      %s254 = sphi 0, %s254
      %s256 = sphi 0, %s254
      %s257 = sphi 0, %s256
      %s271 = sphi 0, %s257
      %s275 = sphi 0, %s275
      %s277 = sphi 0, %s275
      %s278 = sphi 0, %s277
      %s292 = sphi 0, %s278
      %s296 = sphi 0, %s296
      %s298 = sphi 0, %s296
      %s299 = sphi 0, %s298
      %s313 = sphi 0, %s299
      %s317 = sphi 0, %s317
      %s319 = sphi 0, %s317
      %s320 = sphi 0, %s319
      %s334 = sphi 0, %s320
      %s338 = sphi 0, %s338
      %s340 = sphi 0, %s338
      %s341 = sphi 0, %s340
      %s355 = sphi 0, %s341
      %s359 = sphi 0, %s359
      %s361 = sphi 0, %s359
      %s362 = sphi 0, %s361
      %s376 = sphi 0, %s362
      %s382 = sphi 0, %s384
      %s385 = sphi 0, %s382
      %s386 = sphi 0, %s385
      %s402 = sphi 0, %s386
    $region4: #{lenet_forward.1} parent=1 // loop_header_branch
      %34 = sbr.rel (%p32) target = $region8
    $region5: #{lenet_forward.1} parent=1 // loop_body
      %s36 = ssub.s32 %s31, 1
      %s37 = ssub.s32 %s31, 2
      %s38 = sadd.s32 %s31, 1
      %s39 = ssub.s32 %s31, %s38
      %p40 = scmp.eq.s32.totalorder %s39, 0
      %s42 = sadd.s32 %s41, 1
      %s43 = scalar_select %p40, %s41, %s42
      %p46 = pneg %p40
      %p47 = scmp.eq.s32.totalorder %s31, 1
      %p48 = por %p46, %p47
      %p49 = scmp.ne.s32.totalorder %s41, %s44
      %p50 = scmp.eq.s32.totalorder %s31, 0
      %p51 = por %p49, %p50
      %p52 = scmp.ne.s32.totalorder %s41, %s44
      %p53 = scmp.eq.s32.totalorder %s36, 1
      %p54 = por %p52, %p53
      %p55 = scmp.ne.s32.totalorder %s44, %s45
      %p56 = scmp.eq.s32.totalorder %s36, 0
      %p57 = por %p55, %p56
      %p58 = scmp.ne.s32.totalorder %s44, %s45
      %p59 = scmp.eq.s32.totalorder %s37, 1
      %p60 = por %p58, %p59
      %p62 = scmp.ne.s32.totalorder %s45, %s61
      %p63 = scmp.eq.s32.totalorder %s37, 0
      %p64 = por %p62, %p63
      %s66 = sadd.s32 %s65, 1
      %p69 = scmp.eq.s32.totalorder %s31, 1
      %p70 = scmp.ne.s32.totalorder %s65, %s67
      %p71 = scmp.eq.s32.totalorder %s31, 0
      %p72 = por %p70, %p71
      %p73 = scmp.ne.s32.totalorder %s65, %s67
      %p74 = scmp.eq.s32.totalorder %s36, 1
      %p75 = por %p73, %p74
      %p76 = scmp.ne.s32.totalorder %s67, %s68
      %p77 = scmp.eq.s32.totalorder %s36, 0
      %p78 = por %p76, %p77
      %p79 = scmp.ne.s32.totalorder %s67, %s68
      %p80 = scmp.eq.s32.totalorder %s37, 1
      %p81 = por %p79, %p80
      %p83 = scmp.ne.s32.totalorder %s68, %s82
      %p84 = scmp.eq.s32.totalorder %s37, 0
      %p85 = por %p83, %p84
      %s87 = sadd.s32 %s86, 1
      %p90 = scmp.eq.s32.totalorder %s31, 1
      %p91 = scmp.ne.s32.totalorder %s86, %s88
      %p92 = scmp.eq.s32.totalorder %s31, 0
      %p93 = por %p91, %p92
      %p94 = scmp.ne.s32.totalorder %s86, %s88
      %p95 = scmp.eq.s32.totalorder %s36, 1
      %p96 = por %p94, %p95
      %p97 = scmp.ne.s32.totalorder %s88, %s89
      %p98 = scmp.eq.s32.totalorder %s36, 0
      %p99 = por %p97, %p98
      %p100 = scmp.ne.s32.totalorder %s88, %s89
      %p101 = scmp.eq.s32.totalorder %s37, 1
      %p102 = por %p100, %p101
      %p104 = scmp.ne.s32.totalorder %s89, %s103
      %p105 = scmp.eq.s32.totalorder %s37, 0
      %p106 = por %p104, %p105
      %s108 = sadd.s32 %s107, 1
      %p111 = scmp.eq.s32.totalorder %s31, 1
      %p112 = scmp.ne.s32.totalorder %s107, %s109
      %p113 = scmp.eq.s32.totalorder %s31, 0
      %p114 = por %p112, %p113
      %p115 = scmp.ne.s32.totalorder %s107, %s109
      %p116 = scmp.eq.s32.totalorder %s36, 1
      %p117 = por %p115, %p116
      %p118 = scmp.ne.s32.totalorder %s109, %s110
      %p119 = scmp.eq.s32.totalorder %s36, 0
      %p120 = por %p118, %p119
      %p121 = scmp.ne.s32.totalorder %s109, %s110
      %p122 = scmp.eq.s32.totalorder %s37, 1
      %p123 = por %p121, %p122
      %p125 = scmp.ne.s32.totalorder %s110, %s124
      %p126 = scmp.eq.s32.totalorder %s37, 0
      %p127 = por %p125, %p126
      %s129 = sadd.s32 %s128, 1
      %p132 = scmp.eq.s32.totalorder %s31, 1
      %p133 = scmp.ne.s32.totalorder %s128, %s130
      %p134 = scmp.eq.s32.totalorder %s31, 0
      %p135 = por %p133, %p134
      %p136 = scmp.ne.s32.totalorder %s128, %s130
      %p137 = scmp.eq.s32.totalorder %s36, 1
      %p138 = por %p136, %p137
      %p139 = scmp.ne.s32.totalorder %s130, %s131
      %p140 = scmp.eq.s32.totalorder %s36, 0
      %p141 = por %p139, %p140
      %p142 = scmp.ne.s32.totalorder %s130, %s131
      %p143 = scmp.eq.s32.totalorder %s37, 1
      %p144 = por %p142, %p143
      %p146 = scmp.ne.s32.totalorder %s131, %s145
      %p147 = scmp.eq.s32.totalorder %s37, 0
      %p148 = por %p146, %p147
      %s150 = sadd.s32 %s149, 1
      %p153 = scmp.eq.s32.totalorder %s31, 1
      %p154 = scmp.ne.s32.totalorder %s149, %s151
      %p155 = scmp.eq.s32.totalorder %s31, 0
      %p156 = por %p154, %p155
      %p157 = scmp.ne.s32.totalorder %s149, %s151
      %p158 = scmp.eq.s32.totalorder %s36, 1
      %p159 = por %p157, %p158
      %p160 = scmp.ne.s32.totalorder %s151, %s152
      %p161 = scmp.eq.s32.totalorder %s36, 0
      %p162 = por %p160, %p161
      %p163 = scmp.ne.s32.totalorder %s151, %s152
      %p164 = scmp.eq.s32.totalorder %s37, 1
      %p165 = por %p163, %p164
      %p167 = scmp.ne.s32.totalorder %s152, %s166
      %p168 = scmp.eq.s32.totalorder %s37, 0
      %p169 = por %p167, %p168
      %s171 = sadd.s32 %s170, 1
      %p174 = scmp.eq.s32.totalorder %s31, 1
      %p175 = scmp.ne.s32.totalorder %s170, %s172
      %p176 = scmp.eq.s32.totalorder %s31, 0
      %p177 = por %p175, %p176
      %p178 = scmp.ne.s32.totalorder %s170, %s172
      %p179 = scmp.eq.s32.totalorder %s36, 1
      %p180 = por %p178, %p179
      %p181 = scmp.ne.s32.totalorder %s172, %s173
      %p182 = scmp.eq.s32.totalorder %s36, 0
      %p183 = por %p181, %p182
      %p184 = scmp.ne.s32.totalorder %s172, %s173
      %p185 = scmp.eq.s32.totalorder %s37, 1
      %p186 = por %p184, %p185
      %p188 = scmp.ne.s32.totalorder %s173, %s187
      %p189 = scmp.eq.s32.totalorder %s37, 0
      %p190 = por %p188, %p189
      %s192 = sadd.s32 %s191, 1
      %p195 = scmp.eq.s32.totalorder %s31, 1
      %p196 = scmp.ne.s32.totalorder %s191, %s193
      %p197 = scmp.eq.s32.totalorder %s31, 0
      %p198 = por %p196, %p197
      %p199 = scmp.ne.s32.totalorder %s191, %s193
      %p200 = scmp.eq.s32.totalorder %s36, 1
      %p201 = por %p199, %p200
      %p202 = scmp.ne.s32.totalorder %s193, %s194
      %p203 = scmp.eq.s32.totalorder %s36, 0
      %p204 = por %p202, %p203
      %p205 = scmp.ne.s32.totalorder %s193, %s194
      %p206 = scmp.eq.s32.totalorder %s37, 1
      %p207 = por %p205, %p206
      %p209 = scmp.ne.s32.totalorder %s194, %s208
      %p210 = scmp.eq.s32.totalorder %s37, 0
      %p211 = por %p209, %p210
      %s213 = sadd.s32 %s212, 1
      %p216 = scmp.eq.s32.totalorder %s31, 1
      %p217 = scmp.ne.s32.totalorder %s212, %s214
      %p218 = scmp.eq.s32.totalorder %s31, 0
      %p219 = por %p217, %p218
      %p220 = scmp.ne.s32.totalorder %s212, %s214
      %p221 = scmp.eq.s32.totalorder %s36, 1
      %p222 = por %p220, %p221
      %p223 = scmp.ne.s32.totalorder %s214, %s215
      %p224 = scmp.eq.s32.totalorder %s36, 0
      %p225 = por %p223, %p224
      %p226 = scmp.ne.s32.totalorder %s214, %s215
      %p227 = scmp.eq.s32.totalorder %s37, 1
      %p228 = por %p226, %p227
      %p230 = scmp.ne.s32.totalorder %s215, %s229
      %p231 = scmp.eq.s32.totalorder %s37, 0
      %p232 = por %p230, %p231
      %s234 = sadd.s32 %s233, 1
      %p237 = scmp.eq.s32.totalorder %s31, 1
      %p238 = scmp.ne.s32.totalorder %s233, %s235
      %p239 = scmp.eq.s32.totalorder %s31, 0
      %p240 = por %p238, %p239
      %p241 = scmp.ne.s32.totalorder %s233, %s235
      %p242 = scmp.eq.s32.totalorder %s36, 1
      %p243 = por %p241, %p242
      %p244 = scmp.ne.s32.totalorder %s235, %s236
      %p245 = scmp.eq.s32.totalorder %s36, 0
      %p246 = por %p244, %p245
      %p247 = scmp.ne.s32.totalorder %s235, %s236
      %p248 = scmp.eq.s32.totalorder %s37, 1
      %p249 = por %p247, %p248
      %p251 = scmp.ne.s32.totalorder %s236, %s250
      %p252 = scmp.eq.s32.totalorder %s37, 0
      %p253 = por %p251, %p252
      %s255 = sadd.s32 %s254, 1
      %p258 = scmp.eq.s32.totalorder %s31, 1
      %p259 = scmp.ne.s32.totalorder %s254, %s256
      %p260 = scmp.eq.s32.totalorder %s31, 0
      %p261 = por %p259, %p260
      %p262 = scmp.ne.s32.totalorder %s254, %s256
      %p263 = scmp.eq.s32.totalorder %s36, 1
      %p264 = por %p262, %p263
      %p265 = scmp.ne.s32.totalorder %s256, %s257
      %p266 = scmp.eq.s32.totalorder %s36, 0
      %p267 = por %p265, %p266
      %p268 = scmp.ne.s32.totalorder %s256, %s257
      %p269 = scmp.eq.s32.totalorder %s37, 1
      %p270 = por %p268, %p269
      %p272 = scmp.ne.s32.totalorder %s257, %s271
      %p273 = scmp.eq.s32.totalorder %s37, 0
      %p274 = por %p272, %p273
      %s276 = sadd.s32 %s275, 1
      %p279 = scmp.eq.s32.totalorder %s31, 1
      %p280 = scmp.ne.s32.totalorder %s275, %s277
      %p281 = scmp.eq.s32.totalorder %s31, 0
      %p282 = por %p280, %p281
      %p283 = scmp.ne.s32.totalorder %s275, %s277
      %p284 = scmp.eq.s32.totalorder %s36, 1
      %p285 = por %p283, %p284
      %p286 = scmp.ne.s32.totalorder %s277, %s278
      %p287 = scmp.eq.s32.totalorder %s36, 0
      %p288 = por %p286, %p287
      %p289 = scmp.ne.s32.totalorder %s277, %s278
      %p290 = scmp.eq.s32.totalorder %s37, 1
      %p291 = por %p289, %p290
      %p293 = scmp.ne.s32.totalorder %s278, %s292
      %p294 = scmp.eq.s32.totalorder %s37, 0
      %p295 = por %p293, %p294
      %s297 = sadd.s32 %s296, 1
      %p300 = scmp.eq.s32.totalorder %s31, 1
      %p301 = scmp.ne.s32.totalorder %s296, %s298
      %p302 = scmp.eq.s32.totalorder %s31, 0
      %p303 = por %p301, %p302
      %p304 = scmp.ne.s32.totalorder %s296, %s298
      %p305 = scmp.eq.s32.totalorder %s36, 1
      %p306 = por %p304, %p305
      %p307 = scmp.ne.s32.totalorder %s298, %s299
      %p308 = scmp.eq.s32.totalorder %s36, 0
      %p309 = por %p307, %p308
      %p310 = scmp.ne.s32.totalorder %s298, %s299
      %p311 = scmp.eq.s32.totalorder %s37, 1
      %p312 = por %p310, %p311
      %p314 = scmp.ne.s32.totalorder %s299, %s313
      %p315 = scmp.eq.s32.totalorder %s37, 0
      %p316 = por %p314, %p315
      %s318 = sadd.s32 %s317, 1
      %p321 = scmp.eq.s32.totalorder %s31, 1
      %p322 = scmp.ne.s32.totalorder %s317, %s319
      %p323 = scmp.eq.s32.totalorder %s31, 0
      %p324 = por %p322, %p323
      %p325 = scmp.ne.s32.totalorder %s317, %s319
      %p326 = scmp.eq.s32.totalorder %s36, 1
      %p327 = por %p325, %p326
      %p328 = scmp.ne.s32.totalorder %s319, %s320
      %p329 = scmp.eq.s32.totalorder %s36, 0
      %p330 = por %p328, %p329
      %p331 = scmp.ne.s32.totalorder %s319, %s320
      %p332 = scmp.eq.s32.totalorder %s37, 1
      %p333 = por %p331, %p332
      %p335 = scmp.ne.s32.totalorder %s320, %s334
      %p336 = scmp.eq.s32.totalorder %s37, 0
      %p337 = por %p335, %p336
      %s339 = sadd.s32 %s338, 1
      %p342 = scmp.eq.s32.totalorder %s31, 1
      %p343 = scmp.ne.s32.totalorder %s338, %s340
      %p344 = scmp.eq.s32.totalorder %s31, 0
      %p345 = por %p343, %p344
      %p346 = scmp.ne.s32.totalorder %s338, %s340
      %p347 = scmp.eq.s32.totalorder %s36, 1
      %p348 = por %p346, %p347
      %p349 = scmp.ne.s32.totalorder %s340, %s341
      %p350 = scmp.eq.s32.totalorder %s36, 0
      %p351 = por %p349, %p350
      %p352 = scmp.ne.s32.totalorder %s340, %s341
      %p353 = scmp.eq.s32.totalorder %s37, 1
      %p354 = por %p352, %p353
      %p356 = scmp.ne.s32.totalorder %s341, %s355
      %p357 = scmp.eq.s32.totalorder %s37, 0
      %p358 = por %p356, %p357
      %s360 = sadd.s32 %s359, 1
      %p363 = scmp.eq.s32.totalorder %s31, 1
      %p364 = scmp.ne.s32.totalorder %s359, %s361
      %p365 = scmp.eq.s32.totalorder %s31, 0
      %p366 = por %p364, %p365
      %p367 = scmp.ne.s32.totalorder %s359, %s361
      %p368 = scmp.eq.s32.totalorder %s36, 1
      %p369 = por %p367, %p368
      %p370 = scmp.ne.s32.totalorder %s361, %s362
      %p371 = scmp.eq.s32.totalorder %s36, 0
      %p372 = por %p370, %p371
      %p373 = scmp.ne.s32.totalorder %s361, %s362
      %p374 = scmp.eq.s32.totalorder %s37, 1
      %p375 = por %p373, %p374
      %p377 = scmp.ne.s32.totalorder %s362, %s376
      %p378 = scmp.eq.s32.totalorder %s37, 0
      %p379 = por %p377, %p378
      %s380 = ssub.s32 %s31, %s38
      %p381 = scmp.eq.s32.totalorder %s380, 0
      %s383 = sadd.s32 %s382, 1
      %s384 = scalar_select %p381, %s382, %s383
      %p387 = pneg %p381
      %p388 = scmp.eq.s32.totalorder %s31, 1
      %p389 = por %p387, %p388
      %p390 = scmp.ne.s32.totalorder %s382, %s385
      %p391 = scmp.eq.s32.totalorder %s31, 0
      %p392 = por %p390, %p391
      %p393 = scmp.ne.s32.totalorder %s382, %s385
      %p394 = scmp.eq.s32.totalorder %s36, 1
      %p395 = por %p393, %p394
      %p396 = scmp.ne.s32.totalorder %s385, %s386
      %p397 = scmp.eq.s32.totalorder %s36, 0
      %p398 = por %p396, %p397
      %p399 = scmp.ne.s32.totalorder %s385, %s386
      %p400 = scmp.eq.s32.totalorder %s37, 1
      %p401 = por %p399, %p400
      %p403 = scmp.ne.s32.totalorder %s386, %s402
      %p404 = scmp.eq.s32.totalorder %s37, 0
      %p405 = por %p403, %p404
      %p406 = scmp.le.s32.totalorder 1, %s31
      %p407 = scmp.lt.s32.totalorder %s31, 3
      %p408 = pnand %p406, %p407
      %p409 = pneg %p408
      // Predicated region
      $region9: #{lenet_forward.1} parent=5 // pred_check
        _
      $region10: #{lenet_forward.1} parent=5 // pred_check_branch
        %411 = sbr.rel (%p408) target = $region12
      $region11: #{lenet_forward.1} parent=5 // pred_region
        %s412 = ssub.s32 %s31, 1
        // Predicated region
        $region13: #{lenet_forward.1} parent=11 // pred_check
          %p413 = pneg %p78
        $region14: #{lenet_forward.1} parent=11 // pred_check_branch
          %415 = sbr.rel (%p413) target = $region16
        $region15: #{lenet_forward.1} parent=11 // pred_region
          %s417 = ssub.s32 2560, 2560
          %418 = vsyncadd [#allocation3], %s417
          %s419 = sshll.u32 [#allocation2], 4
          %s420 = int_to_ptr.vmem [resolvable:$true] %s419
          %425 = dma.hbm_to_vmem [thread:$0]  %s1, 2560, %s420, [#allocation3], 128, 128, 8
        $region16: #{lenet_forward.1} parent=11 // pred_fallthru
          _
        // Predicated region
        $region17: #{lenet_forward.1} parent=11 // pred_check
          %p426 = pneg %p99
        $region18: #{lenet_forward.1} parent=11 // pred_check_branch
          %428 = sbr.rel (%p426) target = $region20
        $region19: #{lenet_forward.1} parent=11 // pred_region
          %s430 = ssub.s32 32, 32
          %431 = vsyncadd [#allocation6], %s430
          %s433 = sshll.u32 [#allocation5], 4
          %s434 = int_to_ptr.vmem [resolvable:$true] %s433
          %436 = dma.hbm_to_vmem [thread:$0]  %s2, 32, %s434, [#allocation6]
        $region20: #{lenet_forward.1} parent=11 // pred_fallthru
          _
        // Predicated region
        $region21: #{lenet_forward.1} parent=11 // pred_check
          %p437 = pneg %p120
        $region22: #{lenet_forward.1} parent=11 // pred_check_branch
          %439 = sbr.rel (%p437) target = $region24
        $region23: #{lenet_forward.1} parent=11 // pred_region
          _
        $region24: #{lenet_forward.1} parent=11 // pred_fallthru
          _
        // Predicated region
        $region25: #{lenet_forward.1} parent=11 // pred_check
          %p440 = pneg %p141
        $region26: #{lenet_forward.1} parent=11 // pred_check_branch
          %442 = sbr.rel (%p440) target = $region28
        $region27: #{lenet_forward.1} parent=11 // pred_region
          _
        $region28: #{lenet_forward.1} parent=11 // pred_fallthru
          _
        // Predicated region
        $region29: #{lenet_forward.1} parent=11 // pred_check
          %p443 = pneg %p162
        $region30: #{lenet_forward.1} parent=11 // pred_check_branch
          %445 = sbr.rel (%p443) target = $region32
        $region31: #{lenet_forward.1} parent=11 // pred_region
          _
        $region32: #{lenet_forward.1} parent=11 // pred_fallthru
          _
        // Predicated region
        $region33: #{lenet_forward.1} parent=11 // pred_check
          %p446 = pneg %p183
        $region34: #{lenet_forward.1} parent=11 // pred_check_branch
          %448 = sbr.rel (%p446) target = $region36
        $region35: #{lenet_forward.1} parent=11 // pred_region
          %s450 = ssub.s32 32, 32
          %451 = vsyncadd [#allocation6], %s450
          %s453 = sshll.u32 [#allocation7], 4
          %s454 = int_to_ptr.vmem [resolvable:$true] %s453
          %456 = dma.hbm_to_vmem [thread:$0]  %s6, 32, %s454, [#allocation6]
        $region36: #{lenet_forward.1} parent=11 // pred_fallthru
          _
        // Predicated region
        $region37: #{lenet_forward.1} parent=11 // pred_check
          %p457 = pneg %p204
        $region38: #{lenet_forward.1} parent=11 // pred_check_branch
          %459 = sbr.rel (%p457) target = $region40
        $region39: #{lenet_forward.1} parent=11 // pred_region
          %s461 = ssub.s32 640, 640
          %462 = vsyncadd [#allocation9], %s461
          %s463 = sshll.u32 [#allocation8], 4
          %s464 = int_to_ptr.vmem [resolvable:$true] %s463
          %469 = dma.hbm_to_vmem [thread:$0]  %s7, 640, %s464, [#allocation9], 64, 64, 4
        $region40: #{lenet_forward.1} parent=11 // pred_fallthru
          _
        // Predicated region
        $region41: #{lenet_forward.1} parent=11 // pred_check
          %p470 = pneg %p225
        $region42: #{lenet_forward.1} parent=11 // pred_check_branch
          %472 = sbr.rel (%p470) target = $region44
        $region43: #{lenet_forward.1} parent=11 // pred_region
          %s474 = ssub.s32 2560, 2560
          %475 = vsyncadd [#allocation9], %s474
          %s476 = sshll.u32 [#allocation10], 4
          %s477 = int_to_ptr.vmem [resolvable:$true] %s476
          %482 = dma.hbm_to_vmem [thread:$0]  %s8, 2560, %s477, [#allocation9], 128, 128, 8
        $region44: #{lenet_forward.1} parent=11 // pred_fallthru
          _
        // Predicated region
        $region45: #{lenet_forward.1} parent=11 // pred_check
          %p483 = pneg %p246
        $region46: #{lenet_forward.1} parent=11 // pred_check_branch
          %485 = sbr.rel (%p483) target = $region48
        $region47: #{lenet_forward.1} parent=11 // pred_region
          _
        $region48: #{lenet_forward.1} parent=11 // pred_fallthru
          _
        // Predicated region
        $region49: #{lenet_forward.1} parent=11 // pred_check
          %p486 = pneg %p267
        $region50: #{lenet_forward.1} parent=11 // pred_check_branch
          %488 = sbr.rel (%p486) target = $region52
        $region51: #{lenet_forward.1} parent=11 // pred_region
          %s490 = ssub.s32 3200, 3200
          %491 = vsyncadd [#allocation12], %s490
          %s492 = sshll.u32 [#allocation11], 4
          %s493 = int_to_ptr.vmem [resolvable:$true] %s492
          %498 = dma.hbm_to_vmem [thread:$0]  %s10, 3200, %s493, [#allocation12], 64, 64, 4
        $region52: #{lenet_forward.1} parent=11 // pred_fallthru
          _
        // Predicated region
        $region53: #{lenet_forward.1} parent=11 // pred_check
          %p499 = pneg %p288
        $region54: #{lenet_forward.1} parent=11 // pred_check_branch
          %501 = sbr.rel (%p499) target = $region56
        $region55: #{lenet_forward.1} parent=11 // pred_region
          %s503 = ssub.s32 16, 16
          %504 = vsyncadd [#allocation12], %s503
          %s506 = sshll.u32 [#allocation13], 4
          %s507 = int_to_ptr.vmem [resolvable:$true] %s506
          %509 = dma.hbm_to_vmem [thread:$0]  %s11, 16, %s507, [#allocation12]
        $region56: #{lenet_forward.1} parent=11 // pred_fallthru
          _
        // Predicated region
        $region57: #{lenet_forward.1} parent=11 // pred_check
          %p510 = pneg %p309
        $region58: #{lenet_forward.1} parent=11 // pred_check_branch
          %512 = sbr.rel (%p510) target = $region60
        $region59: #{lenet_forward.1} parent=11 // pred_region
          _
        $region60: #{lenet_forward.1} parent=11 // pred_fallthru
          _
        // Predicated region
        $region61: #{lenet_forward.1} parent=11 // pred_check
          %p513 = pneg %p330
        $region62: #{lenet_forward.1} parent=11 // pred_check_branch
          %515 = sbr.rel (%p513) target = $region64
        $region63: #{lenet_forward.1} parent=11 // pred_region
          %s517 = ssub.s32 16, 16
          %518 = vsyncadd [#allocation15], %s517
          %s520 = sshll.u32 [#allocation14], 4
          %s521 = int_to_ptr.vmem [resolvable:$true] %s520
          %523 = dma.hbm_to_vmem [thread:$0]  %s13, 16, %s521, [#allocation15]
        $region64: #{lenet_forward.1} parent=11 // pred_fallthru
          _
        // Predicated region
        $region65: #{lenet_forward.1} parent=11 // pred_check
          %p524 = pneg %p351
        $region66: #{lenet_forward.1} parent=11 // pred_check_branch
          %526 = sbr.rel (%p524) target = $region68
        $region67: #{lenet_forward.1} parent=11 // pred_region
          %s528 = ssub.s32 704, 704
          %529 = vsyncadd [#allocation15], %s528
          %s530 = sshll.u32 [#allocation16], 4
          %s531 = int_to_ptr.vmem [resolvable:$true] %s530
          %536 = dma.hbm_to_vmem [thread:$0]  %s14, 704, %s531, [#allocation15], 64, 64, 4
        $region68: #{lenet_forward.1} parent=11 // pred_fallthru
          _
        // Predicated region
        $region69: #{lenet_forward.1} parent=11 // pred_check
          %p537 = pneg %p372
        $region70: #{lenet_forward.1} parent=11 // pred_check_branch
          %539 = sbr.rel (%p537) target = $region72
        $region71: #{lenet_forward.1} parent=11 // pred_region
          %s541 = ssub.s32 16, 16
          %542 = vsyncadd [#allocation18], %s541
          %s544 = sshll.u32 [#allocation17], 4
          %s545 = int_to_ptr.vmem [resolvable:$true] %s544
          %547 = dma.hbm_to_vmem [thread:$0]  %s15, 16, %s545, [#allocation18]
        $region72: #{lenet_forward.1} parent=11 // pred_fallthru
          _
      $region12: #{lenet_forward.1} parent=5 // pred_fallthru
        _
      %p548 = scmp.lt.s32.totalorder %s31, 2
      // Predicated region
      $region73: #{lenet_forward.1} parent=5 // pred_check
        %p549 = pneg %p548
      $region74: #{lenet_forward.1} parent=5 // pred_check_branch
        %551 = sbr.rel (%p549) target = $region76
      $region75: #{lenet_forward.1} parent=5 // pred_region
        // Predicated region
        $region77: #{lenet_forward.1} parent=75 // pred_check
          %p552 = pneg %p51
        $region78: #{lenet_forward.1} parent=75 // pred_check_branch
          %554 = sbr.rel (%p552) target = $region80
        $region79: #{lenet_forward.1} parent=75 // pred_region
          %s555 = smul.u32 32, %s31
          %p556 = scmp.lt.s32.totalorder %s555, 63
          %s557 = scalar_select %p556, %s555, 63
          %s558 = smul.addr %s557, 8
          %s559 = scalar_lea.vmem %s0, %s558
          %s560 = smul.u32 32, %s31
        $region80: #{lenet_forward.1} parent=75 // pred_fallthru
          _
      $region76: #{lenet_forward.1} parent=5 // pred_fallthru
        _
      %p561 = scmp.le.s32.totalorder 1, %s31
      %p562 = scmp.lt.s32.totalorder %s31, 3
      %p563 = pnand %p561, %p562
      %p564 = pneg %p563
      // Predicated region
      $region81: #{lenet_forward.1} parent=5 // pred_check
        _
      $region82: #{lenet_forward.1} parent=5 // pred_check_branch
        %566 = sbr.rel (%p563) target = $region84
      $region83: #{lenet_forward.1} parent=5 // pred_region
        %s567 = ssub.s32 %s31, 1
        // Predicated region
        $region85: #{lenet_forward.1} parent=83 // pred_check
          %p568 = pneg %p78
        $region86: #{lenet_forward.1} parent=83 // pred_check_branch
          %570 = sbr.rel (%p568) target = $region88
        $region87: #{lenet_forward.1} parent=83 // pred_region
          %571 = dma.done [#allocation3], 2560
        $region88: #{lenet_forward.1} parent=83 // pred_fallthru
          _
        // Predicated region
        $region89: #{lenet_forward.1} parent=83 // pred_check
          %p572 = pneg %p99
        $region90: #{lenet_forward.1} parent=83 // pred_check_branch
          %574 = sbr.rel (%p572) target = $region92
        $region91: #{lenet_forward.1} parent=83 // pred_region
          %575 = dma.done [#allocation6], 32
        $region92: #{lenet_forward.1} parent=83 // pred_fallthru
          _
        // Predicated region
        $region93: #{lenet_forward.1} parent=83 // pred_check
          %p576 = pneg %p183
        $region94: #{lenet_forward.1} parent=83 // pred_check_branch
          %578 = sbr.rel (%p576) target = $region96
        $region95: #{lenet_forward.1} parent=83 // pred_region
          %579 = dma.done [#allocation6], 32
        $region96: #{lenet_forward.1} parent=83 // pred_fallthru
          _
        // Predicated region
        $region97: #{lenet_forward.1} parent=83 // pred_check
          %p580 = pneg %p204
        $region98: #{lenet_forward.1} parent=83 // pred_check_branch
          %582 = sbr.rel (%p580) target = $region100
        $region99: #{lenet_forward.1} parent=83 // pred_region
          %583 = dma.done [#allocation9], 640
        $region100: #{lenet_forward.1} parent=83 // pred_fallthru
          _
        // Predicated region
        $region101: #{lenet_forward.1} parent=83 // pred_check
          %p584 = pneg %p225
        $region102: #{lenet_forward.1} parent=83 // pred_check_branch
          %586 = sbr.rel (%p584) target = $region104
        $region103: #{lenet_forward.1} parent=83 // pred_region
          %587 = dma.done [#allocation9], 2560
        $region104: #{lenet_forward.1} parent=83 // pred_fallthru
          _
        // Predicated region
        $region105: #{lenet_forward.1} parent=83 // pred_check
          %p588 = pneg %p267
        $region106: #{lenet_forward.1} parent=83 // pred_check_branch
          %590 = sbr.rel (%p588) target = $region108
        $region107: #{lenet_forward.1} parent=83 // pred_region
          %591 = dma.done [#allocation12], 3200
        $region108: #{lenet_forward.1} parent=83 // pred_fallthru
          _
        // Predicated region
        $region109: #{lenet_forward.1} parent=83 // pred_check
          %p592 = pneg %p288
        $region110: #{lenet_forward.1} parent=83 // pred_check_branch
          %594 = sbr.rel (%p592) target = $region112
        $region111: #{lenet_forward.1} parent=83 // pred_region
          %595 = dma.done [#allocation12], 16
        $region112: #{lenet_forward.1} parent=83 // pred_fallthru
          _
        // Predicated region
        $region113: #{lenet_forward.1} parent=83 // pred_check
          %p596 = pneg %p330
        $region114: #{lenet_forward.1} parent=83 // pred_check_branch
          %598 = sbr.rel (%p596) target = $region116
        $region115: #{lenet_forward.1} parent=83 // pred_region
          %599 = dma.done [#allocation15], 16
        $region116: #{lenet_forward.1} parent=83 // pred_fallthru
          _
        // Predicated region
        $region117: #{lenet_forward.1} parent=83 // pred_check
          %p600 = pneg %p351
        $region118: #{lenet_forward.1} parent=83 // pred_check_branch
          %602 = sbr.rel (%p600) target = $region120
        $region119: #{lenet_forward.1} parent=83 // pred_region
          %603 = dma.done [#allocation15], 704
        $region120: #{lenet_forward.1} parent=83 // pred_fallthru
          _
        // Predicated region
        $region121: #{lenet_forward.1} parent=83 // pred_check
          %p604 = pneg %p372
        $region122: #{lenet_forward.1} parent=83 // pred_check_branch
          %606 = sbr.rel (%p604) target = $region124
        $region123: #{lenet_forward.1} parent=83 // pred_region
          %607 = dma.done [#allocation18], 16
        $region124: #{lenet_forward.1} parent=83 // pred_fallthru
          _
        %s608 = smul.u32 32, %s36
        %p609 = scmp.lt.s32.totalorder %s608, 63
        %s610 = scalar_select %p609, %s608, 63
        %s611 = smul.addr %s610, 8
        %s612 = scalar_lea.vmem %s0, %s611
        %p613 = pneg %p57
        %p614 = pneg %p54
        %p615 = pneg %p78
        %p616 = pneg %p75
        %p617 = pneg %p99
        %p618 = pneg %p96
        %p619 = pneg %p120
        %p620 = pneg %p117
        %p621 = pneg %p141
        %p622 = pneg %p138
        %p623 = pneg %p162
        %p624 = pneg %p159
        %p625 = pneg %p183
        %p626 = pneg %p180
        %p627 = pneg %p204
        %p628 = pneg %p201
        %p629 = pneg %p225
        %p630 = pneg %p222
        %p631 = pneg %p246
        %p632 = pneg %p243
        %p633 = pneg %p267
        %p634 = pneg %p264
        %p635 = pneg %p288
        %p636 = pneg %p285
        %p637 = pneg %p309
        %p638 = pneg %p306
        %p639 = pneg %p330
        %p640 = pneg %p327
        %p641 = pneg %p351
        %p642 = pneg %p348
        %p643 = pneg %p372
        %p644 = pneg %p369
        %p645 = pneg %p398
        %p646 = pneg %p395
        %s647 = sand.u32 %s385, 1
        %s648 = scalar_lea.sflag [#allocation4], %s647
        %s649 = sand.u32 %s385, 1
        %s650 = smul.addr %s649, 8
        %s651 = scalar_lea.vmem [#allocation19], %s650
        %s652 = smul.u32 32, %s36
        %p653 = scmp.lt.s32.totalorder %s652, 63
        %s654 = scalar_select %p653, %s652, 63
        %s655 = smul.addr %s654, 8
        %s656 = scalar_lea.vmem %s0, %s655
        %s657 = smul.u32 32, %s36
        %v659 = vld [vmem:[%s656] sm:$0xff]
        %v660 = vld [vmem:[%s656 + $0x8] sm:$0xff]
        %v661 = vld [vmem:[%s656 + $0x10] sm:$0xff]
        %v662 = vld [vmem:[%s656 + $0x18] sm:$0xff]
        %v663 = vld [vmem:[%s656 + $0x20] sm:$0xff]
        %v664 = vld [vmem:[%s656 + $0x28] sm:$0xff]
        %v665 = vld [vmem:[%s656 + $0x30] sm:$0xff]
        %v666 = vld [vmem:[%s656 + $0x38] sm:$0xff]
        %v667 = vld [vmem:[%s656 + $0x40] sm:$0xff]
        %v668 = vld [vmem:[%s656 + $0x48] sm:$0xff]
        %v669 = vld [vmem:[%s656 + $0x50] sm:$0xff]
        %v670 = vld [vmem:[%s656 + $0x58] sm:$0xff]
        %v671 = vld [vmem:[%s656 + $0x60] sm:$0xff]
        %v672 = vld [vmem:[%s656 + $0x68] sm:$0xff]
        %v673 = vld [vmem:[%s656 + $0x70] sm:$0xff]
        %v674 = vld [vmem:[%s656 + $0x78] sm:$0xff]
        %v675 = vld [vmem:[%s656 + $0x80] sm:$0xff]
        %v676 = vld [vmem:[%s656 + $0x88] sm:$0xff]
        %v677 = vld [vmem:[%s656 + $0x90] sm:$0xff]
        %v678 = vld [vmem:[%s656 + $0x98] sm:$0xff]
        %v679 = vld [vmem:[%s656 + $0xa0] sm:$0xff]
        %v680 = vld [vmem:[%s656 + $0xa8] sm:$0xff]
        %v681 = vld [vmem:[%s656 + $0xb0] sm:$0xff]
        %v682 = vld [vmem:[%s656 + $0xb8] sm:$0xff]
        %v683 = vld [vmem:[%s656 + $0xc0] sm:$0xff]
        %v684 = vld [vmem:[%s656 + $0xc8] sm:$0xff]
        %v685 = vld [vmem:[%s656 + $0xd0] sm:$0xff]
        %v686 = vld [vmem:[%s656 + $0xd8] sm:$0xff]
        %v687 = vld [vmem:[%s656 + $0xe0] sm:$0xff]
        %v688 = vld [vmem:[%s656 + $0xe8] sm:$0xff]
        %v689 = vld [vmem:[%s656 + $0xf0] sm:$0xff]
        %v690 = vld [vmem:[%s656 + $0xf8] sm:$0xff]
        %vm723 = vcmask 1046528
        %v724 = vrot.slane %v659, 1
        %v725 = vrot.slane %v660, 1
        %v726 = vsel %vm723, %v724, %v725
        %v727 = vrot.slane %v661, 1
        %v728 = vsel %vm723, %v725, %v727
        %v729 = vrot.slane %v662, 1
        %v730 = vsel %vm723, %v727, %v729
        %v731 = vrot.slane %v663, 1
        %v732 = vsel %vm723, %v729, %v731
        %v733 = vrot.slane %v664, 1
        %v734 = vsel %vm723, %v731, %v733
        %v735 = vrot.slane %v665, 1
        %v736 = vsel %vm723, %v733, %v735
        %v737 = vrot.slane %v666, 1
        %v738 = vsel %vm723, %v735, %v737
        %v739 = vrot.slane %v667, 1
        %v740 = vsel %vm723, %v737, %v739
        %v741 = vrot.slane %v668, 1
        %v742 = vsel %vm723, %v739, %v741
        %v743 = vrot.slane %v669, 1
        %v744 = vsel %vm723, %v741, %v743
        %v745 = vrot.slane %v670, 1
        %v746 = vsel %vm723, %v743, %v745
        %v747 = vrot.slane %v671, 1
        %v748 = vsel %vm723, %v745, %v747
        %v749 = vrot.slane %v672, 1
        %v750 = vsel %vm723, %v747, %v749
        %v751 = vrot.slane %v673, 1
        %v752 = vsel %vm723, %v749, %v751
        %v753 = vrot.slane %v674, 1
        %v754 = vsel %vm723, %v751, %v753
        %v755 = vrot.slane %v675, 1
        %v756 = vsel %vm723, %v753, %v755
        %v757 = vrot.slane %v676, 1
        %v758 = vsel %vm723, %v755, %v757
        %v759 = vrot.slane %v677, 1
        %v760 = vsel %vm723, %v757, %v759
        %v761 = vrot.slane %v678, 1
        %v762 = vsel %vm723, %v759, %v761
        %v763 = vrot.slane %v679, 1
        %v764 = vsel %vm723, %v761, %v763
        %v765 = vrot.slane %v680, 1
        %v766 = vsel %vm723, %v763, %v765
        %v767 = vrot.slane %v681, 1
        %v768 = vsel %vm723, %v765, %v767
        %v769 = vrot.slane %v682, 1
        %v770 = vsel %vm723, %v767, %v769
        %v771 = vrot.slane %v683, 1
        %v772 = vsel %vm723, %v769, %v771
        %v773 = vrot.slane %v684, 1
        %v774 = vsel %vm723, %v771, %v773
        %v775 = vrot.slane %v685, 1
        %v776 = vsel %vm723, %v773, %v775
        %v777 = vrot.slane %v686, 1
        %v778 = vsel %vm723, %v775, %v777
        %v779 = vrot.slane %v687, 1
        %v780 = vsel %vm723, %v777, %v779
        %v781 = vrot.slane %v688, 1
        %v782 = vsel %vm723, %v779, %v781
        %v783 = vrot.slane %v689, 1
        %v784 = vsel %vm723, %v781, %v783
        %v785 = vrot.slane %v690, 1
        %v786 = vsel %vm723, %v783, %v785
        %787 = vrot.lane.b32.xlu0 %v726, 32
        %v788 = vpop.permute.xlu0 %787
        %789 = vrot.lane.b32.xlu0 %v728, 32
        %v790 = vpop.permute.xlu0 %789
        %791 = vrot.lane.b32.xlu0 %v730, 32
        %v792 = vpop.permute.xlu0 %791
        %793 = vrot.lane.b32.xlu0 %v732, 32
        %v794 = vpop.permute.xlu0 %793
        %795 = vrot.lane.b32.xlu0 %v734, 32
        %v796 = vpop.permute.xlu0 %795
        %797 = vrot.lane.b32.xlu0 %v736, 32
        %v798 = vpop.permute.xlu0 %797
        %799 = vrot.lane.b32.xlu0 %v738, 32
        %v800 = vpop.permute.xlu0 %799
        %801 = vrot.lane.b32.xlu0 %v740, 32
        %v802 = vpop.permute.xlu0 %801
        %803 = vrot.lane.b32.xlu0 %v742, 32
        %v804 = vpop.permute.xlu0 %803
        %805 = vrot.lane.b32.xlu0 %v744, 32
        %v806 = vpop.permute.xlu0 %805
        %807 = vrot.lane.b32.xlu0 %v746, 32
        %v808 = vpop.permute.xlu0 %807
        %809 = vrot.lane.b32.xlu0 %v748, 32
        %v810 = vpop.permute.xlu0 %809
        %811 = vrot.lane.b32.xlu0 %v750, 32
        %v812 = vpop.permute.xlu0 %811
        %813 = vrot.lane.b32.xlu0 %v752, 32
        %v814 = vpop.permute.xlu0 %813
        %815 = vrot.lane.b32.xlu0 %v754, 32
        %v816 = vpop.permute.xlu0 %815
        %817 = vrot.lane.b32.xlu0 %v756, 32
        %v818 = vpop.permute.xlu0 %817
        %819 = vrot.lane.b32.xlu0 %v758, 32
        %v820 = vpop.permute.xlu0 %819
        %821 = vrot.lane.b32.xlu0 %v760, 32
        %v822 = vpop.permute.xlu0 %821
        %823 = vrot.lane.b32.xlu0 %v762, 32
        %v824 = vpop.permute.xlu0 %823
        %825 = vrot.lane.b32.xlu0 %v764, 32
        %v826 = vpop.permute.xlu0 %825
        %827 = vrot.lane.b32.xlu0 %v766, 32
        %v828 = vpop.permute.xlu0 %827
        %829 = vrot.lane.b32.xlu0 %v768, 32
        %v830 = vpop.permute.xlu0 %829
        %831 = vrot.lane.b32.xlu0 %v770, 32
        %v832 = vpop.permute.xlu0 %831
        %833 = vrot.lane.b32.xlu0 %v772, 32
        %v834 = vpop.permute.xlu0 %833
        %835 = vrot.lane.b32.xlu0 %v774, 32
        %v836 = vpop.permute.xlu0 %835
        %837 = vrot.lane.b32.xlu0 %v776, 32
        %v838 = vpop.permute.xlu0 %837
        %839 = vrot.lane.b32.xlu0 %v778, 32
        %v840 = vpop.permute.xlu0 %839
        %841 = vrot.lane.b32.xlu0 %v780, 32
        %v842 = vpop.permute.xlu0 %841
        %843 = vrot.lane.b32.xlu0 %v782, 32
        %v844 = vpop.permute.xlu0 %843
        %845 = vrot.lane.b32.xlu0 %v784, 32
        %v846 = vpop.permute.xlu0 %845
        %847 = vrot.lane.b32.xlu0 %v786, 32
        %v848 = vpop.permute.xlu0 %847
        %849 = vrot.lane.b32.xlu0 %v785, 32
        %v850 = vpop.permute.xlu0 %849
        %vm883 = vcmask 1045504
        %v884 = vrot.slane %v659, 2
        %v885 = vrot.slane %v660, 2
        %v886 = vsel %vm883, %v884, %v885
        %v887 = vrot.slane %v661, 2
        %v888 = vsel %vm883, %v885, %v887
        %v889 = vrot.slane %v662, 2
        %v890 = vsel %vm883, %v887, %v889
        %v891 = vrot.slane %v663, 2
        %v892 = vsel %vm883, %v889, %v891
        %v893 = vrot.slane %v664, 2
        %v894 = vsel %vm883, %v891, %v893
        %v895 = vrot.slane %v665, 2
        %v896 = vsel %vm883, %v893, %v895
        %v897 = vrot.slane %v666, 2
        %v898 = vsel %vm883, %v895, %v897
        %v899 = vrot.slane %v667, 2
        %v900 = vsel %vm883, %v897, %v899
        %v901 = vrot.slane %v668, 2
        %v902 = vsel %vm883, %v899, %v901
        %v903 = vrot.slane %v669, 2
        %v904 = vsel %vm883, %v901, %v903
        %v905 = vrot.slane %v670, 2
        %v906 = vsel %vm883, %v903, %v905
        %v907 = vrot.slane %v671, 2
        %v908 = vsel %vm883, %v905, %v907
        %v909 = vrot.slane %v672, 2
        %v910 = vsel %vm883, %v907, %v909
        %v911 = vrot.slane %v673, 2
        %v912 = vsel %vm883, %v909, %v911
        %v913 = vrot.slane %v674, 2
        %v914 = vsel %vm883, %v911, %v913
        %v915 = vrot.slane %v675, 2
        %v916 = vsel %vm883, %v913, %v915
        %v917 = vrot.slane %v676, 2
        %v918 = vsel %vm883, %v915, %v917
        %v919 = vrot.slane %v677, 2
        %v920 = vsel %vm883, %v917, %v919
        %v921 = vrot.slane %v678, 2
        %v922 = vsel %vm883, %v919, %v921
        %v923 = vrot.slane %v679, 2
        %v924 = vsel %vm883, %v921, %v923
        %v925 = vrot.slane %v680, 2
        %v926 = vsel %vm883, %v923, %v925
        %v927 = vrot.slane %v681, 2
        %v928 = vsel %vm883, %v925, %v927
        %v929 = vrot.slane %v682, 2
        %v930 = vsel %vm883, %v927, %v929
        %v931 = vrot.slane %v683, 2
        %v932 = vsel %vm883, %v929, %v931
        %v933 = vrot.slane %v684, 2
        %v934 = vsel %vm883, %v931, %v933
        %v935 = vrot.slane %v685, 2
        %v936 = vsel %vm883, %v933, %v935
        %v937 = vrot.slane %v686, 2
        %v938 = vsel %vm883, %v935, %v937
        %v939 = vrot.slane %v687, 2
        %v940 = vsel %vm883, %v937, %v939
        %v941 = vrot.slane %v688, 2
        %v942 = vsel %vm883, %v939, %v941
        %v943 = vrot.slane %v689, 2
        %v944 = vsel %vm883, %v941, %v943
        %v945 = vrot.slane %v690, 2
        %v946 = vsel %vm883, %v943, %v945
        %947 = vrot.lane.b32.xlu0 %v886, 64
        %v948 = vpop.permute.xlu0 %947
        %949 = vrot.lane.b32.xlu0 %v888, 64
        %v950 = vpop.permute.xlu0 %949
        %951 = vrot.lane.b32.xlu0 %v890, 64
        %v952 = vpop.permute.xlu0 %951
        %953 = vrot.lane.b32.xlu0 %v892, 64
        %v954 = vpop.permute.xlu0 %953
        %955 = vrot.lane.b32.xlu0 %v894, 64
        %v956 = vpop.permute.xlu0 %955
        %957 = vrot.lane.b32.xlu0 %v896, 64
        %v958 = vpop.permute.xlu0 %957
        %959 = vrot.lane.b32.xlu0 %v898, 64
        %v960 = vpop.permute.xlu0 %959
        %961 = vrot.lane.b32.xlu0 %v900, 64
        %v962 = vpop.permute.xlu0 %961
        %963 = vrot.lane.b32.xlu0 %v902, 64
        %v964 = vpop.permute.xlu0 %963
        %965 = vrot.lane.b32.xlu0 %v904, 64
        %v966 = vpop.permute.xlu0 %965
        %967 = vrot.lane.b32.xlu0 %v906, 64
        %v968 = vpop.permute.xlu0 %967
        %969 = vrot.lane.b32.xlu0 %v908, 64
        %v970 = vpop.permute.xlu0 %969
        %971 = vrot.lane.b32.xlu0 %v910, 64
        %v972 = vpop.permute.xlu0 %971
        %973 = vrot.lane.b32.xlu0 %v912, 64
        %v974 = vpop.permute.xlu0 %973
        %975 = vrot.lane.b32.xlu0 %v914, 64
        %v976 = vpop.permute.xlu0 %975
        %977 = vrot.lane.b32.xlu0 %v916, 64
        %v978 = vpop.permute.xlu0 %977
        %979 = vrot.lane.b32.xlu0 %v918, 64
        %v980 = vpop.permute.xlu0 %979
        %981 = vrot.lane.b32.xlu0 %v920, 64
        %v982 = vpop.permute.xlu0 %981
        %983 = vrot.lane.b32.xlu0 %v922, 64
        %v984 = vpop.permute.xlu0 %983
        %985 = vrot.lane.b32.xlu0 %v924, 64
        %v986 = vpop.permute.xlu0 %985
        %987 = vrot.lane.b32.xlu0 %v926, 64
        %v988 = vpop.permute.xlu0 %987
        %989 = vrot.lane.b32.xlu0 %v928, 64
        %v990 = vpop.permute.xlu0 %989
        %991 = vrot.lane.b32.xlu0 %v930, 64
        %v992 = vpop.permute.xlu0 %991
        %993 = vrot.lane.b32.xlu0 %v932, 64
        %v994 = vpop.permute.xlu0 %993
        %995 = vrot.lane.b32.xlu0 %v934, 64
        %v996 = vpop.permute.xlu0 %995
        %997 = vrot.lane.b32.xlu0 %v936, 64
        %v998 = vpop.permute.xlu0 %997
        %999 = vrot.lane.b32.xlu0 %v938, 64
        %v1000 = vpop.permute.xlu0 %999
        %1001 = vrot.lane.b32.xlu0 %v940, 64
        %v1002 = vpop.permute.xlu0 %1001
        %1003 = vrot.lane.b32.xlu0 %v942, 64
        %v1004 = vpop.permute.xlu0 %1003
        %1005 = vrot.lane.b32.xlu0 %v944, 64
        %v1006 = vpop.permute.xlu0 %1005
        %1007 = vrot.lane.b32.xlu0 %v946, 64
        %v1008 = vpop.permute.xlu0 %1007
        %1009 = vrot.lane.b32.xlu0 %v945, 64
        %v1010 = vpop.permute.xlu0 %1009
        %vm1043 = vcmask 1044480
        %v1044 = vrot.slane %v659, 3
        %v1045 = vrot.slane %v660, 3
        %v1046 = vsel %vm1043, %v1044, %v1045
        %v1047 = vrot.slane %v661, 3
        %v1048 = vsel %vm1043, %v1045, %v1047
        %v1049 = vrot.slane %v662, 3
        %v1050 = vsel %vm1043, %v1047, %v1049
        %v1051 = vrot.slane %v663, 3
        %v1052 = vsel %vm1043, %v1049, %v1051
        %v1053 = vrot.slane %v664, 3
        %v1054 = vsel %vm1043, %v1051, %v1053
        %v1055 = vrot.slane %v665, 3
        %v1056 = vsel %vm1043, %v1053, %v1055
        %v1057 = vrot.slane %v666, 3
        %v1058 = vsel %vm1043, %v1055, %v1057
        %v1059 = vrot.slane %v667, 3
        %v1060 = vsel %vm1043, %v1057, %v1059
        %v1061 = vrot.slane %v668, 3
        %v1062 = vsel %vm1043, %v1059, %v1061
        %v1063 = vrot.slane %v669, 3
        %v1064 = vsel %vm1043, %v1061, %v1063
        %v1065 = vrot.slane %v670, 3
        %v1066 = vsel %vm1043, %v1063, %v1065
        %v1067 = vrot.slane %v671, 3
        %v1068 = vsel %vm1043, %v1065, %v1067
        %v1069 = vrot.slane %v672, 3
        %v1070 = vsel %vm1043, %v1067, %v1069
        %v1071 = vrot.slane %v673, 3
        %v1072 = vsel %vm1043, %v1069, %v1071
        %v1073 = vrot.slane %v674, 3
        %v1074 = vsel %vm1043, %v1071, %v1073
        %v1075 = vrot.slane %v675, 3
        %v1076 = vsel %vm1043, %v1073, %v1075
        %v1077 = vrot.slane %v676, 3
        %v1078 = vsel %vm1043, %v1075, %v1077
        %v1079 = vrot.slane %v677, 3
        %v1080 = vsel %vm1043, %v1077, %v1079
        %v1081 = vrot.slane %v678, 3
        %v1082 = vsel %vm1043, %v1079, %v1081
        %v1083 = vrot.slane %v679, 3
        %v1084 = vsel %vm1043, %v1081, %v1083
        %v1085 = vrot.slane %v680, 3
        %v1086 = vsel %vm1043, %v1083, %v1085
        %v1087 = vrot.slane %v681, 3
        %v1088 = vsel %vm1043, %v1085, %v1087
        %v1089 = vrot.slane %v682, 3
        %v1090 = vsel %vm1043, %v1087, %v1089
        %v1091 = vrot.slane %v683, 3
        %v1092 = vsel %vm1043, %v1089, %v1091
        %v1093 = vrot.slane %v684, 3
        %v1094 = vsel %vm1043, %v1091, %v1093
        %v1095 = vrot.slane %v685, 3
        %v1096 = vsel %vm1043, %v1093, %v1095
        %v1097 = vrot.slane %v686, 3
        %v1098 = vsel %vm1043, %v1095, %v1097
        %v1099 = vrot.slane %v687, 3
        %v1100 = vsel %vm1043, %v1097, %v1099
        %v1101 = vrot.slane %v688, 3
        %v1102 = vsel %vm1043, %v1099, %v1101
        %v1103 = vrot.slane %v689, 3
        %v1104 = vsel %vm1043, %v1101, %v1103
        %v1105 = vrot.slane %v690, 3
        %v1106 = vsel %vm1043, %v1103, %v1105
        %1107 = vrot.lane.b32.xlu0 %v1046, 96
        %v1108 = vpop.permute.xlu0 %1107
        %1109 = vrot.lane.b32.xlu0 %v1048, 96
        %v1110 = vpop.permute.xlu0 %1109
        %1111 = vrot.lane.b32.xlu0 %v1050, 96
        %v1112 = vpop.permute.xlu0 %1111
        %1113 = vrot.lane.b32.xlu0 %v1052, 96
        %v1114 = vpop.permute.xlu0 %1113
        %1115 = vrot.lane.b32.xlu0 %v1054, 96
        %v1116 = vpop.permute.xlu0 %1115
        %1117 = vrot.lane.b32.xlu0 %v1056, 96
        %v1118 = vpop.permute.xlu0 %1117
        %1119 = vrot.lane.b32.xlu0 %v1058, 96
        %v1120 = vpop.permute.xlu0 %1119
        %1121 = vrot.lane.b32.xlu0 %v1060, 96
        %v1122 = vpop.permute.xlu0 %1121
        %1123 = vrot.lane.b32.xlu0 %v1062, 96
        %v1124 = vpop.permute.xlu0 %1123
        %1125 = vrot.lane.b32.xlu0 %v1064, 96
        %v1126 = vpop.permute.xlu0 %1125
        %1127 = vrot.lane.b32.xlu0 %v1066, 96
        %v1128 = vpop.permute.xlu0 %1127
        %1129 = vrot.lane.b32.xlu0 %v1068, 96
        %v1130 = vpop.permute.xlu0 %1129
        %1131 = vrot.lane.b32.xlu0 %v1070, 96
        %v1132 = vpop.permute.xlu0 %1131
        %1133 = vrot.lane.b32.xlu0 %v1072, 96
        %v1134 = vpop.permute.xlu0 %1133
        %1135 = vrot.lane.b32.xlu0 %v1074, 96
        %v1136 = vpop.permute.xlu0 %1135
        %1137 = vrot.lane.b32.xlu0 %v1076, 96
        %v1138 = vpop.permute.xlu0 %1137
        %1139 = vrot.lane.b32.xlu0 %v1078, 96
        %v1140 = vpop.permute.xlu0 %1139
        %1141 = vrot.lane.b32.xlu0 %v1080, 96
        %v1142 = vpop.permute.xlu0 %1141
        %1143 = vrot.lane.b32.xlu0 %v1082, 96
        %v1144 = vpop.permute.xlu0 %1143
        %1145 = vrot.lane.b32.xlu0 %v1084, 96
        %v1146 = vpop.permute.xlu0 %1145
        %1147 = vrot.lane.b32.xlu0 %v1086, 96
        %v1148 = vpop.permute.xlu0 %1147
        %1149 = vrot.lane.b32.xlu0 %v1088, 96
        %v1150 = vpop.permute.xlu0 %1149
        %1151 = vrot.lane.b32.xlu0 %v1090, 96
        %v1152 = vpop.permute.xlu0 %1151
        %1153 = vrot.lane.b32.xlu0 %v1092, 96
        %v1154 = vpop.permute.xlu0 %1153
        %1155 = vrot.lane.b32.xlu0 %v1094, 96
        %v1156 = vpop.permute.xlu0 %1155
        %1157 = vrot.lane.b32.xlu0 %v1096, 96
        %v1158 = vpop.permute.xlu0 %1157
        %1159 = vrot.lane.b32.xlu0 %v1098, 96
        %v1160 = vpop.permute.xlu0 %1159
        %1161 = vrot.lane.b32.xlu0 %v1100, 96
        %v1162 = vpop.permute.xlu0 %1161
        %1163 = vrot.lane.b32.xlu0 %v1102, 96
        %v1164 = vpop.permute.xlu0 %1163
        %1165 = vrot.lane.b32.xlu0 %v1104, 96
        %v1166 = vpop.permute.xlu0 %1165
        %1167 = vrot.lane.b32.xlu0 %v1106, 96
        %v1168 = vpop.permute.xlu0 %1167
        %1169 = vrot.lane.b32.xlu0 %v1105, 96
        %v1170 = vpop.permute.xlu0 %1169
        %vm1203 = vcmask 1043456
        %v1204 = vrot.slane %v659, 4
        %v1205 = vrot.slane %v660, 4
        %v1206 = vsel %vm1203, %v1204, %v1205
        %v1207 = vrot.slane %v661, 4
        %v1208 = vsel %vm1203, %v1205, %v1207
        %v1209 = vrot.slane %v662, 4
        %v1210 = vsel %vm1203, %v1207, %v1209
        %v1211 = vrot.slane %v663, 4
        %v1212 = vsel %vm1203, %v1209, %v1211
        %v1213 = vrot.slane %v664, 4
        %v1214 = vsel %vm1203, %v1211, %v1213
        %v1215 = vrot.slane %v665, 4
        %v1216 = vsel %vm1203, %v1213, %v1215
        %v1217 = vrot.slane %v666, 4
        %v1218 = vsel %vm1203, %v1215, %v1217
        %v1219 = vrot.slane %v667, 4
        %v1220 = vsel %vm1203, %v1217, %v1219
        %v1221 = vrot.slane %v668, 4
        %v1222 = vsel %vm1203, %v1219, %v1221
        %v1223 = vrot.slane %v669, 4
        %v1224 = vsel %vm1203, %v1221, %v1223
        %v1225 = vrot.slane %v670, 4
        %v1226 = vsel %vm1203, %v1223, %v1225
        %v1227 = vrot.slane %v671, 4
        %v1228 = vsel %vm1203, %v1225, %v1227
        %v1229 = vrot.slane %v672, 4
        %v1230 = vsel %vm1203, %v1227, %v1229
        %v1231 = vrot.slane %v673, 4
        %v1232 = vsel %vm1203, %v1229, %v1231
        %v1233 = vrot.slane %v674, 4
        %v1234 = vsel %vm1203, %v1231, %v1233
        %v1235 = vrot.slane %v675, 4
        %v1236 = vsel %vm1203, %v1233, %v1235
        %v1237 = vrot.slane %v676, 4
        %v1238 = vsel %vm1203, %v1235, %v1237
        %v1239 = vrot.slane %v677, 4
        %v1240 = vsel %vm1203, %v1237, %v1239
        %v1241 = vrot.slane %v678, 4
        %v1242 = vsel %vm1203, %v1239, %v1241
        %v1243 = vrot.slane %v679, 4
        %v1244 = vsel %vm1203, %v1241, %v1243
        %v1245 = vrot.slane %v680, 4
        %v1246 = vsel %vm1203, %v1243, %v1245
        %v1247 = vrot.slane %v681, 4
        %v1248 = vsel %vm1203, %v1245, %v1247
        %v1249 = vrot.slane %v682, 4
        %v1250 = vsel %vm1203, %v1247, %v1249
        %v1251 = vrot.slane %v683, 4
        %v1252 = vsel %vm1203, %v1249, %v1251
        %v1253 = vrot.slane %v684, 4
        %v1254 = vsel %vm1203, %v1251, %v1253
        %v1255 = vrot.slane %v685, 4
        %v1256 = vsel %vm1203, %v1253, %v1255
        %v1257 = vrot.slane %v686, 4
        %v1258 = vsel %vm1203, %v1255, %v1257
        %v1259 = vrot.slane %v687, 4
        %v1260 = vsel %vm1203, %v1257, %v1259
        %v1261 = vrot.slane %v688, 4
        %v1262 = vsel %vm1203, %v1259, %v1261
        %v1263 = vrot.slane %v689, 4
        %v1264 = vsel %vm1203, %v1261, %v1263
        %v1265 = vrot.slane %v690, 4
        %v1266 = vsel %vm1203, %v1263, %v1265
        %vm1299 = vcmask 261120
        %v1300 = vsel %vm1299, %v659, %v788
        %v1301 = vsel %vm1299, %v660, %v790
        %v1302 = vsel %vm1299, %v661, %v792
        %v1303 = vsel %vm1299, %v662, %v794
        %v1304 = vsel %vm1299, %v663, %v796
        %v1305 = vsel %vm1299, %v664, %v798
        %v1306 = vsel %vm1299, %v665, %v800
        %v1307 = vsel %vm1299, %v666, %v802
        %v1308 = vsel %vm1299, %v667, %v804
        %v1309 = vsel %vm1299, %v668, %v806
        %v1310 = vsel %vm1299, %v669, %v808
        %v1311 = vsel %vm1299, %v670, %v810
        %v1312 = vsel %vm1299, %v671, %v812
        %v1313 = vsel %vm1299, %v672, %v814
        %v1314 = vsel %vm1299, %v673, %v816
        %v1315 = vsel %vm1299, %v674, %v818
        %v1316 = vsel %vm1299, %v675, %v820
        %v1317 = vsel %vm1299, %v676, %v822
        %v1318 = vsel %vm1299, %v677, %v824
        %v1319 = vsel %vm1299, %v678, %v826
        %v1320 = vsel %vm1299, %v679, %v828
        %v1321 = vsel %vm1299, %v680, %v830
        %v1322 = vsel %vm1299, %v681, %v832
        %v1323 = vsel %vm1299, %v682, %v834
        %v1324 = vsel %vm1299, %v683, %v836
        %v1325 = vsel %vm1299, %v684, %v838
        %v1326 = vsel %vm1299, %v685, %v840
        %v1327 = vsel %vm1299, %v686, %v842
        %v1328 = vsel %vm1299, %v687, %v844
        %v1329 = vsel %vm1299, %v688, %v846
        %v1330 = vsel %vm1299, %v689, %v848
        %v1331 = vsel %vm1299, %v690, %v850
        %vm1332 = vcmask 523264
        %v1333 = vsel %vm1332, %v1300, %v948
        %v1334 = vsel %vm1332, %v1301, %v950
        %v1335 = vsel %vm1332, %v1302, %v952
        %v1336 = vsel %vm1332, %v1303, %v954
        %v1337 = vsel %vm1332, %v1304, %v956
        %v1338 = vsel %vm1332, %v1305, %v958
        %v1339 = vsel %vm1332, %v1306, %v960
        %v1340 = vsel %vm1332, %v1307, %v962
        %v1341 = vsel %vm1332, %v1308, %v964
        %v1342 = vsel %vm1332, %v1309, %v966
        %v1343 = vsel %vm1332, %v1310, %v968
        %v1344 = vsel %vm1332, %v1311, %v970
        %v1345 = vsel %vm1332, %v1312, %v972
        %v1346 = vsel %vm1332, %v1313, %v974
        %v1347 = vsel %vm1332, %v1314, %v976
        %v1348 = vsel %vm1332, %v1315, %v978
        %v1349 = vsel %vm1332, %v1316, %v980
        %v1350 = vsel %vm1332, %v1317, %v982
        %v1351 = vsel %vm1332, %v1318, %v984
        %v1352 = vsel %vm1332, %v1319, %v986
        %v1353 = vsel %vm1332, %v1320, %v988
        %v1354 = vsel %vm1332, %v1321, %v990
        %v1355 = vsel %vm1332, %v1322, %v992
        %v1356 = vsel %vm1332, %v1323, %v994
        %v1357 = vsel %vm1332, %v1324, %v996
        %v1358 = vsel %vm1332, %v1325, %v998
        %v1359 = vsel %vm1332, %v1326, %v1000
        %v1360 = vsel %vm1332, %v1327, %v1002
        %v1361 = vsel %vm1332, %v1328, %v1004
        %v1362 = vsel %vm1332, %v1329, %v1006
        %v1363 = vsel %vm1332, %v1330, %v1008
        %v1364 = vsel %vm1332, %v1331, %v1010
        %vm1365 = vcmask 785408
        %v1366 = vsel %vm1365, %v1333, %v1108
        %v1367 = vsel %vm1365, %v1334, %v1110
        %v1368 = vsel %vm1365, %v1335, %v1112
        %v1369 = vsel %vm1365, %v1336, %v1114
        %v1370 = vsel %vm1365, %v1337, %v1116
        %v1371 = vsel %vm1365, %v1338, %v1118
        %v1372 = vsel %vm1365, %v1339, %v1120
        %v1373 = vsel %vm1365, %v1340, %v1122
        %v1374 = vsel %vm1365, %v1341, %v1124
        %v1375 = vsel %vm1365, %v1342, %v1126
        %v1376 = vsel %vm1365, %v1343, %v1128
        %v1377 = vsel %vm1365, %v1344, %v1130
        %v1378 = vsel %vm1365, %v1345, %v1132
        %v1379 = vsel %vm1365, %v1346, %v1134
        %v1380 = vsel %vm1365, %v1347, %v1136
        %v1381 = vsel %vm1365, %v1348, %v1138
        %v1382 = vsel %vm1365, %v1349, %v1140
        %v1383 = vsel %vm1365, %v1350, %v1142
        %v1384 = vsel %vm1365, %v1351, %v1144
        %v1385 = vsel %vm1365, %v1352, %v1146
        %v1386 = vsel %vm1365, %v1353, %v1148
        %v1387 = vsel %vm1365, %v1354, %v1150
        %v1388 = vsel %vm1365, %v1355, %v1152
        %v1389 = vsel %vm1365, %v1356, %v1154
        %v1390 = vsel %vm1365, %v1357, %v1156
        %v1391 = vsel %vm1365, %v1358, %v1158
        %v1392 = vsel %vm1365, %v1359, %v1160
        %v1393 = vsel %vm1365, %v1360, %v1162
        %v1394 = vsel %vm1365, %v1361, %v1164
        %v1395 = vsel %vm1365, %v1362, %v1166
        %v1396 = vsel %vm1365, %v1363, %v1168
        %v1397 = vsel %vm1365, %v1364, %v1170
        %v1398 = vpack.c.bf16 %v1367, %v1366
        %v1399 = vpack.c.bf16 %v1208, %v1206
        %v1400 = vpack.c.bf16 %v1369, %v1368
        %v1401 = vpack.c.bf16 %v1212, %v1210
        %v1402 = vpack.c.bf16 %v1371, %v1370
        %v1403 = vpack.c.bf16 %v1216, %v1214
        %v1404 = vpack.c.bf16 %v1373, %v1372
        %v1405 = vpack.c.bf16 %v1220, %v1218
        %v1406 = vpack.c.bf16 %v1375, %v1374
        %v1407 = vpack.c.bf16 %v1224, %v1222
        %v1408 = vpack.c.bf16 %v1377, %v1376
        %v1409 = vpack.c.bf16 %v1228, %v1226
        %v1410 = vpack.c.bf16 %v1379, %v1378
        %v1411 = vpack.c.bf16 %v1232, %v1230
        %v1412 = vpack.c.bf16 %v1381, %v1380
        %v1413 = vpack.c.bf16 %v1236, %v1234
        %v1414 = vpack.c.bf16 %v1383, %v1382
        %v1415 = vpack.c.bf16 %v1240, %v1238
        %v1416 = vpack.c.bf16 %v1385, %v1384
        %v1417 = vpack.c.bf16 %v1244, %v1242
        %v1418 = vpack.c.bf16 %v1387, %v1386
        %v1419 = vpack.c.bf16 %v1248, %v1246
        %v1420 = vpack.c.bf16 %v1389, %v1388
        %v1421 = vpack.c.bf16 %v1252, %v1250
        %v1422 = vpack.c.bf16 %v1391, %v1390
        %v1423 = vpack.c.bf16 %v1256, %v1254
        %v1424 = vpack.c.bf16 %v1393, %v1392
        %v1425 = vpack.c.bf16 %v1260, %v1258
        %v1426 = vpack.c.bf16 %v1395, %v1394
        %v1427 = vpack.c.bf16 %v1264, %v1262
        %v1428 = vpack.c.bf16 %v1397, %v1396
        %v1429 = vpack.c.bf16 %v1265, %v1266
        %v1430 = vld [vmem:[#allocation2] sm:$0xff]
        %v1431 = vld [vmem:[#allocation2 + $0x8] sm:$0xff]
        %v1432 = vld [vmem:[#allocation2 + $0x10] sm:$0xff]
        %v1433 = vld [vmem:[#allocation2 + $0x18] sm:$0xff]
        %v1434 = vld [vmem:[#allocation2 + $0x20] sm:$0xff]
        %v1435 = vld [vmem:[#allocation2 + $0x28] sm:$0xff]
        %v1436 = vld [vmem:[#allocation2 + $0x30] sm:$0xff]
        %v1437 = vld [vmem:[#allocation2 + $0x38] sm:$0xff]
        %v1438 = vld [vmem:[#allocation2 + $0x40] sm:$0xff]
        %v1439 = vld [vmem:[#allocation2 + $0x48] sm:$0xff]
        %v1440 = vld [vmem:[#allocation2 + $0x50] sm:$0xff]
        %v1441 = vld [vmem:[#allocation2 + $0x58] sm:$0xff]
        %v1442 = vld [vmem:[#allocation2 + $0x60] sm:$0xff]
        %v1443 = vld [vmem:[#allocation2 + $0x68] sm:$0xff]
        %v1444 = vld [vmem:[#allocation2 + $0x70] sm:$0xff]
        %v1445 = vld [vmem:[#allocation2 + $0x78] sm:$0xff]
        %v1446 = vld [vmem:[#allocation2 + $0x80] sm:$0xff]
        %v1447 = vld [vmem:[#allocation2 + $0x88] sm:$0xff]
        %v1448 = vld [vmem:[#allocation2 + $0x90] sm:$0xff]
        %v1449 = vld [vmem:[#allocation2 + $0x98] sm:$0xff]
        %v1450 = vld [vmem:[#allocation5] sm:$0x3]
        %v1452 = vlaneseq
        %v1453 = vshrl.u32 %v1452, 7
        %v1454 = vsub.s32 0, %v1453
        %v1455 = vrot.slane %v1450, %v1454
        %v1456 = vlaneseq
        %v1457 = vshrl.u32 %v1456, 7
        %v1458 = vsub.s32 1, %v1457
        %v1459 = vrot.slane %v1450, %v1458
        %v1482 = vunpack.c.l.b16 %v1430
        %v1483 = vunpack.c.h.b16 %v1430
        %v1484 = vunpack.c.l.b16 %v1431
        %v1485 = vunpack.c.h.b16 %v1431
        %v1486 = vunpack.c.l.b16 %v1432
        %v1487 = vunpack.c.h.b16 %v1432
        %v1488 = vunpack.c.l.b16 %v1433
        %v1489 = vunpack.c.h.b16 %v1433
        %v1490 = vunpack.c.l.b16 %v1434
        %v1491 = vunpack.c.h.b16 %v1434
        %v1492 = vunpack.c.l.b16 %v1435
        %v1493 = vunpack.c.h.b16 %v1435
        %v1494 = vunpack.c.l.b16 %v1436
        %v1495 = vunpack.c.h.b16 %v1436
        %v1496 = vunpack.c.l.b16 %v1437
        %v1497 = vunpack.c.h.b16 %v1437
        %v1498 = vunpack.c.l.b16 %v1438
        %v1499 = vunpack.c.h.b16 %v1438
        %v1500 = vunpack.c.l.b16 %v1439
        %v1501 = vunpack.c.h.b16 %v1439
        %v1502 = vunpack.c.l.b16 %v1440
        %v1503 = vunpack.c.h.b16 %v1440
        %v1504 = vunpack.c.l.b16 %v1441
        %v1505 = vunpack.c.h.b16 %v1441
        %v1506 = vunpack.c.l.b16 %v1442
        %v1507 = vunpack.c.h.b16 %v1442
        %v1508 = vunpack.c.l.b16 %v1443
        %v1509 = vunpack.c.h.b16 %v1443
        %v1510 = vunpack.c.l.b16 %v1444
        %v1511 = vunpack.c.h.b16 %v1444
        %v1512 = vunpack.c.l.b16 %v1445
        %v1513 = vunpack.c.h.b16 %v1445
        %v1514 = vunpack.c.l.b16 %v1446
        %v1515 = vunpack.c.h.b16 %v1446
        %v1516 = vunpack.c.l.b16 %v1447
        %v1517 = vunpack.c.h.b16 %v1447
        %v1518 = vunpack.c.l.b16 %v1448
        %v1519 = vunpack.c.h.b16 %v1448
        %v1520 = vunpack.c.l.b16 %v1449
        %v1521 = vunpack.c.h.b16 %v1449
        %v1522 = vpack.c.b16 %v1484, %v1482
        %v1523 = vpack.c.b16 %v1485, %v1483
        %v1524 = vpack.c.b16 %v1488, %v1486
        %v1525 = vpack.c.b16 %v1489, %v1487
        %v1526 = vpack.c.b16 %v1492, %v1490
        %v1527 = vpack.c.b16 %v1493, %v1491
        %v1528 = vpack.c.b16 %v1496, %v1494
        %v1529 = vpack.c.b16 %v1497, %v1495
        %v1530 = vpack.c.b16 %v1500, %v1498
        %v1531 = vpack.c.b16 %v1501, %v1499
        %v1532 = vpack.c.b16 %v1504, %v1502
        %v1533 = vpack.c.b16 %v1505, %v1503
        %v1534 = vpack.c.b16 %v1508, %v1506
        %v1535 = vpack.c.b16 %v1509, %v1507
        %v1536 = vpack.c.b16 %v1512, %v1510
        %v1537 = vpack.c.b16 %v1513, %v1511
        %v1538 = vpack.c.b16 %v1516, %v1514
        %v1539 = vpack.c.b16 %v1517, %v1515
        %v1540 = vpack.c.b16 %v1520, %v1518
        %v1541 = vpack.c.b16 %v1521, %v1519
        %v1563 = vsel %vm1299, %v1399, 0
        %v1566 = vsel %vm1299, %v1401, 0
        %v1569 = vsel %vm1299, %v1403, 0
        %v1572 = vsel %vm1299, %v1405, 0
        %v1575 = vsel %vm1299, %v1407, 0
        %v1578 = vsel %vm1299, %v1409, 0
        %v1581 = vsel %vm1299, %v1411, 0
        %v1584 = vsel %vm1299, %v1413, 0
        %v1587 = vsel %vm1299, %v1415, 0
        %v1590 = vsel %vm1299, %v1417, 0
        %v1593 = vsel %vm1299, %v1419, 0
        %v1596 = vsel %vm1299, %v1421, 0
        %v1599 = vsel %vm1299, %v1423, 0
        %v1602 = vsel %vm1299, %v1425, 0
        %v1605 = vsel %vm1299, %v1427, 0
        %v1608 = vsel %vm1299, %v1429, 0
        %1610 = vmatprep.subr.bf16.mxu0 %v1523
        %1611 = vmatpush1.bf16.msra.mxu0 %v1522
        %1612 = vmatprep.subr.bf16.mxu0 %v1525
        %1613 = vmatpush1.bf16.msra.mxu0 %v1524
        %1614 = vmatprep.subr.bf16.mxu0 %v1527
        %1615 = vmatpush1.bf16.msra.mxu0 %v1526
        %1616 = vmatprep.subr.bf16.mxu0 %v1529
        %1617 = vmatpush1.bf16.msra.mxu0 %v1528
        %1618 = vmatprep.subr.bf16.mxu0 %v1531
        %1619 = vmatpush1.bf16.msra.mxu0 %v1530
        %1620 = vmatprep.subr.bf16.mxu0 %v1533
        %1621 = vmatpush1.bf16.msra.mxu0 %v1532
        %1622 = vmatprep.subr.bf16.mxu0 %v1535
        %1623 = vmatpush1.bf16.msra.mxu0 %v1534
        %1624 = vmatprep.subr.bf16.mxu0 %v1537
        %1625 = vmatpush1.bf16.msra.mxu0 %v1536
        %1626 = vmatprep.subr.bf16.mxu0 %v1539
        %1627 = vmatpush1.bf16.msra.mxu0 %v1538
        %1628 = vmatprep.subr.bf16.mxu0 %v1541
        %1629 = vmatpush1.bf16.msra.mxu0 %v1540
        %1630 = vmatprep.subr.bf16.mxu0 0
        %1631 = vmatpush1.bf16.msra.mxu0 0
        %1632 = vmatprep.subr.bf16.mxu0 0
        %1633 = vmatpush1.bf16.msra.mxu0 0
        %1634 = vmatprep.subr.bf16.mxu0 0
        %1635 = vmatpush1.bf16.msra.mxu0 0
        %1636 = vmatprep.subr.bf16.mxu0 0
        %1637 = vmatpush1.bf16.msra.mxu0 0
        %1638 = vmatprep.subr.bf16.mxu0 0
        %1639 = vmatpush1.bf16.msra.mxu0 0
        %1640 = vmatprep.subr.bf16.mxu0 0
        %1641 = vmatpush1.bf16.msra.mxu0 0
        %1642 = vmatprep.mubr.bf16.mxu0 %v1563
        %1643 = vmatmul.mubr.bf16.gmra.mrb[0].mxu0 %v1398
        %v1644 = vpop.f32.mrb[0].mxu0
        %v1645 = vadd.f32 %v1455, %v1644
        %v1646 = vpop.f32.mrb[0].mxu0
        %v1647 = vadd.f32 %v1459, %v1646
        %v1648 = vpop.f32.mrb[0].mxu0
        %v1649 = vadd.f32 %v1455, %v1648
        %v1650 = vpop.f32.mrb[0].mxu0
        %v1651 = vadd.f32 %v1459, %v1650
        %1652 = vmatprep.mubr.bf16.mxu0 %v1566
        %1653 = vmatmul.mubr.bf16.gmra.mrb[0].mxu0 %v1400
        %v1654 = vpop.f32.mrb[0].mxu0
        %v1655 = vadd.f32 %v1455, %v1654
        %v1656 = vpop.f32.mrb[0].mxu0
        %v1657 = vadd.f32 %v1459, %v1656
        %v1658 = vpop.f32.mrb[0].mxu0
        %v1659 = vadd.f32 %v1455, %v1658
        %v1660 = vpop.f32.mrb[0].mxu0
        %v1661 = vadd.f32 %v1459, %v1660
        %1662 = vmatprep.mubr.bf16.mxu0 %v1569
        %1663 = vmatmul.mubr.bf16.gmra.mrb[0].mxu0 %v1402
        %v1664 = vpop.f32.mrb[0].mxu0
        %v1665 = vadd.f32 %v1455, %v1664
        %v1666 = vpop.f32.mrb[0].mxu0
        %v1667 = vadd.f32 %v1459, %v1666
        %v1668 = vpop.f32.mrb[0].mxu0
        %v1669 = vadd.f32 %v1455, %v1668
        %v1670 = vpop.f32.mrb[0].mxu0
        %v1671 = vadd.f32 %v1459, %v1670
        %1672 = vmatprep.mubr.bf16.mxu0 %v1572
        %1673 = vmatmul.mubr.bf16.gmra.mrb[0].mxu0 %v1404
        %v1674 = vpop.f32.mrb[0].mxu0
        %v1675 = vadd.f32 %v1455, %v1674
        %v1676 = vpop.f32.mrb[0].mxu0
        %v1677 = vadd.f32 %v1459, %v1676
        %v1678 = vpop.f32.mrb[0].mxu0
        %v1679 = vadd.f32 %v1455, %v1678
        %v1680 = vpop.f32.mrb[0].mxu0
        %v1681 = vadd.f32 %v1459, %v1680
        %1682 = vmatprep.mubr.bf16.mxu0 %v1575
        %1683 = vmatmul.mubr.bf16.gmra.mrb[0].mxu0 %v1406
        %v1684 = vpop.f32.mrb[0].mxu0
        %v1685 = vadd.f32 %v1455, %v1684
        %v1686 = vpop.f32.mrb[0].mxu0
        %v1687 = vadd.f32 %v1459, %v1686
        %v1688 = vpop.f32.mrb[0].mxu0
        %v1689 = vadd.f32 %v1455, %v1688
        %v1690 = vpop.f32.mrb[0].mxu0
        %v1691 = vadd.f32 %v1459, %v1690
        %1692 = vmatprep.mubr.bf16.mxu0 %v1578
        %1693 = vmatmul.mubr.bf16.gmra.mrb[0].mxu0 %v1408
        %v1694 = vpop.f32.mrb[0].mxu0
        %v1695 = vadd.f32 %v1455, %v1694
        %v1696 = vpop.f32.mrb[0].mxu0
        %v1697 = vadd.f32 %v1459, %v1696
        %v1698 = vpop.f32.mrb[0].mxu0
        %v1699 = vadd.f32 %v1455, %v1698
        %v1700 = vpop.f32.mrb[0].mxu0
        %v1701 = vadd.f32 %v1459, %v1700
        %1702 = vmatprep.mubr.bf16.mxu0 %v1581
        %1703 = vmatmul.mubr.bf16.gmra.mrb[0].mxu0 %v1410
        %v1704 = vpop.f32.mrb[0].mxu0
        %v1705 = vadd.f32 %v1455, %v1704
        %v1706 = vpop.f32.mrb[0].mxu0
        %v1707 = vadd.f32 %v1459, %v1706
        %v1708 = vpop.f32.mrb[0].mxu0
        %v1709 = vadd.f32 %v1455, %v1708
        %v1710 = vpop.f32.mrb[0].mxu0
        %v1711 = vadd.f32 %v1459, %v1710
        %1712 = vmatprep.mubr.bf16.mxu0 %v1584
        %1713 = vmatmul.mubr.bf16.gmra.mrb[0].mxu0 %v1412
        %v1714 = vpop.f32.mrb[0].mxu0
        %v1715 = vadd.f32 %v1455, %v1714
        %v1716 = vpop.f32.mrb[0].mxu0
        %v1717 = vadd.f32 %v1459, %v1716
        %v1718 = vpop.f32.mrb[0].mxu0
        %v1719 = vadd.f32 %v1455, %v1718
        %v1720 = vpop.f32.mrb[0].mxu0
        %v1721 = vadd.f32 %v1459, %v1720
        %1722 = vmatprep.mubr.bf16.mxu0 %v1587
        %1723 = vmatmul.mubr.bf16.gmra.mrb[0].mxu0 %v1414
        %v1724 = vpop.f32.mrb[0].mxu0
        %v1725 = vadd.f32 %v1455, %v1724
        %v1726 = vpop.f32.mrb[0].mxu0
        %v1727 = vadd.f32 %v1459, %v1726
        %v1728 = vpop.f32.mrb[0].mxu0
        %v1729 = vadd.f32 %v1455, %v1728
        %v1730 = vpop.f32.mrb[0].mxu0
        %v1731 = vadd.f32 %v1459, %v1730
        %1732 = vmatprep.mubr.bf16.mxu0 %v1590
        %1733 = vmatmul.mubr.bf16.gmra.mrb[0].mxu0 %v1416
        %v1734 = vpop.f32.mrb[0].mxu0
        %v1735 = vadd.f32 %v1455, %v1734
        %v1736 = vpop.f32.mrb[0].mxu0
        %v1737 = vadd.f32 %v1459, %v1736
        %v1738 = vpop.f32.mrb[0].mxu0
        %v1739 = vadd.f32 %v1455, %v1738
        %v1740 = vpop.f32.mrb[0].mxu0
        %v1741 = vadd.f32 %v1459, %v1740
        %1742 = vmatprep.mubr.bf16.mxu0 %v1593
        %1743 = vmatmul.mubr.bf16.gmra.mrb[0].mxu0 %v1418
        %v1744 = vpop.f32.mrb[0].mxu0
        %v1745 = vadd.f32 %v1455, %v1744
        %v1746 = vpop.f32.mrb[0].mxu0
        %v1747 = vadd.f32 %v1459, %v1746
        %v1748 = vpop.f32.mrb[0].mxu0
        %v1749 = vadd.f32 %v1455, %v1748
        %v1750 = vpop.f32.mrb[0].mxu0
        %v1751 = vadd.f32 %v1459, %v1750
        %1752 = vmatprep.mubr.bf16.mxu0 %v1596
        %1753 = vmatmul.mubr.bf16.gmra.mrb[0].mxu0 %v1420
        %v1754 = vpop.f32.mrb[0].mxu0
        %v1755 = vadd.f32 %v1455, %v1754
        %v1756 = vpop.f32.mrb[0].mxu0
        %v1757 = vadd.f32 %v1459, %v1756
        %v1758 = vpop.f32.mrb[0].mxu0
        %v1759 = vadd.f32 %v1455, %v1758
        %v1760 = vpop.f32.mrb[0].mxu0
        %v1761 = vadd.f32 %v1459, %v1760
        %1762 = vmatprep.mubr.bf16.mxu0 %v1599
        %1763 = vmatmul.mubr.bf16.gmra.mrb[0].mxu0 %v1422
        %v1764 = vpop.f32.mrb[0].mxu0
        %v1765 = vadd.f32 %v1455, %v1764
        %v1766 = vpop.f32.mrb[0].mxu0
        %v1767 = vadd.f32 %v1459, %v1766
        %v1768 = vpop.f32.mrb[0].mxu0
        %v1769 = vadd.f32 %v1455, %v1768
        %v1770 = vpop.f32.mrb[0].mxu0
        %v1771 = vadd.f32 %v1459, %v1770
        %1772 = vmatprep.mubr.bf16.mxu0 %v1602
        %1773 = vmatmul.mubr.bf16.gmra.mrb[0].mxu0 %v1424
        %v1774 = vpop.f32.mrb[0].mxu0
        %v1775 = vadd.f32 %v1455, %v1774
        %v1776 = vpop.f32.mrb[0].mxu0
        %v1777 = vadd.f32 %v1459, %v1776
        %v1778 = vpop.f32.mrb[0].mxu0
        %v1779 = vadd.f32 %v1455, %v1778
        %v1780 = vpop.f32.mrb[0].mxu0
        %v1781 = vadd.f32 %v1459, %v1780
        %1782 = vmatprep.mubr.bf16.mxu0 %v1605
        %1783 = vmatmul.mubr.bf16.gmra.mrb[0].mxu0 %v1426
        %v1784 = vpop.f32.mrb[0].mxu0
        %v1785 = vadd.f32 %v1455, %v1784
        %v1786 = vpop.f32.mrb[0].mxu0
        %v1787 = vadd.f32 %v1459, %v1786
        %v1788 = vpop.f32.mrb[0].mxu0
        %v1789 = vadd.f32 %v1455, %v1788
        %v1790 = vpop.f32.mrb[0].mxu0
        %v1791 = vadd.f32 %v1459, %v1790
        %1792 = vmatprep.mubr.bf16.mxu0 %v1608
        %1793 = vmatmul.mubr.bf16.gmra.mrb[0].mxu0 %v1428
        %v1794 = vpop.f32.mrb[0].mxu0
        %v1795 = vadd.f32 %v1455, %v1794
        %v1796 = vpop.f32.mrb[0].mxu0
        %v1797 = vadd.f32 %v1459, %v1796
        %v1798 = vpop.f32.mrb[0].mxu0
        %v1799 = vadd.f32 %v1455, %v1798
        %v1800 = vpop.f32.mrb[0].mxu0
        %v1801 = vadd.f32 %v1459, %v1800
        %1802 = vdwg.mxu0
        %v1803 = vmax.f32 %v1645, 0.0
        %v1804 = vmax.f32 %v1647, 0.0
        %v1805 = vmax.f32 %v1649, 0.0
        %v1806 = vmax.f32 %v1651, 0.0
        %v1807 = vmax.f32 %v1655, 0.0
        %v1808 = vmax.f32 %v1657, 0.0
        %v1809 = vmax.f32 %v1659, 0.0
        %v1810 = vmax.f32 %v1661, 0.0
        %v1811 = vmax.f32 %v1665, 0.0
        %v1812 = vmax.f32 %v1667, 0.0
        %v1813 = vmax.f32 %v1669, 0.0
        %v1814 = vmax.f32 %v1671, 0.0
        %v1815 = vmax.f32 %v1675, 0.0
        %v1816 = vmax.f32 %v1677, 0.0
        %v1817 = vmax.f32 %v1679, 0.0
        %v1818 = vmax.f32 %v1681, 0.0
        %v1819 = vmax.f32 %v1685, 0.0
        %v1820 = vmax.f32 %v1687, 0.0
        %v1821 = vmax.f32 %v1689, 0.0
        %v1822 = vmax.f32 %v1691, 0.0
        %v1823 = vmax.f32 %v1695, 0.0
        %v1824 = vmax.f32 %v1697, 0.0
        %v1825 = vmax.f32 %v1699, 0.0
        %v1826 = vmax.f32 %v1701, 0.0
        %v1827 = vmax.f32 %v1705, 0.0
        %v1828 = vmax.f32 %v1707, 0.0
        %v1829 = vmax.f32 %v1709, 0.0
        %v1830 = vmax.f32 %v1711, 0.0
        %v1831 = vmax.f32 %v1715, 0.0
        %v1832 = vmax.f32 %v1717, 0.0
        %v1833 = vmax.f32 %v1719, 0.0
        %v1834 = vmax.f32 %v1721, 0.0
        %v1835 = vmax.f32 %v1725, 0.0
        %v1836 = vmax.f32 %v1727, 0.0
        %v1837 = vmax.f32 %v1729, 0.0
        %v1838 = vmax.f32 %v1731, 0.0
        %v1839 = vmax.f32 %v1735, 0.0
        %v1840 = vmax.f32 %v1737, 0.0
        %v1841 = vmax.f32 %v1739, 0.0
        %v1842 = vmax.f32 %v1741, 0.0
        %v1843 = vmax.f32 %v1745, 0.0
        %v1844 = vmax.f32 %v1747, 0.0
        %v1845 = vmax.f32 %v1749, 0.0
        %v1846 = vmax.f32 %v1751, 0.0
        %v1847 = vmax.f32 %v1755, 0.0
        %v1848 = vmax.f32 %v1757, 0.0
        %v1849 = vmax.f32 %v1759, 0.0
        %v1850 = vmax.f32 %v1761, 0.0
        %v1851 = vmax.f32 %v1765, 0.0
        %v1852 = vmax.f32 %v1767, 0.0
        %v1853 = vmax.f32 %v1769, 0.0
        %v1854 = vmax.f32 %v1771, 0.0
        %v1855 = vmax.f32 %v1775, 0.0
        %v1856 = vmax.f32 %v1777, 0.0
        %v1857 = vmax.f32 %v1779, 0.0
        %v1858 = vmax.f32 %v1781, 0.0
        %v1859 = vmax.f32 %v1785, 0.0
        %v1860 = vmax.f32 %v1787, 0.0
        %v1861 = vmax.f32 %v1789, 0.0
        %v1862 = vmax.f32 %v1791, 0.0
        %v1863 = vmax.f32 %v1795, 0.0
        %v1864 = vmax.f32 %v1797, 0.0
        %v1865 = vmax.f32 %v1799, 0.0
        %v1866 = vmax.f32 %v1801, 0.0
        %v1867 = vld [vmem:[%s3] sm:$0xff]
        %v1868 = vld [vmem:[%s3 + $0x8] sm:$0xff]
        %v1869 = vld [vmem:[%s3 + $0x10] sm:$0xff]
        %v1870 = vld [vmem:[%s3 + $0x18] sm:$0xff]
        %v1871 = vld [vmem:[%s3 + $0x20] sm:$0xff]
        %v1872 = vld [vmem:[%s3 + $0x28] sm:$0xff]
        %v1873 = vld [vmem:[%s3 + $0x30] sm:$0xff]
        %v1874 = vld [vmem:[%s3 + $0x38] sm:$0xff]
        %v1875 = vld [vmem:[%s3 + $0x40] sm:$0xff]
        %v1876 = vld [vmem:[%s3 + $0x48] sm:$0xff]
        %v1877 = vld [vmem:[%s3 + $0x50] sm:$0xff]
        %v1878 = vld [vmem:[%s3 + $0x58] sm:$0xff]
        %v1879 = vld [vmem:[%s3 + $0x60] sm:$0xff]
        %v1880 = vld [vmem:[%s3 + $0x68] sm:$0xff]
        %v1881 = vld [vmem:[%s3 + $0x70] sm:$0xff]
        %v1882 = vld [vmem:[%s3 + $0x78] sm:$0xff]
        %v1883 = vld [vmem:[%s3 + $0x80] sm:$0xff]
        %v1884 = vld [vmem:[%s3 + $0x88] sm:$0xff]
        %v1885 = vld [vmem:[%s3 + $0x90] sm:$0xff]
        %v1886 = vld [vmem:[%s3 + $0x98] sm:$0xff]
        %v1887 = vld [vmem:[%s3 + $0xa0] sm:$0xff]
        %v1888 = vld [vmem:[%s3 + $0xa8] sm:$0xff]
        %v1889 = vld [vmem:[%s3 + $0xb0] sm:$0xff]
        %v1890 = vld [vmem:[%s3 + $0xb8] sm:$0xff]
        %v1891 = vld [vmem:[%s3 + $0xc0] sm:$0xff]
        %v1892 = vld [vmem:[%s3 + $0xc8] sm:$0xff]
        %v1893 = vld [vmem:[%s3 + $0xd0] sm:$0xff]
        %v1894 = vld [vmem:[%s3 + $0xd8] sm:$0xff]
        %v1895 = vpack.c.bf16 %v1805, %v1803
        %v1896 = vpack.c.bf16 %v1806, %v1804
        %v1897 = vpack.c.bf16 %v1809, %v1807
        %v1898 = vpack.c.bf16 %v1810, %v1808
        %v1899 = vpack.c.bf16 %v1813, %v1811
        %v1900 = vpack.c.bf16 %v1814, %v1812
        %v1901 = vpack.c.bf16 %v1817, %v1815
        %v1902 = vpack.c.bf16 %v1818, %v1816
        %v1903 = vpack.c.bf16 %v1821, %v1819
        %v1904 = vpack.c.bf16 %v1822, %v1820
        %v1905 = vpack.c.bf16 %v1825, %v1823
        %v1906 = vpack.c.bf16 %v1826, %v1824
        %v1907 = vpack.c.bf16 %v1829, %v1827
        %v1908 = vpack.c.bf16 %v1830, %v1828
        %v1909 = vpack.c.bf16 %v1833, %v1831
        %v1910 = vpack.c.bf16 %v1834, %v1832
        %v1911 = vpack.c.bf16 %v1837, %v1835
        %v1912 = vpack.c.bf16 %v1838, %v1836
        %v1913 = vpack.c.bf16 %v1841, %v1839
        %v1914 = vpack.c.bf16 %v1842, %v1840
        %v1915 = vpack.c.bf16 %v1845, %v1843
        %v1916 = vpack.c.bf16 %v1846, %v1844
        %v1917 = vpack.c.bf16 %v1849, %v1847
        %v1918 = vpack.c.bf16 %v1850, %v1848
        %v1919 = vpack.c.bf16 %v1853, %v1851
        %v1920 = vpack.c.bf16 %v1854, %v1852
        %v1921 = vpack.c.bf16 %v1857, %v1855
        %v1922 = vpack.c.bf16 %v1858, %v1856
        %v1923 = vpack.c.bf16 %v1861, %v1859
        %v1924 = vpack.c.bf16 %v1862, %v1860
        %v1925 = vpack.c.bf16 %v1865, %v1863
        %v1926 = vpack.c.bf16 %v1866, %v1864
        %v1955 = vunpack.c.l.b16 %v1867
        %v1956 = vunpack.c.h.b16 %v1867
        %v1957 = vunpack.c.l.b16 %v1868
        %v1958 = vunpack.c.h.b16 %v1868
        %v1959 = vunpack.c.l.b16 %v1869
        %v1960 = vunpack.c.h.b16 %v1869
        %v1961 = vunpack.c.l.b16 %v1870
        %v1962 = vunpack.c.h.b16 %v1870
        %v1963 = vunpack.c.l.b16 %v1871
        %v1964 = vunpack.c.h.b16 %v1871
        %v1965 = vunpack.c.l.b16 %v1872
        %v1966 = vunpack.c.h.b16 %v1872
        %v1967 = vunpack.c.l.b16 %v1873
        %v1968 = vunpack.c.h.b16 %v1873
        %v1969 = vunpack.c.l.b16 %v1874
        %v1970 = vunpack.c.h.b16 %v1874
        %v1971 = vunpack.c.l.b16 %v1875
        %v1972 = vunpack.c.h.b16 %v1875
        %v1973 = vunpack.c.l.b16 %v1876
        %v1974 = vunpack.c.h.b16 %v1876
        %v1975 = vunpack.c.l.b16 %v1877
        %v1976 = vunpack.c.h.b16 %v1877
        %v1977 = vunpack.c.l.b16 %v1878
        %v1978 = vunpack.c.h.b16 %v1878
        %v1979 = vunpack.c.l.b16 %v1879
        %v1980 = vunpack.c.h.b16 %v1879
        %v1981 = vunpack.c.l.b16 %v1880
        %v1982 = vunpack.c.h.b16 %v1880
        %v1983 = vunpack.c.l.b16 %v1881
        %v1984 = vunpack.c.h.b16 %v1881
        %v1985 = vunpack.c.l.b16 %v1882
        %v1986 = vunpack.c.h.b16 %v1882
        %v1987 = vunpack.c.l.b16 %v1883
        %v1988 = vunpack.c.h.b16 %v1883
        %v1989 = vunpack.c.l.b16 %v1884
        %v1990 = vunpack.c.h.b16 %v1884
        %v1991 = vunpack.c.l.b16 %v1885
        %v1992 = vunpack.c.h.b16 %v1885
        %v1993 = vunpack.c.l.b16 %v1886
        %v1994 = vunpack.c.h.b16 %v1886
        %v1995 = vunpack.c.l.b16 %v1887
        %v1996 = vunpack.c.h.b16 %v1887
        %v1997 = vunpack.c.l.b16 %v1888
        %v1998 = vunpack.c.h.b16 %v1888
        %v1999 = vunpack.c.l.b16 %v1889
        %v2000 = vunpack.c.h.b16 %v1889
        %v2001 = vunpack.c.l.b16 %v1890
        %v2002 = vunpack.c.h.b16 %v1890
        %v2003 = vunpack.c.l.b16 %v1891
        %v2004 = vunpack.c.h.b16 %v1891
        %v2005 = vunpack.c.l.b16 %v1892
        %v2006 = vunpack.c.h.b16 %v1892
        %v2007 = vunpack.c.l.b16 %v1893
        %v2008 = vunpack.c.h.b16 %v1893
        %v2009 = vunpack.c.l.b16 %v1894
        %v2010 = vunpack.c.h.b16 %v1894
        %v2011 = vpack.c.b16 %v1957, %v1955
        %v2012 = vpack.c.b16 %v1958, %v1956
        %v2013 = vpack.c.b16 %v1961, %v1959
        %v2014 = vpack.c.b16 %v1962, %v1960
        %v2015 = vpack.c.b16 %v1965, %v1963
        %v2016 = vpack.c.b16 %v1966, %v1964
        %v2017 = vpack.c.b16 %v1969, %v1967
        %v2018 = vpack.c.b16 %v1970, %v1968
        %v2019 = vpack.c.b16 %v1973, %v1971
        %v2020 = vpack.c.b16 %v1974, %v1972
        %v2021 = vpack.c.b16 %v1977, %v1975
        %v2022 = vpack.c.b16 %v1978, %v1976
        %v2023 = vpack.c.b16 %v1981, %v1979
        %v2024 = vpack.c.b16 %v1982, %v1980
        %v2025 = vpack.c.b16 %v1985, %v1983
        %v2026 = vpack.c.b16 %v1986, %v1984
        %v2027 = vpack.c.b16 %v1989, %v1987
        %v2028 = vpack.c.b16 %v1990, %v1988
        %v2029 = vpack.c.b16 %v1993, %v1991
        %v2030 = vpack.c.b16 %v1994, %v1992
        %v2031 = vpack.c.b16 %v1997, %v1995
        %v2032 = vpack.c.b16 %v1998, %v1996
        %v2033 = vpack.c.b16 %v2001, %v1999
        %v2034 = vpack.c.b16 %v2002, %v2000
        %v2035 = vpack.c.b16 %v2005, %v2003
        %v2036 = vpack.c.b16 %v2006, %v2004
        %v2037 = vpack.c.b16 %v2009, %v2007
        %v2038 = vpack.c.b16 %v2010, %v2008
        %vm2053 = vcmask 1014784
        %v2055 = vsel %vm2053, %v2012, 0
        %v2058 = vsel %vm2053, %v2014, 0
        %v2061 = vsel %vm2053, %v2016, 0
        %v2064 = vsel %vm2053, %v2018, 0
        %v2067 = vsel %vm2053, %v2020, 0
        %v2070 = vsel %vm2053, %v2022, 0
        %v2073 = vsel %vm2053, %v2024, 0
        %v2076 = vsel %vm2053, %v2026, 0
        %v2079 = vsel %vm2053, %v2028, 0
        %v2082 = vsel %vm2053, %v2030, 0
        %v2085 = vsel %vm2053, %v2032, 0
        %v2088 = vsel %vm2053, %v2034, 0
        %v2091 = vsel %vm2053, %v2036, 0
        %v2094 = vsel %vm2053, %v2038, 0
        %v2097 = vsel %vm883, %v1925, 0
        %v2100 = vsel %vm883, %v1926, 0
        %2102 = vmatprep.subr.bf16.mxu0 %v1896
        %2103 = vmatpush1.bf16.msra.mxu0 %v1895
        %2104 = vmatprep.subr.bf16.mxu0 %v1898
        %2105 = vmatpush1.bf16.msra.mxu0 %v1897
        %2106 = vmatprep.subr.bf16.mxu0 %v1900
        %2107 = vmatpush1.bf16.msra.mxu0 %v1899
        %2108 = vmatprep.subr.bf16.mxu0 %v1902
        %2109 = vmatpush1.bf16.msra.mxu0 %v1901
        %2110 = vmatprep.subr.bf16.mxu0 %v1904
        %2111 = vmatpush1.bf16.msra.mxu0 %v1903
        %2112 = vmatprep.subr.bf16.mxu0 %v1906
        %2113 = vmatpush1.bf16.msra.mxu0 %v1905
        %2114 = vmatprep.subr.bf16.mxu0 %v1908
        %2115 = vmatpush1.bf16.msra.mxu0 %v1907
        %2116 = vmatprep.subr.bf16.mxu0 %v1910
        %2117 = vmatpush1.bf16.msra.mxu0 %v1909
        %2118 = vmatprep.subr.bf16.mxu0 %v1912
        %2119 = vmatpush1.bf16.msra.mxu0 %v1911
        %2120 = vmatprep.subr.bf16.mxu0 %v1914
        %2121 = vmatpush1.bf16.msra.mxu0 %v1913
        %2122 = vmatprep.subr.bf16.mxu0 %v1916
        %2123 = vmatpush1.bf16.msra.mxu0 %v1915
        %2124 = vmatprep.subr.bf16.mxu0 %v1918
        %2125 = vmatpush1.bf16.msra.mxu0 %v1917
        %2126 = vmatprep.subr.bf16.mxu0 %v1920
        %2127 = vmatpush1.bf16.msra.mxu0 %v1919
        %2128 = vmatprep.subr.bf16.mxu0 %v1922
        %2129 = vmatpush1.bf16.msra.mxu0 %v1921
        %2130 = vmatprep.subr.bf16.mxu0 %v1924
        %2131 = vmatpush1.bf16.msra.mxu0 %v1923
        %2132 = vmatprep.subr.bf16.mxu0 %v2100
        %2133 = vmatpush1.bf16.msra.mxu0 %v2097
        %2134 = vmatprep.mubr.bf16.mxu0 %v2055
        %2135 = vmatmul.mubr.bf16.gmra.mrb[0].mxu0 %v2011
        %v2136 = vpop.f32.mrb[0].mxu0
        %v2137 = vadd.f32 0.0, %v2136
        %v2138 = vpop.f32.mrb[0].mxu0
        %v2139 = vadd.f32 0.0, %v2138
        %v2140 = vpop.f32.mrb[0].mxu0
        %v2141 = vadd.f32 0.0, %v2140
        %v2142 = vpop.f32.mrb[0].mxu0
        %v2143 = vadd.f32 0.0, %v2142
        %2144 = vmatprep.mubr.bf16.mxu0 %v2058
        %2145 = vmatmul.mubr.bf16.gmra.mrb[0].mxu0 %v2013
        %v2146 = vpop.f32.mrb[0].mxu0
        %v2147 = vadd.f32 0.0, %v2146
        %v2148 = vpop.f32.mrb[0].mxu0
        %v2149 = vadd.f32 0.0, %v2148
        %v2150 = vpop.f32.mrb[0].mxu0
        %v2151 = vadd.f32 0.0, %v2150
        %v2152 = vpop.f32.mrb[0].mxu0
        %v2153 = vadd.f32 0.0, %v2152
        %2154 = vmatprep.mubr.bf16.mxu0 %v2061
        %2155 = vmatmul.mubr.bf16.gmra.mrb[0].mxu0 %v2015
        %v2156 = vpop.f32.mrb[0].mxu0
        %v2157 = vadd.f32 0.0, %v2156
        %v2158 = vpop.f32.mrb[0].mxu0
        %v2159 = vadd.f32 0.0, %v2158
        %v2160 = vpop.f32.mrb[0].mxu0
        %v2161 = vadd.f32 0.0, %v2160
        %v2162 = vpop.f32.mrb[0].mxu0
        %v2163 = vadd.f32 0.0, %v2162
        %2164 = vmatprep.mubr.bf16.mxu0 %v2064
        %2165 = vmatmul.mubr.bf16.gmra.mrb[0].mxu0 %v2017
        %v2166 = vpop.f32.mrb[0].mxu0
        %v2167 = vadd.f32 0.0, %v2166
        %v2168 = vpop.f32.mrb[0].mxu0
        %v2169 = vadd.f32 0.0, %v2168
        %v2170 = vpop.f32.mrb[0].mxu0
        %v2171 = vadd.f32 0.0, %v2170
        %v2172 = vpop.f32.mrb[0].mxu0
        %v2173 = vadd.f32 0.0, %v2172
        %2174 = vmatprep.mubr.bf16.mxu0 %v2067
        %2175 = vmatmul.mubr.bf16.gmra.mrb[0].mxu0 %v2019
        %v2176 = vpop.f32.mrb[0].mxu0
        %v2177 = vadd.f32 0.0, %v2176
        %v2178 = vpop.f32.mrb[0].mxu0
        %v2179 = vadd.f32 0.0, %v2178
        %v2180 = vpop.f32.mrb[0].mxu0
        %v2181 = vadd.f32 0.0, %v2180
        %v2182 = vpop.f32.mrb[0].mxu0
        %v2183 = vadd.f32 0.0, %v2182
        %2184 = vmatprep.mubr.bf16.mxu0 %v2070
        %2185 = vmatmul.mubr.bf16.gmra.mrb[0].mxu0 %v2021
        %v2186 = vpop.f32.mrb[0].mxu0
        %v2187 = vadd.f32 0.0, %v2186
        %v2188 = vpop.f32.mrb[0].mxu0
        %v2189 = vadd.f32 0.0, %v2188
        %v2190 = vpop.f32.mrb[0].mxu0
        %v2191 = vadd.f32 0.0, %v2190
        %v2192 = vpop.f32.mrb[0].mxu0
        %v2193 = vadd.f32 0.0, %v2192
        %2194 = vmatprep.mubr.bf16.mxu0 %v2073
        %2195 = vmatmul.mubr.bf16.gmra.mrb[0].mxu0 %v2023
        %v2196 = vpop.f32.mrb[0].mxu0
        %v2197 = vadd.f32 0.0, %v2196
        %v2198 = vpop.f32.mrb[0].mxu0
        %v2199 = vadd.f32 0.0, %v2198
        %v2200 = vpop.f32.mrb[0].mxu0
        %v2201 = vadd.f32 0.0, %v2200
        %v2202 = vpop.f32.mrb[0].mxu0
        %v2203 = vadd.f32 0.0, %v2202
        %2204 = vmatprep.mubr.bf16.mxu0 %v2076
        %2205 = vmatmul.mubr.bf16.gmra.mrb[0].mxu0 %v2025
        %v2206 = vpop.f32.mrb[0].mxu0
        %v2207 = vadd.f32 0.0, %v2206
        %v2208 = vpop.f32.mrb[0].mxu0
        %v2209 = vadd.f32 0.0, %v2208
        %v2210 = vpop.f32.mrb[0].mxu0
        %v2211 = vadd.f32 0.0, %v2210
        %v2212 = vpop.f32.mrb[0].mxu0
        %v2213 = vadd.f32 0.0, %v2212
        %2214 = vmatprep.mubr.bf16.mxu0 %v2079
        %2215 = vmatmul.mubr.bf16.gmra.mrb[0].mxu0 %v2027
        %v2216 = vpop.f32.mrb[0].mxu0
        %v2217 = vadd.f32 0.0, %v2216
        %v2218 = vpop.f32.mrb[0].mxu0
        %v2219 = vadd.f32 0.0, %v2218
        %v2220 = vpop.f32.mrb[0].mxu0
        %v2221 = vadd.f32 0.0, %v2220
        %v2222 = vpop.f32.mrb[0].mxu0
        %v2223 = vadd.f32 0.0, %v2222
        %2224 = vmatprep.mubr.bf16.mxu0 %v2082
        %2225 = vmatmul.mubr.bf16.gmra.mrb[0].mxu0 %v2029
        %v2226 = vpop.f32.mrb[0].mxu0
        %v2227 = vadd.f32 0.0, %v2226
        %v2228 = vpop.f32.mrb[0].mxu0
        %v2229 = vadd.f32 0.0, %v2228
        %v2230 = vpop.f32.mrb[0].mxu0
        %v2231 = vadd.f32 0.0, %v2230
        %v2232 = vpop.f32.mrb[0].mxu0
        %v2233 = vadd.f32 0.0, %v2232
        %2234 = vmatprep.mubr.bf16.mxu0 %v2085
        %2235 = vmatmul.mubr.bf16.gmra.mrb[0].mxu0 %v2031
        %v2236 = vpop.f32.mrb[0].mxu0
        %v2237 = vadd.f32 0.0, %v2236
        %v2238 = vpop.f32.mrb[0].mxu0
        %v2239 = vadd.f32 0.0, %v2238
        %v2240 = vpop.f32.mrb[0].mxu0
        %v2241 = vadd.f32 0.0, %v2240
        %v2242 = vpop.f32.mrb[0].mxu0
        %v2243 = vadd.f32 0.0, %v2242
        %2244 = vmatprep.mubr.bf16.mxu0 %v2088
        %2245 = vmatmul.mubr.bf16.gmra.mrb[0].mxu0 %v2033
        %v2246 = vpop.f32.mrb[0].mxu0
        %v2247 = vadd.f32 0.0, %v2246
        %v2248 = vpop.f32.mrb[0].mxu0
        %v2249 = vadd.f32 0.0, %v2248
        %v2250 = vpop.f32.mrb[0].mxu0
        %v2251 = vadd.f32 0.0, %v2250
        %v2252 = vpop.f32.mrb[0].mxu0
        %v2253 = vadd.f32 0.0, %v2252
        %2254 = vmatprep.mubr.bf16.mxu0 %v2091
        %2255 = vmatmul.mubr.bf16.gmra.mrb[0].mxu0 %v2035
        %v2256 = vpop.f32.mrb[0].mxu0
        %v2257 = vadd.f32 0.0, %v2256
        %v2258 = vpop.f32.mrb[0].mxu0
        %v2259 = vadd.f32 0.0, %v2258
        %v2260 = vpop.f32.mrb[0].mxu0
        %v2261 = vadd.f32 0.0, %v2260
        %v2262 = vpop.f32.mrb[0].mxu0
        %v2263 = vadd.f32 0.0, %v2262
        %2264 = vmatprep.mubr.bf16.mxu0 %v2094
        %2265 = vmatmul.mubr.bf16.gmra.mrb[0].mxu0 %v2037
        %v2266 = vpop.f32.mrb[0].mxu0
        %v2267 = vadd.f32 0.0, %v2266
        %v2268 = vpop.f32.mrb[0].mxu0
        %v2269 = vadd.f32 0.0, %v2268
        %v2270 = vpop.f32.mrb[0].mxu0
        %v2271 = vadd.f32 0.0, %v2270
        %v2272 = vpop.f32.mrb[0].mxu0
        %v2273 = vadd.f32 0.0, %v2272
        %2274 = vdwg.mxu0
        %v2275 = vmax.f32 %v2137, %v2207
        %v2276 = vmax.f32 %v2139, %v2209
        %v2277 = vmax.f32 %v2141, %v2211
        %v2278 = vmax.f32 %v2143, %v2213
        %v2279 = vmax.f32 %v2147, %v2217
        %v2280 = vmax.f32 %v2149, %v2219
        %v2281 = vmax.f32 %v2151, %v2221
        %v2282 = vmax.f32 %v2153, %v2223
        %v2283 = vmax.f32 %v2157, %v2227
        %v2284 = vmax.f32 %v2159, %v2229
        %v2285 = vmax.f32 %v2161, %v2231
        %v2286 = vmax.f32 %v2163, %v2233
        %v2287 = vmax.f32 %v2167, %v2237
        %v2288 = vmax.f32 %v2169, %v2239
        %v2289 = vmax.f32 %v2171, %v2241
        %v2290 = vmax.f32 %v2173, %v2243
        %v2291 = vmax.f32 %v2177, %v2247
        %v2292 = vmax.f32 %v2179, %v2249
        %v2293 = vmax.f32 %v2181, %v2251
        %v2294 = vmax.f32 %v2183, %v2253
        %v2295 = vmax.f32 %v2187, %v2257
        %v2296 = vmax.f32 %v2189, %v2259
        %v2297 = vmax.f32 %v2191, %v2261
        %v2298 = vmax.f32 %v2193, %v2263
        %v2299 = vmax.f32 %v2197, %v2267
        %v2300 = vmax.f32 %v2199, %v2269
        %v2301 = vmax.f32 %v2201, %v2271
        %v2302 = vmax.f32 %v2203, %v2273
        %v2303 = vpack.c.bf16 %v2277, %v2275
        %v2304 = vpack.c.bf16 %v2278, %v2276
        %v2305 = vpack.c.bf16 %v2281, %v2279
        %v2306 = vpack.c.bf16 %v2282, %v2280
        %v2307 = vpack.c.bf16 %v2285, %v2283
        %v2308 = vpack.c.bf16 %v2286, %v2284
        %v2309 = vpack.c.bf16 %v2289, %v2287
        %v2310 = vpack.c.bf16 %v2290, %v2288
        %v2311 = vpack.c.bf16 %v2293, %v2291
        %v2312 = vpack.c.bf16 %v2294, %v2292
        %v2313 = vpack.c.bf16 %v2297, %v2295
        %v2314 = vpack.c.bf16 %v2298, %v2296
        %v2315 = vpack.c.bf16 %v2301, %v2299
        %v2316 = vpack.c.bf16 %v2302, %v2300
        %v2317 = vld [vmem:[%s4] sm:$0xff]
        %v2318 = vld [vmem:[%s4 + $0x8] sm:$0xff]
        %v2319 = vld [vmem:[%s4 + $0x10] sm:$0xff]
        %v2320 = vld [vmem:[%s4 + $0x18] sm:$0xff]
        %v2321 = vld [vmem:[%s4 + $0x20] sm:$0xff]
        %v2322 = vld [vmem:[%s4 + $0x28] sm:$0xff]
        %v2323 = vld [vmem:[%s4 + $0x30] sm:$0xff]
        %v2324 = vld [vmem:[%s4 + $0x38] sm:$0xff]
        %v2325 = vld [vmem:[%s4 + $0x40] sm:$0xff]
        %v2326 = vld [vmem:[%s4 + $0x48] sm:$0xff]
        %v2327 = vld [vmem:[%s4 + $0x50] sm:$0xff]
        %v2328 = vld [vmem:[%s4 + $0x58] sm:$0xff]
        %v2329 = vld [vmem:[%s4 + $0x60] sm:$0xff]
        %v2330 = vld [vmem:[%s4 + $0x68] sm:$0xff]
        %v2331 = vld [vmem:[%s4 + $0x70] sm:$0xff]
        %v2332 = vld [vmem:[%s4 + $0x78] sm:$0xff]
        %v2333 = vld [vmem:[%s4 + $0x80] sm:$0xff]
        %v2334 = vld [vmem:[%s4 + $0x88] sm:$0xff]
        %v2335 = vld [vmem:[%s4 + $0x90] sm:$0xff]
        %v2336 = vld [vmem:[%s4 + $0x98] sm:$0xff]
        %v2337 = vld [vmem:[%s4 + $0xa0] sm:$0xff]
        %v2359 = vunpack.c.l.b16 %v2317
        %v2360 = vunpack.c.h.b16 %v2317
        %v2361 = vunpack.c.l.b16 %v2318
        %v2362 = vunpack.c.h.b16 %v2318
        %v2363 = vunpack.c.l.b16 %v2319
        %v2364 = vunpack.c.h.b16 %v2319
        %v2365 = vunpack.c.l.b16 %v2320
        %v2366 = vunpack.c.h.b16 %v2320
        %v2367 = vunpack.c.l.b16 %v2321
        %v2368 = vunpack.c.h.b16 %v2321
        %v2369 = vunpack.c.l.b16 %v2322
        %v2370 = vunpack.c.h.b16 %v2322
        %v2371 = vunpack.c.l.b16 %v2323
        %v2372 = vunpack.c.h.b16 %v2323
        %v2373 = vunpack.c.l.b16 %v2324
        %v2374 = vunpack.c.h.b16 %v2324
        %v2375 = vunpack.c.l.b16 %v2325
        %v2376 = vunpack.c.h.b16 %v2325
        %v2377 = vunpack.c.l.b16 %v2326
        %v2378 = vunpack.c.h.b16 %v2326
        %v2379 = vunpack.c.l.b16 %v2327
        %v2380 = vunpack.c.h.b16 %v2327
        %v2381 = vunpack.c.l.b16 %v2328
        %v2382 = vunpack.c.h.b16 %v2328
        %v2383 = vunpack.c.l.b16 %v2329
        %v2384 = vunpack.c.h.b16 %v2329
        %v2385 = vunpack.c.l.b16 %v2330
        %v2386 = vunpack.c.h.b16 %v2330
        %v2387 = vunpack.c.l.b16 %v2331
        %v2388 = vunpack.c.h.b16 %v2331
        %v2389 = vunpack.c.l.b16 %v2332
        %v2390 = vunpack.c.h.b16 %v2332
        %v2391 = vunpack.c.l.b16 %v2333
        %v2392 = vunpack.c.h.b16 %v2333
        %v2393 = vunpack.c.l.b16 %v2334
        %v2394 = vunpack.c.h.b16 %v2334
        %v2395 = vunpack.c.l.b16 %v2335
        %v2396 = vunpack.c.h.b16 %v2335
        %v2397 = vunpack.c.l.b16 %v2336
        %v2398 = vunpack.c.h.b16 %v2336
        %v2399 = vunpack.c.l.b16 %v2337
        %v2400 = vunpack.c.h.b16 %v2337
        %v2401 = vpack.c.b16 %v2361, %v2359
        %v2402 = vpack.c.b16 %v2362, %v2360
        %v2403 = vpack.c.b16 %v2365, %v2363
        %v2404 = vpack.c.b16 %v2366, %v2364
        %v2405 = vpack.c.b16 %v2369, %v2367
        %v2406 = vpack.c.b16 %v2370, %v2368
        %v2407 = vpack.c.b16 %v2373, %v2371
        %v2408 = vpack.c.b16 %v2374, %v2372
        %v2409 = vpack.c.b16 %v2377, %v2375
        %v2410 = vpack.c.b16 %v2378, %v2376
        %v2411 = vpack.c.b16 %v2381, %v2379
        %v2412 = vpack.c.b16 %v2382, %v2380
        %v2413 = vpack.c.b16 %v2385, %v2383
        %v2414 = vpack.c.b16 %v2386, %v2384
        %v2415 = vpack.c.b16 %v2389, %v2387
        %v2416 = vpack.c.b16 %v2390, %v2388
        %v2417 = vpack.c.b16 %v2393, %v2391
        %v2418 = vpack.c.b16 %v2394, %v2392
        %v2419 = vpack.c.b16 %v2397, %v2395
        %v2420 = vpack.c.b16 %v2398, %v2396
        %v2421 = vpack.c.b16 %v2399, %v2399
        %v2422 = vpack.c.b16 %v2400, %v2400
        %vm2443 = vcmask 326656
        %v2445 = vsel %vm2443, %v2304, 0
        %v2448 = vsel %vm2443, %v2306, 0
        %v2451 = vsel %vm2443, %v2308, 0
        %v2454 = vsel %vm2443, %v2310, 0
        %v2457 = vsel %vm2443, %v2312, 0
        %v2460 = vsel %vm2443, %v2314, 0
        %v2463 = vsel %vm2443, %v2316, 0
        %v2466 = vsel %vm1203, %v2421, 0
        %v2469 = vsel %vm1203, %v2422, 0
        %2471 = vmatprep.subr.bf16.mxu0 %v2402
        %2472 = vmatpush1.bf16.msra.mxu0 %v2401
        %2473 = vmatprep.subr.bf16.mxu0 %v2404
        %2474 = vmatpush1.bf16.msra.mxu0 %v2403
        %2475 = vmatprep.subr.bf16.mxu0 %v2406
        %2476 = vmatpush1.bf16.msra.mxu0 %v2405
        %2477 = vmatprep.subr.bf16.mxu0 %v2408
        %2478 = vmatpush1.bf16.msra.mxu0 %v2407
        %2479 = vmatprep.subr.bf16.mxu0 %v2410
        %2480 = vmatpush1.bf16.msra.mxu0 %v2409
        %2481 = vmatprep.subr.bf16.mxu0 %v2412
        %2482 = vmatpush1.bf16.msra.mxu0 %v2411
        %2483 = vmatprep.subr.bf16.mxu0 %v2414
        %2484 = vmatpush1.bf16.msra.mxu0 %v2413
        %2485 = vmatprep.subr.bf16.mxu0 %v2416
        %2486 = vmatpush1.bf16.msra.mxu0 %v2415
        %2487 = vmatprep.subr.bf16.mxu0 %v2418
        %2488 = vmatpush1.bf16.msra.mxu0 %v2417
        %2489 = vmatprep.subr.bf16.mxu0 %v2420
        %2490 = vmatpush1.bf16.msra.mxu0 %v2419
        %2491 = vmatprep.subr.bf16.mxu0 %v2469
        %2492 = vmatpush1.bf16.msra.mxu0 %v2466
        %2493 = vmatprep.subr.bf16.mxu0 0
        %2494 = vmatpush1.bf16.msra.mxu0 0
        %2495 = vmatprep.subr.bf16.mxu0 0
        %2496 = vmatpush1.bf16.msra.mxu0 0
        %2497 = vmatprep.subr.bf16.mxu0 0
        %2498 = vmatpush1.bf16.msra.mxu0 0
        %2499 = vmatprep.subr.bf16.mxu0 0
        %2500 = vmatpush1.bf16.msra.mxu0 0
        %2501 = vmatprep.subr.bf16.mxu0 0
        %2502 = vmatpush1.bf16.msra.mxu0 0
        %2503 = vmatprep.mubr.bf16.mxu0 %v2445
        %2504 = vmatmul.mubr.bf16.gmra.mrb[0].mxu0 %v2303
        %v2505 = vpop.f32.mrb[0].mxu0
        %v2506 = vadd.f32 0.0, %v2505
        %v2507 = vpop.f32.mrb[0].mxu0
        %v2508 = vadd.f32 0.0, %v2507
        %v2509 = vpop.f32.mrb[0].mxu0
        %v2510 = vadd.f32 0.0, %v2509
        %v2511 = vpop.f32.mrb[0].mxu0
        %v2512 = vadd.f32 0.0, %v2511
        %2513 = vmatprep.mubr.bf16.mxu0 %v2448
        %2514 = vmatmul.mubr.bf16.gmra.mrb[0].mxu0 %v2305
        %v2515 = vpop.f32.mrb[0].mxu0
        %v2516 = vadd.f32 0.0, %v2515
        %v2517 = vpop.f32.mrb[0].mxu0
        %v2518 = vadd.f32 0.0, %v2517
        %v2519 = vpop.f32.mrb[0].mxu0
        %v2520 = vadd.f32 0.0, %v2519
        %v2521 = vpop.f32.mrb[0].mxu0
        %v2522 = vadd.f32 0.0, %v2521
        %2523 = vmatprep.mubr.bf16.mxu0 %v2451
        %2524 = vmatmul.mubr.bf16.gmra.mrb[0].mxu0 %v2307
        %v2525 = vpop.f32.mrb[0].mxu0
        %v2526 = vadd.f32 0.0, %v2525
        %v2527 = vpop.f32.mrb[0].mxu0
        %v2528 = vadd.f32 0.0, %v2527
        %v2529 = vpop.f32.mrb[0].mxu0
        %v2530 = vadd.f32 0.0, %v2529
        %v2531 = vpop.f32.mrb[0].mxu0
        %v2532 = vadd.f32 0.0, %v2531
        %2533 = vmatprep.mubr.bf16.mxu0 %v2454
        %2534 = vmatmul.mubr.bf16.gmra.mrb[0].mxu0 %v2309
        %v2535 = vpop.f32.mrb[0].mxu0
        %v2536 = vadd.f32 0.0, %v2535
        %v2537 = vpop.f32.mrb[0].mxu0
        %v2538 = vadd.f32 0.0, %v2537
        %v2539 = vpop.f32.mrb[0].mxu0
        %v2540 = vadd.f32 0.0, %v2539
        %v2541 = vpop.f32.mrb[0].mxu0
        %v2542 = vadd.f32 0.0, %v2541
        %2543 = vmatprep.mubr.bf16.mxu0 %v2457
        %2544 = vmatmul.mubr.bf16.gmra.mrb[0].mxu0 %v2311
        %v2545 = vpop.f32.mrb[0].mxu0
        %v2546 = vadd.f32 0.0, %v2545
        %v2547 = vpop.f32.mrb[0].mxu0
        %v2548 = vadd.f32 0.0, %v2547
        %v2549 = vpop.f32.mrb[0].mxu0
        %v2550 = vadd.f32 0.0, %v2549
        %v2551 = vpop.f32.mrb[0].mxu0
        %v2552 = vadd.f32 0.0, %v2551
        %2553 = vmatprep.mubr.bf16.mxu0 %v2460
        %2554 = vmatmul.mubr.bf16.gmra.mrb[0].mxu0 %v2313
        %v2555 = vpop.f32.mrb[0].mxu0
        %v2556 = vadd.f32 0.0, %v2555
        %v2557 = vpop.f32.mrb[0].mxu0
        %v2558 = vadd.f32 0.0, %v2557
        %v2559 = vpop.f32.mrb[0].mxu0
        %v2560 = vadd.f32 0.0, %v2559
        %v2561 = vpop.f32.mrb[0].mxu0
        %v2562 = vadd.f32 0.0, %v2561
        %2563 = vmatprep.mubr.bf16.mxu0 %v2463
        %2564 = vmatmul.mubr.bf16.gmra.mrb[0].mxu0 %v2315
        %v2565 = vpop.f32.mrb[0].mxu0
        %v2566 = vadd.f32 0.0, %v2565
        %v2567 = vpop.f32.mrb[0].mxu0
        %v2568 = vadd.f32 0.0, %v2567
        %v2569 = vpop.f32.mrb[0].mxu0
        %v2570 = vadd.f32 0.0, %v2569
        %v2571 = vpop.f32.mrb[0].mxu0
        %v2572 = vadd.f32 0.0, %v2571
        %2573 = vdwg.mxu0
        %2602 = vrot.lane.b32.xlu0 %v2506, 44
        %v2603 = vpop.permute.xlu0 %2602
        %2604 = vrot.lane.b32.xlu0 %v2508, 44
        %v2605 = vpop.permute.xlu0 %2604
        %2606 = vrot.lane.b32.xlu0 %v2510, 44
        %v2607 = vpop.permute.xlu0 %2606
        %2608 = vrot.lane.b32.xlu0 %v2512, 44
        %v2609 = vpop.permute.xlu0 %2608
        %2610 = vrot.lane.b32.xlu0 %v2516, 44
        %v2611 = vpop.permute.xlu0 %2610
        %2612 = vrot.lane.b32.xlu0 %v2518, 44
        %v2613 = vpop.permute.xlu0 %2612
        %2614 = vrot.lane.b32.xlu0 %v2520, 44
        %v2615 = vpop.permute.xlu0 %2614
        %2616 = vrot.lane.b32.xlu0 %v2522, 44
        %v2617 = vpop.permute.xlu0 %2616
        %2618 = vrot.lane.b32.xlu0 %v2526, 44
        %v2619 = vpop.permute.xlu0 %2618
        %2620 = vrot.lane.b32.xlu0 %v2528, 44
        %v2621 = vpop.permute.xlu0 %2620
        %2622 = vrot.lane.b32.xlu0 %v2530, 44
        %v2623 = vpop.permute.xlu0 %2622
        %2624 = vrot.lane.b32.xlu0 %v2532, 44
        %v2625 = vpop.permute.xlu0 %2624
        %2626 = vrot.lane.b32.xlu0 %v2536, 44
        %v2627 = vpop.permute.xlu0 %2626
        %2628 = vrot.lane.b32.xlu0 %v2538, 44
        %v2629 = vpop.permute.xlu0 %2628
        %2630 = vrot.lane.b32.xlu0 %v2540, 44
        %v2631 = vpop.permute.xlu0 %2630
        %2632 = vrot.lane.b32.xlu0 %v2542, 44
        %v2633 = vpop.permute.xlu0 %2632
        %2634 = vrot.lane.b32.xlu0 %v2546, 44
        %v2635 = vpop.permute.xlu0 %2634
        %2636 = vrot.lane.b32.xlu0 %v2548, 44
        %v2637 = vpop.permute.xlu0 %2636
        %2638 = vrot.lane.b32.xlu0 %v2550, 44
        %v2639 = vpop.permute.xlu0 %2638
        %2640 = vrot.lane.b32.xlu0 %v2552, 44
        %v2641 = vpop.permute.xlu0 %2640
        %2642 = vrot.lane.b32.xlu0 %v2556, 44
        %v2643 = vpop.permute.xlu0 %2642
        %2644 = vrot.lane.b32.xlu0 %v2558, 44
        %v2645 = vpop.permute.xlu0 %2644
        %2646 = vrot.lane.b32.xlu0 %v2560, 44
        %v2647 = vpop.permute.xlu0 %2646
        %2648 = vrot.lane.b32.xlu0 %v2562, 44
        %v2649 = vpop.permute.xlu0 %2648
        %2650 = vrot.lane.b32.xlu0 %v2566, 44
        %v2651 = vpop.permute.xlu0 %2650
        %2652 = vrot.lane.b32.xlu0 %v2568, 44
        %v2653 = vpop.permute.xlu0 %2652
        %2654 = vrot.lane.b32.xlu0 %v2570, 44
        %v2655 = vpop.permute.xlu0 %2654
        %2656 = vrot.lane.b32.xlu0 %v2572, 44
        %v2657 = vpop.permute.xlu0 %2656
        %vm2658 = vcmask 359424
        %v2659 = vsel %vm2658, %v2603, %v2605
        %v2660 = vsel %vm2658, %v2607, %v2609
        %v2661 = vsel %vm2658, %v2611, %v2613
        %v2662 = vsel %vm2658, %v2615, %v2617
        %v2663 = vsel %vm2658, %v2619, %v2621
        %v2664 = vsel %vm2658, %v2623, %v2625
        %v2665 = vsel %vm2658, %v2627, %v2629
        %v2666 = vsel %vm2658, %v2631, %v2633
        %v2667 = vsel %vm2658, %v2635, %v2637
        %v2668 = vsel %vm2658, %v2639, %v2641
        %v2669 = vsel %vm2658, %v2643, %v2645
        %v2670 = vsel %vm2658, %v2647, %v2649
        %v2671 = vsel %vm2658, %v2651, %v2653
        %v2672 = vsel %vm2658, %v2655, %v2657
        %v2687 = vmax.f32 %v2506, %v2659
        %v2688 = vmax.f32 %v2510, %v2660
        %v2689 = vmax.f32 %v2516, %v2661
        %v2690 = vmax.f32 %v2520, %v2662
        %v2691 = vmax.f32 %v2526, %v2663
        %v2692 = vmax.f32 %v2530, %v2664
        %v2693 = vmax.f32 %v2536, %v2665
        %v2694 = vmax.f32 %v2540, %v2666
        %v2695 = vmax.f32 %v2546, %v2667
        %v2696 = vmax.f32 %v2550, %v2668
        %v2697 = vmax.f32 %v2556, %v2669
        %v2698 = vmax.f32 %v2560, %v2670
        %v2699 = vmax.f32 %v2566, %v2671
        %v2700 = vmax.f32 %v2570, %v2672
        %v2715 = vrot.slane %v2687, 1
        %v2716 = vrot.slane %v2688, 1
        %v2717 = vsel %vm723, %v2715, %v2716
        %v2718 = vrot.slane %v2689, 1
        %v2719 = vsel %vm723, %v2716, %v2718
        %v2720 = vrot.slane %v2690, 1
        %v2721 = vsel %vm723, %v2718, %v2720
        %v2722 = vrot.slane %v2691, 1
        %v2723 = vsel %vm723, %v2720, %v2722
        %v2724 = vrot.slane %v2692, 1
        %v2725 = vsel %vm723, %v2722, %v2724
        %v2726 = vrot.slane %v2693, 1
        %v2727 = vsel %vm723, %v2724, %v2726
        %v2728 = vrot.slane %v2694, 1
        %v2729 = vsel %vm723, %v2726, %v2728
        %v2730 = vrot.slane %v2695, 1
        %v2731 = vsel %vm723, %v2728, %v2730
        %v2732 = vrot.slane %v2696, 1
        %v2733 = vsel %vm723, %v2730, %v2732
        %v2734 = vrot.slane %v2697, 1
        %v2735 = vsel %vm723, %v2732, %v2734
        %v2736 = vrot.slane %v2698, 1
        %v2737 = vsel %vm723, %v2734, %v2736
        %v2738 = vrot.slane %v2699, 1
        %v2739 = vsel %vm723, %v2736, %v2738
        %v2740 = vrot.slane %v2700, 1
        %v2741 = vsel %vm723, %v2738, %v2740
        %2742 = vrot.lane.b32.xlu0 %v2717, 84
        %v2743 = vpop.permute.xlu0 %2742
        %2744 = vrot.lane.b32.xlu0 %v2719, 84
        %v2745 = vpop.permute.xlu0 %2744
        %2746 = vrot.lane.b32.xlu0 %v2721, 84
        %v2747 = vpop.permute.xlu0 %2746
        %2748 = vrot.lane.b32.xlu0 %v2723, 84
        %v2749 = vpop.permute.xlu0 %2748
        %2750 = vrot.lane.b32.xlu0 %v2725, 84
        %v2751 = vpop.permute.xlu0 %2750
        %2752 = vrot.lane.b32.xlu0 %v2727, 84
        %v2753 = vpop.permute.xlu0 %2752
        %2754 = vrot.lane.b32.xlu0 %v2729, 84
        %v2755 = vpop.permute.xlu0 %2754
        %2756 = vrot.lane.b32.xlu0 %v2731, 84
        %v2757 = vpop.permute.xlu0 %2756
        %2758 = vrot.lane.b32.xlu0 %v2733, 84
        %v2759 = vpop.permute.xlu0 %2758
        %2760 = vrot.lane.b32.xlu0 %v2735, 84
        %v2761 = vpop.permute.xlu0 %2760
        %2762 = vrot.lane.b32.xlu0 %v2737, 84
        %v2763 = vpop.permute.xlu0 %2762
        %2764 = vrot.lane.b32.xlu0 %v2739, 84
        %v2765 = vpop.permute.xlu0 %2764
        %2766 = vrot.lane.b32.xlu0 %v2741, 84
        %v2767 = vpop.permute.xlu0 %2766
        %2768 = vrot.lane.b32.xlu0 %v2740, 84
        %v2769 = vpop.permute.xlu0 %2768
        %v2784 = vrot.slane %v2687, 2
        %v2785 = vrot.slane %v2688, 2
        %v2786 = vsel %vm883, %v2784, %v2785
        %v2787 = vrot.slane %v2689, 2
        %v2788 = vsel %vm883, %v2785, %v2787
        %v2789 = vrot.slane %v2690, 2
        %v2790 = vsel %vm883, %v2787, %v2789
        %v2791 = vrot.slane %v2691, 2
        %v2792 = vsel %vm883, %v2789, %v2791
        %v2793 = vrot.slane %v2692, 2
        %v2794 = vsel %vm883, %v2791, %v2793
        %v2795 = vrot.slane %v2693, 2
        %v2796 = vsel %vm883, %v2793, %v2795
        %v2797 = vrot.slane %v2694, 2
        %v2798 = vsel %vm883, %v2795, %v2797
        %v2799 = vrot.slane %v2695, 2
        %v2800 = vsel %vm883, %v2797, %v2799
        %v2801 = vrot.slane %v2696, 2
        %v2802 = vsel %vm883, %v2799, %v2801
        %v2803 = vrot.slane %v2697, 2
        %v2804 = vsel %vm883, %v2801, %v2803
        %v2805 = vrot.slane %v2698, 2
        %v2806 = vsel %vm883, %v2803, %v2805
        %v2807 = vrot.slane %v2699, 2
        %v2808 = vsel %vm883, %v2805, %v2807
        %v2809 = vrot.slane %v2700, 2
        %v2810 = vsel %vm883, %v2807, %v2809
        %2811 = vrot.lane.b32.xlu0 %v2786, 40
        %v2812 = vpop.permute.xlu0 %2811
        %2813 = vrot.lane.b32.xlu0 %v2788, 40
        %v2814 = vpop.permute.xlu0 %2813
        %2815 = vrot.lane.b32.xlu0 %v2790, 40
        %v2816 = vpop.permute.xlu0 %2815
        %2817 = vrot.lane.b32.xlu0 %v2792, 40
        %v2818 = vpop.permute.xlu0 %2817
        %2819 = vrot.lane.b32.xlu0 %v2794, 40
        %v2820 = vpop.permute.xlu0 %2819
        %2821 = vrot.lane.b32.xlu0 %v2796, 40
        %v2822 = vpop.permute.xlu0 %2821
        %2823 = vrot.lane.b32.xlu0 %v2798, 40
        %v2824 = vpop.permute.xlu0 %2823
        %2825 = vrot.lane.b32.xlu0 %v2800, 40
        %v2826 = vpop.permute.xlu0 %2825
        %2827 = vrot.lane.b32.xlu0 %v2802, 40
        %v2828 = vpop.permute.xlu0 %2827
        %2829 = vrot.lane.b32.xlu0 %v2804, 40
        %v2830 = vpop.permute.xlu0 %2829
        %2831 = vrot.lane.b32.xlu0 %v2806, 40
        %v2832 = vpop.permute.xlu0 %2831
        %2833 = vrot.lane.b32.xlu0 %v2808, 40
        %v2834 = vpop.permute.xlu0 %2833
        %2835 = vrot.lane.b32.xlu0 %v2810, 40
        %v2836 = vpop.permute.xlu0 %2835
        %2837 = vrot.lane.b32.xlu0 %v2809, 40
        %v2838 = vpop.permute.xlu0 %2837
        %v2853 = vrot.slane %v2687, 3
        %v2854 = vrot.slane %v2688, 3
        %v2855 = vsel %vm1043, %v2853, %v2854
        %v2856 = vrot.slane %v2689, 3
        %v2857 = vsel %vm1043, %v2854, %v2856
        %v2858 = vrot.slane %v2690, 3
        %v2859 = vsel %vm1043, %v2856, %v2858
        %v2860 = vrot.slane %v2691, 3
        %v2861 = vsel %vm1043, %v2858, %v2860
        %v2862 = vrot.slane %v2692, 3
        %v2863 = vsel %vm1043, %v2860, %v2862
        %v2864 = vrot.slane %v2693, 3
        %v2865 = vsel %vm1043, %v2862, %v2864
        %v2866 = vrot.slane %v2694, 3
        %v2867 = vsel %vm1043, %v2864, %v2866
        %v2868 = vrot.slane %v2695, 3
        %v2869 = vsel %vm1043, %v2866, %v2868
        %v2870 = vrot.slane %v2696, 3
        %v2871 = vsel %vm1043, %v2868, %v2870
        %v2872 = vrot.slane %v2697, 3
        %v2873 = vsel %vm1043, %v2870, %v2872
        %v2874 = vrot.slane %v2698, 3
        %v2875 = vsel %vm1043, %v2872, %v2874
        %v2876 = vrot.slane %v2699, 3
        %v2877 = vsel %vm1043, %v2874, %v2876
        %v2878 = vrot.slane %v2700, 3
        %v2879 = vsel %vm1043, %v2876, %v2878
        %2880 = vrot.lane.b32.xlu0 %v2855, 124
        %v2881 = vpop.permute.xlu0 %2880
        %2882 = vrot.lane.b32.xlu0 %v2857, 124
        %v2883 = vpop.permute.xlu0 %2882
        %2884 = vrot.lane.b32.xlu0 %v2859, 124
        %v2885 = vpop.permute.xlu0 %2884
        %2886 = vrot.lane.b32.xlu0 %v2861, 124
        %v2887 = vpop.permute.xlu0 %2886
        %2888 = vrot.lane.b32.xlu0 %v2863, 124
        %v2889 = vpop.permute.xlu0 %2888
        %2890 = vrot.lane.b32.xlu0 %v2865, 124
        %v2891 = vpop.permute.xlu0 %2890
        %2892 = vrot.lane.b32.xlu0 %v2867, 124
        %v2893 = vpop.permute.xlu0 %2892
        %2894 = vrot.lane.b32.xlu0 %v2869, 124
        %v2895 = vpop.permute.xlu0 %2894
        %2896 = vrot.lane.b32.xlu0 %v2871, 124
        %v2897 = vpop.permute.xlu0 %2896
        %2898 = vrot.lane.b32.xlu0 %v2873, 124
        %v2899 = vpop.permute.xlu0 %2898
        %2900 = vrot.lane.b32.xlu0 %v2875, 124
        %v2901 = vpop.permute.xlu0 %2900
        %2902 = vrot.lane.b32.xlu0 %v2877, 124
        %v2903 = vpop.permute.xlu0 %2902
        %2904 = vrot.lane.b32.xlu0 %v2879, 124
        %v2905 = vpop.permute.xlu0 %2904
        %2906 = vrot.lane.b32.xlu0 %v2878, 124
        %v2907 = vpop.permute.xlu0 %2906
        %v2922 = vrot.slane %v2687, 4
        %v2923 = vrot.slane %v2688, 4
        %v2924 = vsel %vm1203, %v2922, %v2923
        %v2925 = vrot.slane %v2689, 4
        %v2926 = vsel %vm1203, %v2923, %v2925
        %v2927 = vrot.slane %v2690, 4
        %v2928 = vsel %vm1203, %v2925, %v2927
        %v2929 = vrot.slane %v2691, 4
        %v2930 = vsel %vm1203, %v2927, %v2929
        %v2931 = vrot.slane %v2692, 4
        %v2932 = vsel %vm1203, %v2929, %v2931
        %v2933 = vrot.slane %v2693, 4
        %v2934 = vsel %vm1203, %v2931, %v2933
        %v2935 = vrot.slane %v2694, 4
        %v2936 = vsel %vm1203, %v2933, %v2935
        %v2937 = vrot.slane %v2695, 4
        %v2938 = vsel %vm1203, %v2935, %v2937
        %v2939 = vrot.slane %v2696, 4
        %v2940 = vsel %vm1203, %v2937, %v2939
        %v2941 = vrot.slane %v2697, 4
        %v2942 = vsel %vm1203, %v2939, %v2941
        %v2943 = vrot.slane %v2698, 4
        %v2944 = vsel %vm1203, %v2941, %v2943
        %v2945 = vrot.slane %v2699, 4
        %v2946 = vsel %vm1203, %v2943, %v2945
        %v2947 = vrot.slane %v2700, 4
        %v2948 = vsel %vm1203, %v2945, %v2947
        %2949 = vrot.lane.b32.xlu0 %v2924, 80
        %v2950 = vpop.permute.xlu0 %2949
        %2951 = vrot.lane.b32.xlu0 %v2926, 80
        %v2952 = vpop.permute.xlu0 %2951
        %2953 = vrot.lane.b32.xlu0 %v2928, 80
        %v2954 = vpop.permute.xlu0 %2953
        %2955 = vrot.lane.b32.xlu0 %v2930, 80
        %v2956 = vpop.permute.xlu0 %2955
        %2957 = vrot.lane.b32.xlu0 %v2932, 80
        %v2958 = vpop.permute.xlu0 %2957
        %2959 = vrot.lane.b32.xlu0 %v2934, 80
        %v2960 = vpop.permute.xlu0 %2959
        %2961 = vrot.lane.b32.xlu0 %v2936, 80
        %v2962 = vpop.permute.xlu0 %2961
        %2963 = vrot.lane.b32.xlu0 %v2938, 80
        %v2964 = vpop.permute.xlu0 %2963
        %2965 = vrot.lane.b32.xlu0 %v2940, 80
        %v2966 = vpop.permute.xlu0 %2965
        %2967 = vrot.lane.b32.xlu0 %v2942, 80
        %v2968 = vpop.permute.xlu0 %2967
        %2969 = vrot.lane.b32.xlu0 %v2944, 80
        %v2970 = vpop.permute.xlu0 %2969
        %2971 = vrot.lane.b32.xlu0 %v2946, 80
        %v2972 = vpop.permute.xlu0 %2971
        %2973 = vrot.lane.b32.xlu0 %v2948, 80
        %v2974 = vpop.permute.xlu0 %2973
        %2975 = vrot.lane.b32.xlu0 %v2947, 80
        %v2976 = vpop.permute.xlu0 %2975
        %vm2991 = vcmask 687104
        %v2992 = vsel %vm2991, %v2687, %v2743
        %v2993 = vsel %vm2991, %v2688, %v2745
        %v2994 = vsel %vm2991, %v2689, %v2747
        %v2995 = vsel %vm2991, %v2690, %v2749
        %v2996 = vsel %vm2991, %v2691, %v2751
        %v2997 = vsel %vm2991, %v2692, %v2753
        %v2998 = vsel %vm2991, %v2693, %v2755
        %v2999 = vsel %vm2991, %v2694, %v2757
        %v3000 = vsel %vm2991, %v2695, %v2759
        %v3001 = vsel %vm2991, %v2696, %v2761
        %v3002 = vsel %vm2991, %v2697, %v2763
        %v3003 = vsel %vm2991, %v2698, %v2765
        %v3004 = vsel %vm2991, %v2699, %v2767
        %v3005 = vsel %vm2991, %v2700, %v2769
        %v3006 = vsel %vm2443, %v2743, %v2812
        %v3007 = vsel %vm2443, %v2745, %v2814
        %v3008 = vsel %vm2443, %v2747, %v2816
        %v3009 = vsel %vm2443, %v2749, %v2818
        %v3010 = vsel %vm2443, %v2751, %v2820
        %v3011 = vsel %vm2443, %v2753, %v2822
        %v3012 = vsel %vm2443, %v2755, %v2824
        %v3013 = vsel %vm2443, %v2757, %v2826
        %v3014 = vsel %vm2443, %v2759, %v2828
        %v3015 = vsel %vm2443, %v2761, %v2830
        %v3016 = vsel %vm2443, %v2763, %v2832
        %v3017 = vsel %vm2443, %v2765, %v2834
        %v3018 = vsel %vm2443, %v2767, %v2836
        %v3019 = vsel %vm2443, %v2769, %v2838
        %v3020 = vsel %vm2053, %v3006, %v2881
        %v3021 = vsel %vm2053, %v3007, %v2883
        %v3022 = vsel %vm2053, %v3008, %v2885
        %v3023 = vsel %vm2053, %v3009, %v2887
        %v3024 = vsel %vm2053, %v3010, %v2889
        %v3025 = vsel %vm2053, %v3011, %v2891
        %v3026 = vsel %vm2053, %v3012, %v2893
        %v3027 = vsel %vm2053, %v3013, %v2895
        %v3028 = vsel %vm2053, %v3014, %v2897
        %v3029 = vsel %vm2053, %v3015, %v2899
        %v3030 = vsel %vm2053, %v3016, %v2901
        %v3031 = vsel %vm2053, %v3017, %v2903
        %v3032 = vsel %vm2053, %v3018, %v2905
        %v3033 = vsel %vm2053, %v3019, %v2907
        %vm3034 = vcmask 654336
        %v3035 = vsel %vm3034, %v2881, %v2950
        %v3036 = vsel %vm3034, %v2883, %v2952
        %v3037 = vsel %vm3034, %v2885, %v2954
        %v3038 = vsel %vm3034, %v2887, %v2956
        %v3039 = vsel %vm3034, %v2889, %v2958
        %v3040 = vsel %vm3034, %v2891, %v2960
        %v3041 = vsel %vm3034, %v2893, %v2962
        %v3042 = vsel %vm3034, %v2895, %v2964
        %v3043 = vsel %vm3034, %v2897, %v2966
        %v3044 = vsel %vm3034, %v2899, %v2968
        %v3045 = vsel %vm3034, %v2901, %v2970
        %v3046 = vsel %vm3034, %v2903, %v2972
        %v3047 = vsel %vm3034, %v2905, %v2974
        %v3048 = vsel %vm3034, %v2907, %v2976
        %v3049 = vpack.c.bf16 %v2993, %v2992
        %v3050 = vpack.c.bf16 %v3021, %v3020
        %v3051 = vpack.c.bf16 %v3036, %v3035
        %v3052 = vpack.c.bf16 %v2952, %v2950
        %v3053 = vpack.c.bf16 %v2995, %v2994
        %v3054 = vpack.c.bf16 %v3023, %v3022
        %v3055 = vpack.c.bf16 %v3038, %v3037
        %v3056 = vpack.c.bf16 %v2956, %v2954
        %v3057 = vpack.c.bf16 %v2997, %v2996
        %v3058 = vpack.c.bf16 %v3025, %v3024
        %v3059 = vpack.c.bf16 %v3040, %v3039
        %v3060 = vpack.c.bf16 %v2960, %v2958
        %v3061 = vpack.c.bf16 %v2999, %v2998
        %v3062 = vpack.c.bf16 %v3027, %v3026
        %v3063 = vpack.c.bf16 %v3042, %v3041
        %v3064 = vpack.c.bf16 %v2964, %v2962
        %v3065 = vpack.c.bf16 %v3001, %v3000
        %v3066 = vpack.c.bf16 %v3029, %v3028
        %v3067 = vpack.c.bf16 %v3044, %v3043
        %v3068 = vpack.c.bf16 %v2968, %v2966
        %v3069 = vpack.c.bf16 %v3003, %v3002
        %v3070 = vpack.c.bf16 %v3031, %v3030
        %v3071 = vpack.c.bf16 %v3046, %v3045
        %v3072 = vpack.c.bf16 %v2972, %v2970
        %v3073 = vpack.c.bf16 %v3005, %v3004
        %v3074 = vpack.c.bf16 %v3033, %v3032
        %v3075 = vpack.c.bf16 %v3048, %v3047
        %v3076 = vpack.c.bf16 %v2976, %v2974
        %v3077 = vld [vmem:[%s5] sm:$0xff]
        %v3078 = vld [vmem:[%s5 + $0x8] sm:$0xff]
        %v3079 = vld [vmem:[%s5 + $0x10] sm:$0xff]
        %v3080 = vld [vmem:[%s5 + $0x18] sm:$0xff]
        %v3081 = vld [vmem:[%s5 + $0x20] sm:$0xff]
        %v3082 = vld [vmem:[%s5 + $0x28] sm:$0xff]
        %v3083 = vld [vmem:[%s5 + $0x30] sm:$0xff]
        %v3084 = vld [vmem:[%s5 + $0x38] sm:$0xff]
        %v3085 = vld [vmem:[%s5 + $0x40] sm:$0xff]
        %v3086 = vld [vmem:[%s5 + $0x48] sm:$0xff]
        %v3087 = vld [vmem:[%s5 + $0x50] sm:$0xff]
        %v3088 = vld [vmem:[%s5 + $0x58] sm:$0xff]
        %v3089 = vld [vmem:[%s5 + $0x60] sm:$0xff]
        %v3090 = vld [vmem:[%s5 + $0x68] sm:$0xff]
        %v3091 = vld [vmem:[%s5 + $0x70] sm:$0xff]
        %v3092 = vld [vmem:[%s5 + $0x78] sm:$0xff]
        %v3093 = vld [vmem:[%s5 + $0x80] sm:$0xff]
        %v3094 = vld [vmem:[%s5 + $0x88] sm:$0xff]
        %v3095 = vld [vmem:[%s5 + $0x90] sm:$0xff]
        %v3096 = vld [vmem:[%s5 + $0x98] sm:$0xff]
        %v3097 = vld [vmem:[%s5 + $0xa0] sm:$0xff]
        %v3098 = vld [vmem:[%s5 + $0xa8] sm:$0xff]
        %v3099 = vld [vmem:[%s5 + $0xb0] sm:$0xff]
        %v3100 = vld [vmem:[%s5 + $0xb8] sm:$0xff]
        %v3101 = vld [vmem:[%s5 + $0xc0] sm:$0xff]
        %v3102 = vld [vmem:[%s5 + $0xc8] sm:$0xff]
        %v3103 = vld [vmem:[%s5 + $0xd0] sm:$0xff]
        %v3104 = vld [vmem:[%s5 + $0xd8] sm:$0xff]
        %v3105 = vld [vmem:[%s5 + $0xe0] sm:$0xff]
        %v3106 = vld [vmem:[%s5 + $0xe8] sm:$0xff]
        %v3107 = vld [vmem:[%s5 + $0xf0] sm:$0xff]
        %v3108 = vld [vmem:[%s5 + $0xf8] sm:$0xff]
        %v3109 = vld [vmem:[%s5 + $0x100] sm:$0xff]
        %v3110 = vld [vmem:[%s5 + $0x108] sm:$0xff]
        %v3111 = vld [vmem:[%s5 + $0x110] sm:$0xff]
        %v3112 = vld [vmem:[%s5 + $0x118] sm:$0xff]
        %v3113 = vld [vmem:[%s5 + $0x120] sm:$0xff]
        %v3114 = vld [vmem:[%s5 + $0x128] sm:$0xff]
        %v3115 = vld [vmem:[%s5 + $0x130] sm:$0xff]
        %v3116 = vld [vmem:[%s5 + $0x138] sm:$0xff]
        %v3117 = vld [vmem:[%s5 + $0x140] sm:$0xff]
        %v3118 = vld [vmem:[%s5 + $0x148] sm:$0xff]
        %v3119 = vld [vmem:[%s5 + $0x150] sm:$0xff]
        %v3120 = vld [vmem:[%s5 + $0x158] sm:$0xff]
        %v3121 = vld [vmem:[%s5 + $0x160] sm:$0xff]
        %v3122 = vld [vmem:[%s5 + $0x168] sm:$0xff]
        %v3123 = vld [vmem:[%s5 + $0x170] sm:$0xff]
        %v3124 = vld [vmem:[%s5 + $0x178] sm:$0xff]
        %v3125 = vld [vmem:[%s5 + $0x180] sm:$0xff]
        %v3126 = vld [vmem:[%s5 + $0x188] sm:$0xff]
        %v3127 = vld [vmem:[%s5 + $0x190] sm:$0xff]
        %v3128 = vld [vmem:[%s5 + $0x198] sm:$0xff]
        %v3129 = vld [vmem:[%s5 + $0x1a0] sm:$0x33]
        %v3130 = vld [vmem:[#allocation7] sm:$0x3]
        %v3132 = vlaneseq
        %v3133 = vshrl.u32 %v3132, 7
        %v3134 = vsub.s32 0, %v3133
        %v3135 = vrot.slane %v3130, %v3134
        %v3136 = vlaneseq
        %v3137 = vshrl.u32 %v3136, 7
        %v3138 = vsub.s32 1, %v3137
        %v3139 = vrot.slane %v3130, %v3138
        %v3195 = vunpack.c.l.b16 %v3077
        %v3196 = vunpack.c.h.b16 %v3077
        %v3197 = vunpack.c.l.b16 %v3078
        %v3198 = vunpack.c.h.b16 %v3078
        %v3199 = vunpack.c.l.b16 %v3079
        %v3200 = vunpack.c.h.b16 %v3079
        %v3201 = vunpack.c.l.b16 %v3080
        %v3202 = vunpack.c.h.b16 %v3080
        %v3203 = vunpack.c.l.b16 %v3081
        %v3204 = vunpack.c.h.b16 %v3081
        %v3205 = vunpack.c.l.b16 %v3082
        %v3206 = vunpack.c.h.b16 %v3082
        %v3207 = vunpack.c.l.b16 %v3083
        %v3208 = vunpack.c.h.b16 %v3083
        %v3209 = vunpack.c.l.b16 %v3084
        %v3210 = vunpack.c.h.b16 %v3084
        %v3211 = vunpack.c.l.b16 %v3085
        %v3212 = vunpack.c.h.b16 %v3085
        %v3213 = vunpack.c.l.b16 %v3086
        %v3214 = vunpack.c.h.b16 %v3086
        %v3215 = vunpack.c.l.b16 %v3087
        %v3216 = vunpack.c.h.b16 %v3087
        %v3217 = vunpack.c.l.b16 %v3088
        %v3218 = vunpack.c.h.b16 %v3088
        %v3219 = vunpack.c.l.b16 %v3089
        %v3220 = vunpack.c.h.b16 %v3089
        %v3221 = vunpack.c.l.b16 %v3090
        %v3222 = vunpack.c.h.b16 %v3090
        %v3223 = vunpack.c.l.b16 %v3091
        %v3224 = vunpack.c.h.b16 %v3091
        %v3225 = vunpack.c.l.b16 %v3092
        %v3226 = vunpack.c.h.b16 %v3092
        %v3227 = vunpack.c.l.b16 %v3093
        %v3228 = vunpack.c.h.b16 %v3093
        %v3229 = vunpack.c.l.b16 %v3094
        %v3230 = vunpack.c.h.b16 %v3094
        %v3231 = vunpack.c.l.b16 %v3095
        %v3232 = vunpack.c.h.b16 %v3095
        %v3233 = vunpack.c.l.b16 %v3096
        %v3234 = vunpack.c.h.b16 %v3096
        %v3235 = vunpack.c.l.b16 %v3097
        %v3236 = vunpack.c.h.b16 %v3097
        %v3237 = vunpack.c.l.b16 %v3098
        %v3238 = vunpack.c.h.b16 %v3098
        %v3239 = vunpack.c.l.b16 %v3099
        %v3240 = vunpack.c.h.b16 %v3099
        %v3241 = vunpack.c.l.b16 %v3100
        %v3242 = vunpack.c.h.b16 %v3100
        %v3243 = vunpack.c.l.b16 %v3101
        %v3244 = vunpack.c.h.b16 %v3101
        %v3245 = vunpack.c.l.b16 %v3102
        %v3246 = vunpack.c.h.b16 %v3102
        %v3247 = vunpack.c.l.b16 %v3103
        %v3248 = vunpack.c.h.b16 %v3103
        %v3249 = vunpack.c.l.b16 %v3104
        %v3250 = vunpack.c.h.b16 %v3104
        %v3251 = vunpack.c.l.b16 %v3105
        %v3252 = vunpack.c.h.b16 %v3105
        %v3253 = vunpack.c.l.b16 %v3106
        %v3254 = vunpack.c.h.b16 %v3106
        %v3255 = vunpack.c.l.b16 %v3107
        %v3256 = vunpack.c.h.b16 %v3107
        %v3257 = vunpack.c.l.b16 %v3108
        %v3258 = vunpack.c.h.b16 %v3108
        %v3259 = vunpack.c.l.b16 %v3109
        %v3260 = vunpack.c.h.b16 %v3109
        %v3261 = vunpack.c.l.b16 %v3110
        %v3262 = vunpack.c.h.b16 %v3110
        %v3263 = vunpack.c.l.b16 %v3111
        %v3264 = vunpack.c.h.b16 %v3111
        %v3265 = vunpack.c.l.b16 %v3112
        %v3266 = vunpack.c.h.b16 %v3112
        %v3267 = vunpack.c.l.b16 %v3113
        %v3268 = vunpack.c.h.b16 %v3113
        %v3269 = vunpack.c.l.b16 %v3114
        %v3270 = vunpack.c.h.b16 %v3114
        %v3271 = vunpack.c.l.b16 %v3115
        %v3272 = vunpack.c.h.b16 %v3115
        %v3273 = vunpack.c.l.b16 %v3116
        %v3274 = vunpack.c.h.b16 %v3116
        %v3275 = vunpack.c.l.b16 %v3117
        %v3276 = vunpack.c.h.b16 %v3117
        %v3277 = vunpack.c.l.b16 %v3118
        %v3278 = vunpack.c.h.b16 %v3118
        %v3279 = vunpack.c.l.b16 %v3119
        %v3280 = vunpack.c.h.b16 %v3119
        %v3281 = vunpack.c.l.b16 %v3120
        %v3282 = vunpack.c.h.b16 %v3120
        %v3283 = vunpack.c.l.b16 %v3121
        %v3284 = vunpack.c.h.b16 %v3121
        %v3285 = vunpack.c.l.b16 %v3122
        %v3286 = vunpack.c.h.b16 %v3122
        %v3287 = vunpack.c.l.b16 %v3123
        %v3288 = vunpack.c.h.b16 %v3123
        %v3289 = vunpack.c.l.b16 %v3124
        %v3290 = vunpack.c.h.b16 %v3124
        %v3291 = vunpack.c.l.b16 %v3125
        %v3292 = vunpack.c.h.b16 %v3125
        %v3293 = vunpack.c.l.b16 %v3126
        %v3294 = vunpack.c.h.b16 %v3126
        %v3295 = vunpack.c.l.b16 %v3127
        %v3296 = vunpack.c.h.b16 %v3127
        %v3297 = vunpack.c.l.b16 %v3128
        %v3298 = vunpack.c.h.b16 %v3128
        %v3299 = vunpack.c.l.b16 %v3129
        %v3300 = vunpack.c.h.b16 %v3129
        %v3301 = vpack.c.b16 %v3197, %v3195
        %v3302 = vpack.c.b16 %v3198, %v3196
        %v3303 = vpack.c.b16 %v3201, %v3199
        %v3304 = vpack.c.b16 %v3202, %v3200
        %v3305 = vpack.c.b16 %v3205, %v3203
        %v3306 = vpack.c.b16 %v3206, %v3204
        %v3307 = vpack.c.b16 %v3209, %v3207
        %v3308 = vpack.c.b16 %v3210, %v3208
        %v3309 = vpack.c.b16 %v3213, %v3211
        %v3310 = vpack.c.b16 %v3214, %v3212
        %v3311 = vpack.c.b16 %v3217, %v3215
        %v3312 = vpack.c.b16 %v3218, %v3216
        %v3313 = vpack.c.b16 %v3221, %v3219
        %v3314 = vpack.c.b16 %v3222, %v3220
        %v3315 = vpack.c.b16 %v3225, %v3223
        %v3316 = vpack.c.b16 %v3226, %v3224
        %v3317 = vpack.c.b16 %v3229, %v3227
        %v3318 = vpack.c.b16 %v3230, %v3228
        %v3319 = vpack.c.b16 %v3233, %v3231
        %v3320 = vpack.c.b16 %v3234, %v3232
        %v3321 = vpack.c.b16 %v3237, %v3235
        %v3322 = vpack.c.b16 %v3238, %v3236
        %v3323 = vpack.c.b16 %v3241, %v3239
        %v3324 = vpack.c.b16 %v3242, %v3240
        %v3325 = vpack.c.b16 %v3245, %v3243
        %v3326 = vpack.c.b16 %v3246, %v3244
        %v3327 = vpack.c.b16 %v3249, %v3247
        %v3328 = vpack.c.b16 %v3250, %v3248
        %v3329 = vpack.c.b16 %v3253, %v3251
        %v3330 = vpack.c.b16 %v3254, %v3252
        %v3331 = vpack.c.b16 %v3257, %v3255
        %v3332 = vpack.c.b16 %v3258, %v3256
        %v3333 = vpack.c.b16 %v3261, %v3259
        %v3334 = vpack.c.b16 %v3262, %v3260
        %v3335 = vpack.c.b16 %v3265, %v3263
        %v3336 = vpack.c.b16 %v3266, %v3264
        %v3337 = vpack.c.b16 %v3269, %v3267
        %v3338 = vpack.c.b16 %v3270, %v3268
        %v3339 = vpack.c.b16 %v3273, %v3271
        %v3340 = vpack.c.b16 %v3274, %v3272
        %v3341 = vpack.c.b16 %v3277, %v3275
        %v3342 = vpack.c.b16 %v3278, %v3276
        %v3343 = vpack.c.b16 %v3281, %v3279
        %v3344 = vpack.c.b16 %v3282, %v3280
        %v3345 = vpack.c.b16 %v3285, %v3283
        %v3346 = vpack.c.b16 %v3286, %v3284
        %v3347 = vpack.c.b16 %v3289, %v3287
        %v3348 = vpack.c.b16 %v3290, %v3288
        %v3349 = vpack.c.b16 %v3293, %v3291
        %v3350 = vpack.c.b16 %v3294, %v3292
        %v3351 = vpack.c.b16 %v3297, %v3295
        %v3352 = vpack.c.b16 %v3298, %v3296
        %v3353 = vpack.c.b16 %v3299, %v3299
        %v3354 = vpack.c.b16 %v3300, %v3300
        %vm3407 = vcmask 293888
        %v3409 = vsel %vm3407, %v3052, 0
        %v3412 = vsel %vm3407, %v3056, 0
        %v3415 = vsel %vm3407, %v3060, 0
        %v3418 = vsel %vm3407, %v3064, 0
        %v3421 = vsel %vm3407, %v3068, 0
        %v3424 = vsel %vm3407, %v3072, 0
        %v3427 = vsel %vm3407, %v3076, 0
        %vm3429 = vcmask 1041408
        %v3431 = vsel %vm3429, %v3353, 0
        %v3434 = vsel %vm3429, %v3354, 0
        %3436 = vmatprep.subr.bf16.mxu0 %v3302
        %3437 = vmatpush1.bf16.msra.mxu0 %v3301
        %3438 = vmatprep.subr.bf16.mxu0 %v3304
        %3439 = vmatpush1.bf16.msra.mxu0 %v3303
        %3440 = vmatprep.subr.bf16.mxu0 %v3306
        %3441 = vmatpush1.bf16.msra.mxu0 %v3305
        %3442 = vmatprep.subr.bf16.mxu0 %v3308
        %3443 = vmatpush1.bf16.msra.mxu0 %v3307
        %3444 = vmatprep.subr.bf16.mxu0 %v3310
        %3445 = vmatpush1.bf16.msra.mxu0 %v3309
        %3446 = vmatprep.subr.bf16.mxu0 %v3312
        %3447 = vmatpush1.bf16.msra.mxu0 %v3311
        %3448 = vmatprep.subr.bf16.mxu0 %v3314
        %3449 = vmatpush1.bf16.msra.mxu0 %v3313
        %3450 = vmatprep.subr.bf16.mxu0 %v3316
        %3451 = vmatpush1.bf16.msra.mxu0 %v3315
        %3452 = vmatprep.subr.bf16.mxu0 %v3318
        %3453 = vmatpush1.bf16.msra.mxu0 %v3317
        %3454 = vmatprep.subr.bf16.mxu0 %v3320
        %3455 = vmatpush1.bf16.msra.mxu0 %v3319
        %3456 = vmatprep.subr.bf16.mxu0 %v3322
        %3457 = vmatpush1.bf16.msra.mxu0 %v3321
        %3458 = vmatprep.subr.bf16.mxu0 %v3324
        %3459 = vmatpush1.bf16.msra.mxu0 %v3323
        %3460 = vmatprep.subr.bf16.mxu0 %v3326
        %3461 = vmatpush1.bf16.msra.mxu0 %v3325
        %3462 = vmatprep.subr.bf16.mxu0 %v3328
        %3463 = vmatpush1.bf16.msra.mxu0 %v3327
        %3464 = vmatprep.subr.bf16.mxu0 %v3330
        %3465 = vmatpush1.bf16.msra.mxu0 %v3329
        %3466 = vmatprep.subr.bf16.mxu0 %v3332
        %3467 = vmatpush1.bf16.msra.mxu0 %v3331
        %3468 = vmatprep.mubr.bf16.mxu0 %v3050
        %3469 = vmatmul.mubr.bf16.gmra.mrb[0].mxu0 %v3049
        %v3470 = vpop.f32.mrb[0].mxu0
        %v3471 = vadd.f32 %v3135, %v3470
        %v3472 = vpop.f32.mrb[0].mxu0
        %v3473 = vadd.f32 %v3139, %v3472
        %v3474 = vpop.f32.mrb[0].mxu0
        %v3475 = vadd.f32 %v3135, %v3474
        %v3476 = vpop.f32.mrb[0].mxu0
        %v3477 = vadd.f32 %v3139, %v3476
        %3478 = vmatprep.mubr.bf16.mxu0 %v3054
        %3479 = vmatmul.mubr.bf16.gmra.mrb[0].mxu0 %v3053
        %v3480 = vpop.f32.mrb[0].mxu0
        %v3481 = vadd.f32 %v3135, %v3480
        %v3482 = vpop.f32.mrb[0].mxu0
        %v3483 = vadd.f32 %v3139, %v3482
        %v3484 = vpop.f32.mrb[0].mxu0
        %v3485 = vadd.f32 %v3135, %v3484
        %v3486 = vpop.f32.mrb[0].mxu0
        %v3487 = vadd.f32 %v3139, %v3486
        %3488 = vmatprep.mubr.bf16.mxu0 %v3058
        %3489 = vmatmul.mubr.bf16.gmra.mrb[0].mxu0 %v3057
        %v3490 = vpop.f32.mrb[0].mxu0
        %v3491 = vadd.f32 %v3135, %v3490
        %v3492 = vpop.f32.mrb[0].mxu0
        %v3493 = vadd.f32 %v3139, %v3492
        %v3494 = vpop.f32.mrb[0].mxu0
        %v3495 = vadd.f32 %v3135, %v3494
        %v3496 = vpop.f32.mrb[0].mxu0
        %v3497 = vadd.f32 %v3139, %v3496
        %3498 = vmatprep.mubr.bf16.mxu0 %v3062
        %3499 = vmatmul.mubr.bf16.gmra.mrb[0].mxu0 %v3061
        %v3500 = vpop.f32.mrb[0].mxu0
        %v3501 = vadd.f32 %v3135, %v3500
        %v3502 = vpop.f32.mrb[0].mxu0
        %v3503 = vadd.f32 %v3139, %v3502
        %v3504 = vpop.f32.mrb[0].mxu0
        %v3505 = vadd.f32 %v3135, %v3504
        %v3506 = vpop.f32.mrb[0].mxu0
        %v3507 = vadd.f32 %v3139, %v3506
        %3508 = vmatprep.mubr.bf16.mxu0 %v3066
        %3509 = vmatmul.mubr.bf16.gmra.mrb[0].mxu0 %v3065
        %v3510 = vpop.f32.mrb[0].mxu0
        %v3511 = vadd.f32 %v3135, %v3510
        %v3512 = vpop.f32.mrb[0].mxu0
        %v3513 = vadd.f32 %v3139, %v3512
        %v3514 = vpop.f32.mrb[0].mxu0
        %v3515 = vadd.f32 %v3135, %v3514
        %v3516 = vpop.f32.mrb[0].mxu0
        %v3517 = vadd.f32 %v3139, %v3516
        %3518 = vmatprep.mubr.bf16.mxu0 %v3070
        %3519 = vmatmul.mubr.bf16.gmra.mrb[0].mxu0 %v3069
        %v3520 = vpop.f32.mrb[0].mxu0
        %v3521 = vadd.f32 %v3135, %v3520
        %v3522 = vpop.f32.mrb[0].mxu0
        %v3523 = vadd.f32 %v3139, %v3522
        %v3524 = vpop.f32.mrb[0].mxu0
        %v3525 = vadd.f32 %v3135, %v3524
        %v3526 = vpop.f32.mrb[0].mxu0
        %v3527 = vadd.f32 %v3139, %v3526
        %3528 = vmatprep.mubr.bf16.mxu0 %v3074
        %3529 = vmatmul.mubr.bf16.gmra.mrb[0].mxu0 %v3073
        %v3530 = vpop.f32.mrb[0].mxu0
        %v3531 = vadd.f32 %v3135, %v3530
        %v3532 = vpop.f32.mrb[0].mxu0
        %v3533 = vadd.f32 %v3139, %v3532
        %v3534 = vpop.f32.mrb[0].mxu0
        %v3535 = vadd.f32 %v3135, %v3534
        %v3536 = vpop.f32.mrb[0].mxu0
        %v3537 = vadd.f32 %v3139, %v3536
        %3538 = vdwg.mxu0
        %3539 = vmatprep.subr.bf16.mxu0 %v3334
        %3540 = vmatpush1.bf16.msra.mxu0 %v3333
        %3541 = vmatprep.subr.bf16.mxu0 %v3336
        %3542 = vmatpush1.bf16.msra.mxu0 %v3335
        %3543 = vmatprep.subr.bf16.mxu0 %v3338
        %3544 = vmatpush1.bf16.msra.mxu0 %v3337
        %3545 = vmatprep.subr.bf16.mxu0 %v3340
        %3546 = vmatpush1.bf16.msra.mxu0 %v3339
        %3547 = vmatprep.subr.bf16.mxu0 %v3342
        %3548 = vmatpush1.bf16.msra.mxu0 %v3341
        %3549 = vmatprep.subr.bf16.mxu0 %v3344
        %3550 = vmatpush1.bf16.msra.mxu0 %v3343
        %3551 = vmatprep.subr.bf16.mxu0 %v3346
        %3552 = vmatpush1.bf16.msra.mxu0 %v3345
        %3553 = vmatprep.subr.bf16.mxu0 %v3348
        %3554 = vmatpush1.bf16.msra.mxu0 %v3347
        %3555 = vmatprep.subr.bf16.mxu0 %v3350
        %3556 = vmatpush1.bf16.msra.mxu0 %v3349
        %3557 = vmatprep.subr.bf16.mxu0 %v3352
        %3558 = vmatpush1.bf16.msra.mxu0 %v3351
        %3559 = vmatprep.subr.bf16.mxu0 %v3434
        %3560 = vmatpush1.bf16.msra.mxu0 %v3431
        %3561 = vmatprep.subr.bf16.mxu0 0
        %3562 = vmatpush1.bf16.msra.mxu0 0
        %3563 = vmatprep.subr.bf16.mxu0 0
        %3564 = vmatpush1.bf16.msra.mxu0 0
        %3565 = vmatprep.subr.bf16.mxu0 0
        %3566 = vmatpush1.bf16.msra.mxu0 0
        %3567 = vmatprep.subr.bf16.mxu0 0
        %3568 = vmatpush1.bf16.msra.mxu0 0
        %3569 = vmatprep.subr.bf16.mxu0 0
        %3570 = vmatpush1.bf16.msra.mxu0 0
        %3571 = vmatprep.mubr.bf16.mxu0 %v3409
        %3572 = vmatmul.mubr.bf16.gmra.mrb[0].mxu0 %v3051
        %v3573 = vpop.f32.mrb[0].mxu0
        %v3574 = vadd.f32 %v3471, %v3573
        %v3575 = vpop.f32.mrb[0].mxu0
        %v3576 = vadd.f32 %v3473, %v3575
        %v3577 = vpop.f32.mrb[0].mxu0
        %v3578 = vadd.f32 %v3475, %v3577
        %v3579 = vpop.f32.mrb[0].mxu0
        %v3580 = vadd.f32 %v3477, %v3579
        %3581 = vmatprep.mubr.bf16.mxu0 %v3412
        %3582 = vmatmul.mubr.bf16.gmra.mrb[0].mxu0 %v3055
        %v3583 = vpop.f32.mrb[0].mxu0
        %v3584 = vadd.f32 %v3481, %v3583
        %v3585 = vpop.f32.mrb[0].mxu0
        %v3586 = vadd.f32 %v3483, %v3585
        %v3587 = vpop.f32.mrb[0].mxu0
        %v3588 = vadd.f32 %v3485, %v3587
        %v3589 = vpop.f32.mrb[0].mxu0
        %v3590 = vadd.f32 %v3487, %v3589
        %3591 = vmatprep.mubr.bf16.mxu0 %v3415
        %3592 = vmatmul.mubr.bf16.gmra.mrb[0].mxu0 %v3059
        %v3593 = vpop.f32.mrb[0].mxu0
        %v3594 = vadd.f32 %v3491, %v3593
        %v3595 = vpop.f32.mrb[0].mxu0
        %v3596 = vadd.f32 %v3493, %v3595
        %v3597 = vpop.f32.mrb[0].mxu0
        %v3598 = vadd.f32 %v3495, %v3597
        %v3599 = vpop.f32.mrb[0].mxu0
        %v3600 = vadd.f32 %v3497, %v3599
        %3601 = vmatprep.mubr.bf16.mxu0 %v3418
        %3602 = vmatmul.mubr.bf16.gmra.mrb[0].mxu0 %v3063
        %v3603 = vpop.f32.mrb[0].mxu0
        %v3604 = vadd.f32 %v3501, %v3603
        %v3605 = vpop.f32.mrb[0].mxu0
        %v3606 = vadd.f32 %v3503, %v3605
        %v3607 = vpop.f32.mrb[0].mxu0
        %v3608 = vadd.f32 %v3505, %v3607
        %v3609 = vpop.f32.mrb[0].mxu0
        %v3610 = vadd.f32 %v3507, %v3609
        %3611 = vmatprep.mubr.bf16.mxu0 %v3421
        %3612 = vmatmul.mubr.bf16.gmra.mrb[0].mxu0 %v3067
        %v3613 = vpop.f32.mrb[0].mxu0
        %v3614 = vadd.f32 %v3511, %v3613
        %v3615 = vpop.f32.mrb[0].mxu0
        %v3616 = vadd.f32 %v3513, %v3615
        %v3617 = vpop.f32.mrb[0].mxu0
        %v3618 = vadd.f32 %v3515, %v3617
        %v3619 = vpop.f32.mrb[0].mxu0
        %v3620 = vadd.f32 %v3517, %v3619
        %3621 = vmatprep.mubr.bf16.mxu0 %v3424
        %3622 = vmatmul.mubr.bf16.gmra.mrb[0].mxu0 %v3071
        %v3623 = vpop.f32.mrb[0].mxu0
        %v3624 = vadd.f32 %v3521, %v3623
        %v3625 = vpop.f32.mrb[0].mxu0
        %v3626 = vadd.f32 %v3523, %v3625
        %v3627 = vpop.f32.mrb[0].mxu0
        %v3628 = vadd.f32 %v3525, %v3627
        %v3629 = vpop.f32.mrb[0].mxu0
        %v3630 = vadd.f32 %v3527, %v3629
        %3631 = vmatprep.mubr.bf16.mxu0 %v3427
        %3632 = vmatmul.mubr.bf16.gmra.mrb[0].mxu0 %v3075
        %v3633 = vpop.f32.mrb[0].mxu0
        %v3634 = vadd.f32 %v3531, %v3633
        %v3635 = vpop.f32.mrb[0].mxu0
        %v3636 = vadd.f32 %v3533, %v3635
        %v3637 = vpop.f32.mrb[0].mxu0
        %v3638 = vadd.f32 %v3535, %v3637
        %v3639 = vpop.f32.mrb[0].mxu0
        %v3640 = vadd.f32 %v3537, %v3639
        %3641 = vdwg.mxu0
        %v3642 = vmax.f32 %v3574, 0.0
        %v3643 = vmax.f32 %v3576, 0.0
        %v3644 = vmax.f32 %v3578, 0.0
        %v3645 = vmax.f32 %v3580, 0.0
        %v3646 = vmax.f32 %v3584, 0.0
        %v3647 = vmax.f32 %v3586, 0.0
        %v3648 = vmax.f32 %v3588, 0.0
        %v3649 = vmax.f32 %v3590, 0.0
        %v3650 = vmax.f32 %v3594, 0.0
        %v3651 = vmax.f32 %v3596, 0.0
        %v3652 = vmax.f32 %v3598, 0.0
        %v3653 = vmax.f32 %v3600, 0.0
        %v3654 = vmax.f32 %v3604, 0.0
        %v3655 = vmax.f32 %v3606, 0.0
        %v3656 = vmax.f32 %v3608, 0.0
        %v3657 = vmax.f32 %v3610, 0.0
        %v3658 = vmax.f32 %v3614, 0.0
        %v3659 = vmax.f32 %v3616, 0.0
        %v3660 = vmax.f32 %v3618, 0.0
        %v3661 = vmax.f32 %v3620, 0.0
        %v3662 = vmax.f32 %v3624, 0.0
        %v3663 = vmax.f32 %v3626, 0.0
        %v3664 = vmax.f32 %v3628, 0.0
        %v3665 = vmax.f32 %v3630, 0.0
        %v3666 = vmax.f32 %v3634, 0.0
        %v3667 = vmax.f32 %v3636, 0.0
        %v3668 = vmax.f32 %v3638, 0.0
        %v3669 = vmax.f32 %v3640, 0.0
        %v3670 = vld [vmem:[#allocation8] sm:$0xf]
        %v3671 = vld [vmem:[#allocation8 + $0x4] sm:$0xf]
        %v3672 = vld [vmem:[#allocation8 + $0x8] sm:$0xf]
        %v3673 = vld [vmem:[#allocation8 + $0xc] sm:$0xf]
        %v3674 = vld [vmem:[#allocation8 + $0x10] sm:$0xf]
        %v3675 = vld [vmem:[#allocation8 + $0x14] sm:$0xf]
        %v3676 = vld [vmem:[#allocation8 + $0x18] sm:$0xf]
        %v3677 = vld [vmem:[#allocation8 + $0x1c] sm:$0xf]
        %v3678 = vld [vmem:[#allocation8 + $0x20] sm:$0xf]
        %v3679 = vld [vmem:[#allocation8 + $0x24] sm:$0xf]
        %v3680 = vpack.c.bf16 %v3644, %v3642
        %v3681 = vpack.c.bf16 %v3645, %v3643
        %v3682 = vpack.c.bf16 %v3648, %v3646
        %v3683 = vpack.c.bf16 %v3649, %v3647
        %v3684 = vpack.c.bf16 %v3652, %v3650
        %v3685 = vpack.c.bf16 %v3653, %v3651
        %v3686 = vpack.c.bf16 %v3656, %v3654
        %v3687 = vpack.c.bf16 %v3657, %v3655
        %v3688 = vpack.c.bf16 %v3660, %v3658
        %v3689 = vpack.c.bf16 %v3661, %v3659
        %v3690 = vpack.c.bf16 %v3664, %v3662
        %v3691 = vpack.c.bf16 %v3665, %v3663
        %v3692 = vpack.c.bf16 %v3668, %v3666
        %v3693 = vpack.c.bf16 %v3669, %v3667
        %v3704 = vunpack.c.l.b16 %v3670
        %v3705 = vunpack.c.l.b16 %v3671
        %v3706 = vunpack.c.l.b16 %v3672
        %v3707 = vunpack.c.l.b16 %v3673
        %v3708 = vunpack.c.l.b16 %v3674
        %v3709 = vunpack.c.l.b16 %v3675
        %v3710 = vunpack.c.l.b16 %v3676
        %v3711 = vunpack.c.l.b16 %v3677
        %v3712 = vunpack.c.l.b16 %v3678
        %v3713 = vunpack.c.l.b16 %v3679
        %v3714 = vpack.c.b16 %v3705, %v3704
        %v3715 = vpack.c.b16 %v3707, %v3706
        %v3716 = vpack.c.b16 %v3709, %v3708
        %v3717 = vpack.c.b16 %v3711, %v3710
        %v3718 = vpack.c.b16 %v3713, %v3712
        %vm3719 = vcmask 883712
        %v3721 = vsel %vm3719, %v3714, 0
        %v3724 = vsel %vm3719, %v3715, 0
        %v3727 = vsel %vm3719, %v3716, 0
        %v3730 = vsel %vm3719, %v3717, 0
        %v3733 = vsel %vm3719, %v3718, 0
        %v3736 = vsel %vm883, %v3692, 0
        %v3739 = vsel %vm883, %v3693, 0
        %3741 = vmatprep.subr.bf16.mxu0 %v3681
        %3742 = vmatpush1.bf16.msra.mxu0 %v3680
        %3743 = vmatprep.subr.bf16.mxu0 %v3683
        %3744 = vmatpush1.bf16.msra.mxu0 %v3682
        %3745 = vmatprep.subr.bf16.mxu0 %v3685
        %3746 = vmatpush1.bf16.msra.mxu0 %v3684
        %3747 = vmatprep.subr.bf16.mxu0 %v3687
        %3748 = vmatpush1.bf16.msra.mxu0 %v3686
        %3749 = vmatprep.subr.bf16.mxu0 %v3689
        %3750 = vmatpush1.bf16.msra.mxu0 %v3688
        %3751 = vmatprep.subr.bf16.mxu0 %v3691
        %3752 = vmatpush1.bf16.msra.mxu0 %v3690
        %3753 = vmatprep.subr.bf16.mxu0 %v3739
        %3754 = vmatpush1.bf16.msra.mxu0 %v3736
        %3755 = vmatprep.subr.bf16.mxu0 0
        %3756 = vmatpush1.bf16.msra.mxu0 0
        %3757 = vmatprep.subr.bf16.mxu0 0
        %3758 = vmatpush1.bf16.msra.mxu0 0
        %3759 = vmatprep.subr.bf16.mxu0 0
        %3760 = vmatpush1.bf16.msra.mxu0 0
        %3761 = vmatprep.subr.bf16.mxu0 0
        %3762 = vmatpush1.bf16.msra.mxu0 0
        %3763 = vmatprep.subr.bf16.mxu0 0
        %3764 = vmatpush1.bf16.msra.mxu0 0
        %3765 = vmatprep.subr.bf16.mxu0 0
        %3766 = vmatpush1.bf16.msra.mxu0 0
        %3767 = vmatprep.subr.bf16.mxu0 0
        %3768 = vmatpush1.bf16.msra.mxu0 0
        %3769 = vmatprep.subr.bf16.mxu0 0
        %3770 = vmatpush1.bf16.msra.mxu0 0
        %3771 = vmatprep.subr.bf16.mxu0 0
        %3772 = vmatpush1.bf16.msra.mxu0 0
        %3773 = vmatprep.mubr.bf16.mxu0 0
        %3774 = vmatmul.mubr.bf16.gmra.mrb[0].mxu0 %v3721
        %v3775 = vpop.f32.mrb[0].mxu0
        %v3776 = vadd.f32 0.0, %v3775
        %v3777 = vpop.f32.mrb[0].mxu0
        %v3778 = vadd.f32 0.0, %v3777
        %v3779 = vpop.f32.mrb[0].mxu0
        %v3780 = vadd.f32 0.0, %v3779
        %v3781 = vpop.f32.mrb[0].mxu0
        %v3782 = vadd.f32 0.0, %v3781
        %3783 = vmatprep.mubr.bf16.mxu0 0
        %3784 = vmatmul.mubr.bf16.gmra.mrb[0].mxu0 %v3724
        %v3785 = vpop.f32.mrb[0].mxu0
        %v3786 = vadd.f32 0.0, %v3785
        %v3787 = vpop.f32.mrb[0].mxu0
        %v3788 = vadd.f32 0.0, %v3787
        %v3789 = vpop.f32.mrb[0].mxu0
        %v3790 = vadd.f32 0.0, %v3789
        %v3791 = vpop.f32.mrb[0].mxu0
        %v3792 = vadd.f32 0.0, %v3791
        %3793 = vmatprep.mubr.bf16.mxu0 0
        %3794 = vmatmul.mubr.bf16.gmra.mrb[0].mxu0 %v3727
        %v3795 = vpop.f32.mrb[0].mxu0
        %v3796 = vadd.f32 0.0, %v3795
        %v3797 = vpop.f32.mrb[0].mxu0
        %v3798 = vadd.f32 0.0, %v3797
        %v3799 = vpop.f32.mrb[0].mxu0
        %v3800 = vadd.f32 0.0, %v3799
        %v3801 = vpop.f32.mrb[0].mxu0
        %v3802 = vadd.f32 0.0, %v3801
        %3803 = vmatprep.mubr.bf16.mxu0 0
        %3804 = vmatmul.mubr.bf16.gmra.mrb[0].mxu0 %v3730
        %v3805 = vpop.f32.mrb[0].mxu0
        %v3806 = vadd.f32 0.0, %v3805
        %v3807 = vpop.f32.mrb[0].mxu0
        %v3808 = vadd.f32 0.0, %v3807
        %v3809 = vpop.f32.mrb[0].mxu0
        %v3810 = vadd.f32 0.0, %v3809
        %v3811 = vpop.f32.mrb[0].mxu0
        %v3812 = vadd.f32 0.0, %v3811
        %3813 = vmatprep.mubr.bf16.mxu0 0
        %3814 = vmatmul.mubr.bf16.gmra.mrb[0].mxu0 %v3733
        %v3815 = vpop.f32.mrb[0].mxu0
        %v3816 = vadd.f32 0.0, %v3815
        %v3817 = vpop.f32.mrb[0].mxu0
        %v3818 = vadd.f32 0.0, %v3817
        %v3819 = vpop.f32.mrb[0].mxu0
        %v3820 = vadd.f32 0.0, %v3819
        %v3821 = vpop.f32.mrb[0].mxu0
        %v3822 = vadd.f32 0.0, %v3821
        %3823 = vdwg.mxu0
        %v3824 = vmax.f32 %v3776, %v3800
        %v3825 = vmax.f32 %v3778, %v3802
        %v3826 = vmax.f32 %v3780, %v3806
        %v3827 = vmax.f32 %v3782, %v3808
        %v3828 = vmax.f32 %v3786, %v3810
        %v3829 = vmax.f32 %v3788, %v3812
        %v3830 = vmax.f32 %v3790, %v3816
        %v3831 = vmax.f32 %v3792, %v3818
        %v3832 = vmax.f32 %v3796, %v3820
        %v3833 = vmax.f32 %v3798, %v3822
        %v3834 = vpack.c.bf16 %v3826, %v3824
        %v3835 = vpack.c.bf16 %v3827, %v3825
        %v3836 = vpack.c.bf16 %v3830, %v3828
        %v3837 = vpack.c.bf16 %v3831, %v3829
        %v3838 = vpack.c.bf16 %v3832, %v3832
        %v3839 = vpack.c.bf16 %v3833, %v3833
        %v3840 = vld [vmem:[#allocation10] sm:$0xff]
        %v3841 = vld [vmem:[#allocation10 + $0x8] sm:$0xff]
        %v3842 = vld [vmem:[#allocation10 + $0x10] sm:$0xff]
        %v3843 = vld [vmem:[#allocation10 + $0x18] sm:$0xff]
        %v3844 = vld [vmem:[#allocation10 + $0x20] sm:$0xff]
        %v3845 = vld [vmem:[#allocation10 + $0x28] sm:$0xff]
        %v3846 = vld [vmem:[#allocation10 + $0x30] sm:$0xff]
        %v3847 = vld [vmem:[#allocation10 + $0x38] sm:$0xff]
        %v3848 = vld [vmem:[#allocation10 + $0x40] sm:$0xff]
        %v3849 = vld [vmem:[#allocation10 + $0x48] sm:$0xff]
        %v3850 = vld [vmem:[#allocation10 + $0x50] sm:$0xff]
        %v3851 = vld [vmem:[#allocation10 + $0x58] sm:$0xff]
        %v3852 = vld [vmem:[#allocation10 + $0x60] sm:$0xff]
        %v3853 = vld [vmem:[#allocation10 + $0x68] sm:$0xff]
        %v3854 = vld [vmem:[#allocation10 + $0x70] sm:$0xff]
        %v3855 = vld [vmem:[#allocation10 + $0x78] sm:$0xff]
        %v3856 = vld [vmem:[#allocation10 + $0x80] sm:$0xff]
        %v3857 = vld [vmem:[#allocation10 + $0x88] sm:$0xff]
        %v3858 = vld [vmem:[#allocation10 + $0x90] sm:$0xff]
        %v3859 = vld [vmem:[#allocation10 + $0x98] sm:$0xff]
        %v3880 = vunpack.c.l.b16 %v3840
        %v3881 = vunpack.c.h.b16 %v3840
        %v3882 = vunpack.c.l.b16 %v3841
        %v3883 = vunpack.c.h.b16 %v3841
        %v3884 = vunpack.c.l.b16 %v3842
        %v3885 = vunpack.c.h.b16 %v3842
        %v3886 = vunpack.c.l.b16 %v3843
        %v3887 = vunpack.c.h.b16 %v3843
        %v3888 = vunpack.c.l.b16 %v3844
        %v3889 = vunpack.c.h.b16 %v3844
        %v3890 = vunpack.c.l.b16 %v3845
        %v3891 = vunpack.c.h.b16 %v3845
        %v3892 = vunpack.c.l.b16 %v3846
        %v3893 = vunpack.c.h.b16 %v3846
        %v3894 = vunpack.c.l.b16 %v3847
        %v3895 = vunpack.c.h.b16 %v3847
        %v3896 = vunpack.c.l.b16 %v3848
        %v3897 = vunpack.c.h.b16 %v3848
        %v3898 = vunpack.c.l.b16 %v3849
        %v3899 = vunpack.c.h.b16 %v3849
        %v3900 = vunpack.c.l.b16 %v3850
        %v3901 = vunpack.c.h.b16 %v3850
        %v3902 = vunpack.c.l.b16 %v3851
        %v3903 = vunpack.c.h.b16 %v3851
        %v3904 = vunpack.c.l.b16 %v3852
        %v3905 = vunpack.c.h.b16 %v3852
        %v3906 = vunpack.c.l.b16 %v3853
        %v3907 = vunpack.c.h.b16 %v3853
        %v3908 = vunpack.c.l.b16 %v3854
        %v3909 = vunpack.c.h.b16 %v3854
        %v3910 = vunpack.c.l.b16 %v3855
        %v3911 = vunpack.c.h.b16 %v3855
        %v3912 = vunpack.c.l.b16 %v3856
        %v3913 = vunpack.c.h.b16 %v3856
        %v3914 = vunpack.c.l.b16 %v3857
        %v3915 = vunpack.c.h.b16 %v3857
        %v3916 = vunpack.c.l.b16 %v3858
        %v3917 = vunpack.c.h.b16 %v3858
        %v3918 = vunpack.c.l.b16 %v3859
        %v3919 = vunpack.c.h.b16 %v3859
        %v3920 = vpack.c.b16 %v3882, %v3880
        %v3921 = vpack.c.b16 %v3883, %v3881
        %v3922 = vpack.c.b16 %v3886, %v3884
        %v3923 = vpack.c.b16 %v3887, %v3885
        %v3924 = vpack.c.b16 %v3890, %v3888
        %v3925 = vpack.c.b16 %v3891, %v3889
        %v3926 = vpack.c.b16 %v3894, %v3892
        %v3927 = vpack.c.b16 %v3895, %v3893
        %v3928 = vpack.c.b16 %v3898, %v3896
        %v3929 = vpack.c.b16 %v3899, %v3897
        %v3930 = vpack.c.b16 %v3902, %v3900
        %v3931 = vpack.c.b16 %v3903, %v3901
        %v3932 = vpack.c.b16 %v3906, %v3904
        %v3933 = vpack.c.b16 %v3907, %v3905
        %v3934 = vpack.c.b16 %v3910, %v3908
        %v3935 = vpack.c.b16 %v3911, %v3909
        %v3936 = vpack.c.b16 %v3914, %v3912
        %v3937 = vpack.c.b16 %v3915, %v3913
        %v3938 = vpack.c.b16 %v3918, %v3916
        %v3939 = vpack.c.b16 %v3919, %v3917
        %v3961 = vsel %vm1299, %v3835, 0
        %v3964 = vsel %vm1299, %v3837, 0
        %v3967 = vsel %vm1299, %v3839, 0
        %3969 = vmatprep.subr.bf16.mxu0 %v3921
        %3970 = vmatpush1.bf16.msra.mxu0 %v3920
        %3971 = vmatprep.subr.bf16.mxu0 %v3923
        %3972 = vmatpush1.bf16.msra.mxu0 %v3922
        %3973 = vmatprep.subr.bf16.mxu0 %v3925
        %3974 = vmatpush1.bf16.msra.mxu0 %v3924
        %3975 = vmatprep.subr.bf16.mxu0 %v3927
        %3976 = vmatpush1.bf16.msra.mxu0 %v3926
        %3977 = vmatprep.subr.bf16.mxu0 %v3929
        %3978 = vmatpush1.bf16.msra.mxu0 %v3928
        %3979 = vmatprep.subr.bf16.mxu0 %v3931
        %3980 = vmatpush1.bf16.msra.mxu0 %v3930
        %3981 = vmatprep.subr.bf16.mxu0 %v3933
        %3982 = vmatpush1.bf16.msra.mxu0 %v3932
        %3983 = vmatprep.subr.bf16.mxu0 %v3935
        %3984 = vmatpush1.bf16.msra.mxu0 %v3934
        %3985 = vmatprep.subr.bf16.mxu0 %v3937
        %3986 = vmatpush1.bf16.msra.mxu0 %v3936
        %3987 = vmatprep.subr.bf16.mxu0 %v3939
        %3988 = vmatpush1.bf16.msra.mxu0 %v3938
        %3989 = vmatprep.subr.bf16.mxu0 0
        %3990 = vmatpush1.bf16.msra.mxu0 0
        %3991 = vmatprep.subr.bf16.mxu0 0
        %3992 = vmatpush1.bf16.msra.mxu0 0
        %3993 = vmatprep.subr.bf16.mxu0 0
        %3994 = vmatpush1.bf16.msra.mxu0 0
        %3995 = vmatprep.subr.bf16.mxu0 0
        %3996 = vmatpush1.bf16.msra.mxu0 0
        %3997 = vmatprep.subr.bf16.mxu0 0
        %3998 = vmatpush1.bf16.msra.mxu0 0
        %3999 = vmatprep.subr.bf16.mxu0 0
        %4000 = vmatpush1.bf16.msra.mxu0 0
        %4001 = vmatprep.mubr.bf16.mxu0 %v3961
        %4002 = vmatmul.mubr.bf16.gmra.mrb[0].mxu0 %v3834
        %v4003 = vpop.f32.mrb[0].mxu0
        %v4004 = vadd.f32 0.0, %v4003
        %v4005 = vpop.f32.mrb[0].mxu0
        %v4006 = vadd.f32 0.0, %v4005
        %v4007 = vpop.f32.mrb[0].mxu0
        %v4008 = vadd.f32 0.0, %v4007
        %v4009 = vpop.f32.mrb[0].mxu0
        %v4010 = vadd.f32 0.0, %v4009
        %4011 = vmatprep.mubr.bf16.mxu0 %v3964
        %4012 = vmatmul.mubr.bf16.gmra.mrb[0].mxu0 %v3836
        %v4013 = vpop.f32.mrb[0].mxu0
        %v4014 = vadd.f32 0.0, %v4013
        %v4015 = vpop.f32.mrb[0].mxu0
        %v4016 = vadd.f32 0.0, %v4015
        %v4017 = vpop.f32.mrb[0].mxu0
        %v4018 = vadd.f32 0.0, %v4017
        %v4019 = vpop.f32.mrb[0].mxu0
        %v4020 = vadd.f32 0.0, %v4019
        %4021 = vmatprep.mubr.bf16.mxu0 %v3967
        %4022 = vmatmul.mubr.bf16.gmra.mrb[0].mxu0 %v3838
        %v4023 = vpop.f32.mrb[0].mxu0
        %v4024 = vadd.f32 0.0, %v4023
        %v4025 = vpop.f32.mrb[0].mxu0
        %v4026 = vadd.f32 0.0, %v4025
        %v4027 = vpop.f32.mrb[0].mxu0
        %v4028 = vpop.f32.mrb[0].mxu0
        %4029 = vdwg.mxu0
        %4040 = vrot.lane.b32.xlu0 %v4004, 48
        %v4041 = vpop.permute.xlu0 %4040
        %4042 = vrot.lane.b32.xlu0 %v4006, 48
        %v4043 = vpop.permute.xlu0 %4042
        %4044 = vrot.lane.b32.xlu0 %v4008, 48
        %v4045 = vpop.permute.xlu0 %4044
        %4046 = vrot.lane.b32.xlu0 %v4010, 48
        %v4047 = vpop.permute.xlu0 %4046
        %4048 = vrot.lane.b32.xlu0 %v4014, 48
        %v4049 = vpop.permute.xlu0 %4048
        %4050 = vrot.lane.b32.xlu0 %v4016, 48
        %v4051 = vpop.permute.xlu0 %4050
        %4052 = vrot.lane.b32.xlu0 %v4018, 48
        %v4053 = vpop.permute.xlu0 %4052
        %4054 = vrot.lane.b32.xlu0 %v4020, 48
        %v4055 = vpop.permute.xlu0 %4054
        %4056 = vrot.lane.b32.xlu0 %v4024, 48
        %v4057 = vpop.permute.xlu0 %4056
        %4058 = vrot.lane.b32.xlu0 %v4026, 48
        %v4059 = vpop.permute.xlu0 %4058
        %vm4060 = vcmask 392192
        %v4061 = vsel %vm4060, %v4041, %v4043
        %v4062 = vsel %vm4060, %v4045, %v4047
        %v4063 = vsel %vm4060, %v4049, %v4051
        %v4064 = vsel %vm4060, %v4053, %v4055
        %v4065 = vsel %vm4060, %v4057, %v4059
        %v4071 = vmax.f32 %v4004, %v4061
        %v4072 = vmax.f32 %v4008, %v4062
        %v4073 = vmax.f32 %v4014, %v4063
        %v4074 = vmax.f32 %v4018, %v4064
        %v4075 = vmax.f32 %v4024, %v4065
        %v4081 = vrot.slane %v4071, 1
        %v4082 = vrot.slane %v4072, 1
        %v4083 = vsel %vm723, %v4081, %v4082
        %v4084 = vrot.slane %v4073, 1
        %v4085 = vsel %vm723, %v4082, %v4084
        %v4086 = vrot.slane %v4074, 1
        %v4087 = vsel %vm723, %v4084, %v4086
        %v4088 = vrot.slane %v4075, 1
        %v4089 = vsel %vm723, %v4086, %v4088
        %4090 = vrot.lane.b32.xlu0 %v4083, 80
        %v4091 = vpop.permute.xlu0 %4090
        %4092 = vrot.lane.b32.xlu0 %v4085, 80
        %v4093 = vpop.permute.xlu0 %4092
        %4094 = vrot.lane.b32.xlu0 %v4087, 80
        %v4095 = vpop.permute.xlu0 %4094
        %4096 = vrot.lane.b32.xlu0 %v4089, 80
        %v4097 = vpop.permute.xlu0 %4096
        %4098 = vrot.lane.b32.xlu0 %v4088, 80
        %v4099 = vpop.permute.xlu0 %4098
        %v4105 = vrot.slane %v4071, 2
        %v4106 = vrot.slane %v4072, 2
        %v4107 = vsel %vm883, %v4105, %v4106
        %v4108 = vrot.slane %v4073, 2
        %v4109 = vsel %vm883, %v4106, %v4108
        %v4110 = vrot.slane %v4074, 2
        %v4111 = vsel %vm883, %v4108, %v4110
        %v4112 = vrot.slane %v4075, 2
        %v4113 = vsel %vm883, %v4110, %v4112
        %4114 = vrot.lane.b32.xlu0 %v4107, 32
        %v4115 = vpop.permute.xlu0 %4114
        %4116 = vrot.lane.b32.xlu0 %v4109, 32
        %v4117 = vpop.permute.xlu0 %4116
        %4118 = vrot.lane.b32.xlu0 %v4111, 32
        %v4119 = vpop.permute.xlu0 %4118
        %4120 = vrot.lane.b32.xlu0 %v4113, 32
        %v4121 = vpop.permute.xlu0 %4120
        %4122 = vrot.lane.b32.xlu0 %v4112, 32
        %v4123 = vpop.permute.xlu0 %4122
        %v4129 = vrot.slane %v4071, 3
        %v4130 = vrot.slane %v4072, 3
        %v4131 = vsel %vm1043, %v4129, %v4130
        %v4132 = vrot.slane %v4073, 3
        %v4133 = vsel %vm1043, %v4130, %v4132
        %v4134 = vrot.slane %v4074, 3
        %v4135 = vsel %vm1043, %v4132, %v4134
        %v4136 = vrot.slane %v4075, 3
        %v4137 = vsel %vm1043, %v4134, %v4136
        %4138 = vrot.lane.b32.xlu0 %v4131, 112
        %v4139 = vpop.permute.xlu0 %4138
        %4140 = vrot.lane.b32.xlu0 %v4133, 112
        %v4141 = vpop.permute.xlu0 %4140
        %4142 = vrot.lane.b32.xlu0 %v4135, 112
        %v4143 = vpop.permute.xlu0 %4142
        %4144 = vrot.lane.b32.xlu0 %v4137, 112
        %v4145 = vpop.permute.xlu0 %4144
        %4146 = vrot.lane.b32.xlu0 %v4136, 112
        %v4147 = vpop.permute.xlu0 %4146
        %v4153 = vrot.slane %v4071, 4
        %v4154 = vrot.slane %v4072, 4
        %v4155 = vsel %vm1203, %v4153, %v4154
        %v4156 = vrot.slane %v4073, 4
        %v4157 = vsel %vm1203, %v4154, %v4156
        %v4158 = vrot.slane %v4074, 4
        %v4159 = vsel %vm1203, %v4156, %v4158
        %v4160 = vrot.slane %v4075, 4
        %v4161 = vsel %vm1203, %v4158, %v4160
        %4162 = vrot.lane.b32.xlu0 %v4155, 64
        %v4163 = vpop.permute.xlu0 %4162
        %4164 = vrot.lane.b32.xlu0 %v4157, 64
        %v4165 = vpop.permute.xlu0 %4164
        %4166 = vrot.lane.b32.xlu0 %v4159, 64
        %v4167 = vpop.permute.xlu0 %4166
        %4168 = vrot.lane.b32.xlu0 %v4161, 64
        %v4169 = vpop.permute.xlu0 %4168
        %4170 = vrot.lane.b32.xlu0 %v4160, 64
        %v4171 = vpop.permute.xlu0 %4170
        %v4177 = vsel %vm3034, %v4071, %v4091
        %v4178 = vsel %vm3034, %v4072, %v4093
        %v4179 = vsel %vm3034, %v4073, %v4095
        %v4180 = vsel %vm3034, %v4074, %v4097
        %v4181 = vsel %vm3034, %v4075, %v4099
        %v4182 = vsel %vm1299, %v4091, %v4115
        %v4183 = vsel %vm1299, %v4093, %v4117
        %v4184 = vsel %vm1299, %v4095, %v4119
        %v4185 = vsel %vm1299, %v4097, %v4121
        %v4186 = vsel %vm1299, %v4099, %v4123
        %vm4187 = vcmask 916480
        %v4188 = vsel %vm4187, %v4182, %v4139
        %v4189 = vsel %vm4187, %v4183, %v4141
        %v4190 = vsel %vm4187, %v4184, %v4143
        %v4191 = vsel %vm4187, %v4185, %v4145
        %v4192 = vsel %vm4187, %v4186, %v4147
        %v4193 = vsel %vm1332, %v4139, %v4163
        %v4194 = vsel %vm1332, %v4141, %v4165
        %v4195 = vsel %vm1332, %v4143, %v4167
        %v4196 = vsel %vm1332, %v4145, %v4169
        %v4197 = vsel %vm1332, %v4147, %v4171
        %v4198 = vpack.c.bf16 %v4178, %v4177
        %v4199 = vpack.c.bf16 %v4189, %v4188
        %v4200 = vpack.c.bf16 %v4194, %v4193
        %v4201 = vpack.c.bf16 %v4165, %v4163
        %v4202 = vpack.c.bf16 %v4180, %v4179
        %v4203 = vpack.c.bf16 %v4191, %v4190
        %v4204 = vpack.c.bf16 %v4196, %v4195
        %v4205 = vpack.c.bf16 %v4169, %v4167
        %v4206 = vpack.c.bf16 %v4181, %v4181
        %v4207 = vpack.c.bf16 %v4192, %v4192
        %v4208 = vpack.c.bf16 %v4197, %v4197
        %v4209 = vpack.c.bf16 %v4171, %v4171
        %v4210 = vld [vmem:[%s9] sm:$0xf]
        %v4212 = vsel %vm3407, %v4210, 0
        %v4215 = vsel %vm3429, %v4206, 0
        %v4218 = vsel %vm3429, %v4207, 0
        %v4221 = vsel %vm3429, %v4208, 0
        %v4224 = vsel %vm3429, %v4209, 0
        %4226 = vmatprep.subr.bf16.mxu0 %v4199
        %4227 = vmatpush1.bf16.msra.mxu0 %v4198
        %4228 = vmatprep.subr.bf16.mxu0 %v4203
        %4229 = vmatpush1.bf16.msra.mxu0 %v4202
        %4230 = vmatprep.subr.bf16.mxu0 %v4218
        %4231 = vmatpush1.bf16.msra.mxu0 %v4215
        %4232 = vmatprep.subr.bf16.mxu0 0
        %4233 = vmatpush1.bf16.msra.mxu0 0
        %4234 = vmatprep.subr.bf16.mxu0 0
        %4235 = vmatpush1.bf16.msra.mxu0 0
        %4236 = vmatprep.subr.bf16.mxu0 0
        %4237 = vmatpush1.bf16.msra.mxu0 0
        %4238 = vmatprep.subr.bf16.mxu0 0
        %4239 = vmatpush1.bf16.msra.mxu0 0
        %4240 = vmatprep.subr.bf16.mxu0 0
        %4241 = vmatpush1.bf16.msra.mxu0 0
        %4242 = vmatprep.subr.bf16.mxu0 0
        %4243 = vmatpush1.bf16.msra.mxu0 0
        %4244 = vmatprep.subr.bf16.mxu0 0
        %4245 = vmatpush1.bf16.msra.mxu0 0
        %4246 = vmatprep.subr.bf16.mxu0 0
        %4247 = vmatpush1.bf16.msra.mxu0 0
        %4248 = vmatprep.subr.bf16.mxu0 0
        %4249 = vmatpush1.bf16.msra.mxu0 0
        %4250 = vmatprep.subr.bf16.mxu0 0
        %4251 = vmatpush1.bf16.msra.mxu0 0
        %4252 = vmatprep.subr.bf16.mxu0 0
        %4253 = vmatpush1.bf16.msra.mxu0 0
        %4254 = vmatprep.subr.bf16.mxu0 0
        %4255 = vmatpush1.bf16.msra.mxu0 0
        %4256 = vmatprep.subr.bf16.mxu0 0
        %4257 = vmatpush1.bf16.msra.mxu0 0
        %4258 = vmatprep.mubr.bf16.mxu0 0
        %4259 = vmatmul.mubr.bf16.gmra.mrb[0].mxu0 %v4212
        %v4260 = vpop.f32.mrb[0].mxu0
        %v4261 = vadd.f32 0.0, %v4260
        %v4262 = vpop.f32.mrb[0].mxu0
        %v4263 = vadd.f32 0.0, %v4262
        %v4264 = vpop.f32.mrb[0].mxu0
        %v4265 = vpop.f32.mrb[0].mxu0
        %4266 = vdwg.mxu0
        %4267 = vmatprep.subr.bf16.mxu0 %v4201
        %4268 = vmatpush1.bf16.msra.mxu0 %v4200
        %4269 = vmatprep.subr.bf16.mxu0 %v4205
        %4270 = vmatpush1.bf16.msra.mxu0 %v4204
        %4271 = vmatprep.subr.bf16.mxu0 %v4224
        %4272 = vmatpush1.bf16.msra.mxu0 %v4221
        %4273 = vmatprep.subr.bf16.mxu0 0
        %4274 = vmatpush1.bf16.msra.mxu0 0
        %4275 = vmatprep.subr.bf16.mxu0 0
        %4276 = vmatpush1.bf16.msra.mxu0 0
        %4277 = vmatprep.subr.bf16.mxu0 0
        %4278 = vmatpush1.bf16.msra.mxu0 0
        %4279 = vmatprep.subr.bf16.mxu0 0
        %4280 = vmatpush1.bf16.msra.mxu0 0
        %4281 = vmatprep.subr.bf16.mxu0 0
        %4282 = vmatpush1.bf16.msra.mxu0 0
        %4283 = vmatprep.subr.bf16.mxu0 0
        %4284 = vmatpush1.bf16.msra.mxu0 0
        %4285 = vmatprep.subr.bf16.mxu0 0
        %4286 = vmatpush1.bf16.msra.mxu0 0
        %4287 = vmatprep.subr.bf16.mxu0 0
        %4288 = vmatpush1.bf16.msra.mxu0 0
        %4289 = vmatprep.subr.bf16.mxu0 0
        %4290 = vmatpush1.bf16.msra.mxu0 0
        %4291 = vmatprep.subr.bf16.mxu0 0
        %4292 = vmatpush1.bf16.msra.mxu0 0
        %4293 = vmatprep.subr.bf16.mxu0 0
        %4294 = vmatpush1.bf16.msra.mxu0 0
        %4295 = vmatprep.subr.bf16.mxu0 0
        %4296 = vmatpush1.bf16.msra.mxu0 0
        %4297 = vmatprep.subr.bf16.mxu0 0
        %4298 = vmatpush1.bf16.msra.mxu0 0
        %4299 = vmatprep.mubr.bf16.mxu0 0
        %4300 = vmatmul.mubr.bf16.gmra.mrb[0].mxu0 %v4212
        %v4301 = vpop.f32.mrb[0].mxu0
        %v4302 = vadd.f32 0.0, %v4301
        %v4303 = vpop.f32.mrb[0].mxu0
        %v4304 = vadd.f32 0.0, %v4303
        %v4305 = vpop.f32.mrb[0].mxu0
        %v4306 = vpop.f32.mrb[0].mxu0
        %4307 = vdwg.mxu0
        %v4308 = vpack.c.bf16 %v4261, %v4261
        %v4309 = vpack.c.bf16 %v4263, %v4263
        %v4310 = vpack.c.bf16 %v4302, %v4302
        %v4311 = vpack.c.bf16 %v4304, %v4304
        %v4312 = vld [vmem:[#allocation11] sm:$0xf]
        %v4313 = vld [vmem:[#allocation11 + $0x4] sm:$0xf]
        %v4314 = vld [vmem:[#allocation11 + $0x8] sm:$0xf]
        %v4315 = vld [vmem:[#allocation11 + $0xc] sm:$0xf]
        %v4316 = vld [vmem:[#allocation11 + $0x10] sm:$0xf]
        %v4317 = vld [vmem:[#allocation11 + $0x14] sm:$0xf]
        %v4318 = vld [vmem:[#allocation11 + $0x18] sm:$0xf]
        %v4319 = vld [vmem:[#allocation11 + $0x1c] sm:$0xf]
        %v4320 = vld [vmem:[#allocation11 + $0x20] sm:$0xf]
        %v4321 = vld [vmem:[#allocation11 + $0x24] sm:$0xf]
        %v4322 = vld [vmem:[#allocation11 + $0x28] sm:$0xf]
        %v4323 = vld [vmem:[#allocation11 + $0x2c] sm:$0xf]
        %v4324 = vld [vmem:[#allocation11 + $0x30] sm:$0xf]
        %v4325 = vld [vmem:[#allocation11 + $0x34] sm:$0xf]
        %v4326 = vld [vmem:[#allocation11 + $0x38] sm:$0xf]
        %v4327 = vld [vmem:[#allocation11 + $0x3c] sm:$0xf]
        %v4328 = vld [vmem:[#allocation11 + $0x40] sm:$0xf]
        %v4329 = vld [vmem:[#allocation11 + $0x44] sm:$0xf]
        %v4330 = vld [vmem:[#allocation11 + $0x48] sm:$0xf]
        %v4331 = vld [vmem:[#allocation11 + $0x4c] sm:$0xf]
        %v4332 = vld [vmem:[#allocation11 + $0x50] sm:$0xf]
        %v4333 = vld [vmem:[#allocation11 + $0x54] sm:$0xf]
        %v4334 = vld [vmem:[#allocation11 + $0x58] sm:$0xf]
        %v4335 = vld [vmem:[#allocation11 + $0x5c] sm:$0xf]
        %v4336 = vld [vmem:[#allocation11 + $0x60] sm:$0xf]
        %v4337 = vld [vmem:[#allocation11 + $0x64] sm:$0xf]
        %v4338 = vld [vmem:[#allocation11 + $0x68] sm:$0xf]
        %v4339 = vld [vmem:[#allocation11 + $0x6c] sm:$0xf]
        %v4340 = vld [vmem:[#allocation11 + $0x70] sm:$0xf]
        %v4341 = vld [vmem:[#allocation11 + $0x74] sm:$0xf]
        %v4342 = vld [vmem:[#allocation11 + $0x78] sm:$0xf]
        %v4343 = vld [vmem:[#allocation11 + $0x7c] sm:$0xf]
        %v4344 = vld [vmem:[#allocation11 + $0x80] sm:$0xf]
        %v4345 = vld [vmem:[#allocation11 + $0x84] sm:$0xf]
        %v4346 = vld [vmem:[#allocation11 + $0x88] sm:$0xf]
        %v4347 = vld [vmem:[#allocation11 + $0x8c] sm:$0xf]
        %v4348 = vld [vmem:[#allocation11 + $0x90] sm:$0xf]
        %v4349 = vld [vmem:[#allocation11 + $0x94] sm:$0xf]
        %v4350 = vld [vmem:[#allocation11 + $0x98] sm:$0xf]
        %v4351 = vld [vmem:[#allocation11 + $0x9c] sm:$0xf]
        %v4352 = vld [vmem:[#allocation11 + $0xa0] sm:$0xf]
        %v4353 = vld [vmem:[#allocation11 + $0xa4] sm:$0xf]
        %v4354 = vld [vmem:[#allocation11 + $0xa8] sm:$0xf]
        %v4355 = vld [vmem:[#allocation11 + $0xac] sm:$0xf]
        %v4356 = vld [vmem:[#allocation11 + $0xb0] sm:$0xf]
        %v4357 = vld [vmem:[#allocation11 + $0xb4] sm:$0xf]
        %v4358 = vld [vmem:[#allocation11 + $0xb8] sm:$0xf]
        %v4359 = vld [vmem:[#allocation11 + $0xbc] sm:$0xf]
        %v4360 = vld [vmem:[#allocation11 + $0xc0] sm:$0xf]
        %v4361 = vld [vmem:[#allocation11 + $0xc4] sm:$0xf]
        %v4362 = vld [vmem:[#allocation13] sm:$0x1]
        %v4364 = vlaneseq
        %v4365 = vshrl.u32 %v4364, 7
        %v4366 = vsub.s32 0, %v4365
        %v4367 = vrot.slane %v4362, %v4366
        %v4419 = vunpack.c.l.b16 %v4312
        %v4420 = vunpack.c.l.b16 %v4313
        %v4421 = vunpack.c.l.b16 %v4314
        %v4422 = vunpack.c.l.b16 %v4315
        %v4423 = vunpack.c.l.b16 %v4316
        %v4424 = vunpack.c.l.b16 %v4317
        %v4425 = vunpack.c.l.b16 %v4318
        %v4426 = vunpack.c.l.b16 %v4319
        %v4427 = vunpack.c.l.b16 %v4320
        %v4428 = vunpack.c.l.b16 %v4321
        %v4429 = vunpack.c.l.b16 %v4322
        %v4430 = vunpack.c.l.b16 %v4323
        %v4431 = vunpack.c.l.b16 %v4324
        %v4432 = vunpack.c.l.b16 %v4325
        %v4433 = vunpack.c.l.b16 %v4326
        %v4434 = vunpack.c.l.b16 %v4327
        %v4435 = vunpack.c.l.b16 %v4328
        %v4436 = vunpack.c.l.b16 %v4329
        %v4437 = vunpack.c.l.b16 %v4330
        %v4438 = vunpack.c.l.b16 %v4331
        %v4439 = vunpack.c.l.b16 %v4332
        %v4440 = vunpack.c.l.b16 %v4333
        %v4441 = vunpack.c.l.b16 %v4334
        %v4442 = vunpack.c.l.b16 %v4335
        %v4443 = vunpack.c.l.b16 %v4336
        %v4444 = vunpack.c.l.b16 %v4337
        %v4445 = vunpack.c.l.b16 %v4338
        %v4446 = vunpack.c.l.b16 %v4339
        %v4447 = vunpack.c.l.b16 %v4340
        %v4448 = vunpack.c.l.b16 %v4341
        %v4449 = vunpack.c.l.b16 %v4342
        %v4450 = vunpack.c.l.b16 %v4343
        %v4451 = vunpack.c.l.b16 %v4344
        %v4452 = vunpack.c.l.b16 %v4345
        %v4453 = vunpack.c.l.b16 %v4346
        %v4454 = vunpack.c.l.b16 %v4347
        %v4455 = vunpack.c.l.b16 %v4348
        %v4456 = vunpack.c.l.b16 %v4349
        %v4457 = vunpack.c.l.b16 %v4350
        %v4458 = vunpack.c.l.b16 %v4351
        %v4459 = vunpack.c.l.b16 %v4352
        %v4460 = vunpack.c.l.b16 %v4353
        %v4461 = vunpack.c.l.b16 %v4354
        %v4462 = vunpack.c.l.b16 %v4355
        %v4463 = vunpack.c.l.b16 %v4356
        %v4464 = vunpack.c.l.b16 %v4357
        %v4465 = vunpack.c.l.b16 %v4358
        %v4466 = vunpack.c.l.b16 %v4359
        %v4467 = vunpack.c.l.b16 %v4360
        %v4468 = vunpack.c.l.b16 %v4361
        %v4469 = vpack.c.b16 %v4420, %v4419
        %v4470 = vpack.c.b16 %v4422, %v4421
        %v4471 = vpack.c.b16 %v4424, %v4423
        %v4472 = vpack.c.b16 %v4426, %v4425
        %v4473 = vpack.c.b16 %v4428, %v4427
        %v4474 = vpack.c.b16 %v4430, %v4429
        %v4475 = vpack.c.b16 %v4432, %v4431
        %v4476 = vpack.c.b16 %v4434, %v4433
        %v4477 = vpack.c.b16 %v4436, %v4435
        %v4478 = vpack.c.b16 %v4438, %v4437
        %v4479 = vpack.c.b16 %v4440, %v4439
        %v4480 = vpack.c.b16 %v4442, %v4441
        %v4481 = vpack.c.b16 %v4444, %v4443
        %v4482 = vpack.c.b16 %v4446, %v4445
        %v4483 = vpack.c.b16 %v4448, %v4447
        %v4484 = vpack.c.b16 %v4450, %v4449
        %v4485 = vpack.c.b16 %v4452, %v4451
        %v4486 = vpack.c.b16 %v4454, %v4453
        %v4487 = vpack.c.b16 %v4456, %v4455
        %v4488 = vpack.c.b16 %v4458, %v4457
        %v4489 = vpack.c.b16 %v4460, %v4459
        %v4490 = vpack.c.b16 %v4462, %v4461
        %v4491 = vpack.c.b16 %v4464, %v4463
        %v4492 = vpack.c.b16 %v4466, %v4465
        %v4493 = vpack.c.b16 %v4468, %v4467
        %vm4519 = vcmask 130048
        %v4521 = vsel %vm4519, %v4311, 0
        %4523 = vmatprep.subr.bf16.mxu0 0
        %4524 = vmatpush1.bf16.msra.mxu0 %v4469
        %4525 = vmatprep.subr.bf16.mxu0 0
        %4526 = vmatpush1.bf16.msra.mxu0 %v4470
        %4527 = vmatprep.subr.bf16.mxu0 0
        %4528 = vmatpush1.bf16.msra.mxu0 %v4471
        %4529 = vmatprep.subr.bf16.mxu0 0
        %4530 = vmatpush1.bf16.msra.mxu0 %v4472
        %4531 = vmatprep.subr.bf16.mxu0 0
        %4532 = vmatpush1.bf16.msra.mxu0 %v4473
        %4533 = vmatprep.subr.bf16.mxu0 0
        %4534 = vmatpush1.bf16.msra.mxu0 %v4474
        %4535 = vmatprep.subr.bf16.mxu0 0
        %4536 = vmatpush1.bf16.msra.mxu0 %v4475
        %4537 = vmatprep.subr.bf16.mxu0 0
        %4538 = vmatpush1.bf16.msra.mxu0 %v4476
        %4539 = vmatprep.subr.bf16.mxu0 0
        %4540 = vmatpush1.bf16.msra.mxu0 %v4477
        %4541 = vmatprep.subr.bf16.mxu0 0
        %4542 = vmatpush1.bf16.msra.mxu0 %v4478
        %4543 = vmatprep.subr.bf16.mxu0 0
        %4544 = vmatpush1.bf16.msra.mxu0 %v4479
        %4545 = vmatprep.subr.bf16.mxu0 0
        %4546 = vmatpush1.bf16.msra.mxu0 %v4480
        %4547 = vmatprep.subr.bf16.mxu0 0
        %4548 = vmatpush1.bf16.msra.mxu0 %v4481
        %4549 = vmatprep.subr.bf16.mxu0 0
        %4550 = vmatpush1.bf16.msra.mxu0 %v4482
        %4551 = vmatprep.subr.bf16.mxu0 0
        %4552 = vmatpush1.bf16.msra.mxu0 %v4483
        %4553 = vmatprep.subr.bf16.mxu0 0
        %4554 = vmatpush1.bf16.msra.mxu0 %v4484
        %4555 = vmatprep.mubr.bf16.mxu0 %v4309
        %4556 = vmatmul.mubr.bf16.gmra.mrb[0].mxu0 %v4308
        %v4557 = vpop.f32.mrb[0].mxu0
        %v4558 = vadd.f32 %v4367, %v4557
        %v4559 = vpop.f32.mrb[0].mxu0
        %v4560 = vpop.f32.mrb[0].mxu0
        %v4561 = vpop.f32.mrb[0].mxu0
        %4562 = vdwg.mxu0
        %4563 = vmatprep.subr.bf16.mxu0 0
        %4564 = vmatpush1.bf16.msra.mxu0 %v4485
        %4565 = vmatprep.subr.bf16.mxu0 0
        %4566 = vmatpush1.bf16.msra.mxu0 %v4486
        %4567 = vmatprep.subr.bf16.mxu0 0
        %4568 = vmatpush1.bf16.msra.mxu0 %v4487
        %4569 = vmatprep.subr.bf16.mxu0 0
        %4570 = vmatpush1.bf16.msra.mxu0 %v4488
        %4571 = vmatprep.subr.bf16.mxu0 0
        %4572 = vmatpush1.bf16.msra.mxu0 %v4489
        %4573 = vmatprep.subr.bf16.mxu0 0
        %4574 = vmatpush1.bf16.msra.mxu0 %v4490
        %4575 = vmatprep.subr.bf16.mxu0 0
        %4576 = vmatpush1.bf16.msra.mxu0 %v4491
        %4577 = vmatprep.subr.bf16.mxu0 0
        %4578 = vmatpush1.bf16.msra.mxu0 %v4492
        %4579 = vmatprep.subr.bf16.mxu0 0
        %4580 = vmatpush1.bf16.msra.mxu0 %v4493
        %4581 = vmatprep.subr.bf16.mxu0 0
        %4582 = vmatpush1.bf16.msra.mxu0 0
        %4583 = vmatprep.subr.bf16.mxu0 0
        %4584 = vmatpush1.bf16.msra.mxu0 0
        %4585 = vmatprep.subr.bf16.mxu0 0
        %4586 = vmatpush1.bf16.msra.mxu0 0
        %4587 = vmatprep.subr.bf16.mxu0 0
        %4588 = vmatpush1.bf16.msra.mxu0 0
        %4589 = vmatprep.subr.bf16.mxu0 0
        %4590 = vmatpush1.bf16.msra.mxu0 0
        %4591 = vmatprep.subr.bf16.mxu0 0
        %4592 = vmatpush1.bf16.msra.mxu0 0
        %4593 = vmatprep.subr.bf16.mxu0 0
        %4594 = vmatpush1.bf16.msra.mxu0 0
        %4595 = vmatprep.mubr.bf16.mxu0 %v4521
        %4596 = vmatmul.mubr.bf16.gmra.mrb[0].mxu0 %v4310
        %v4597 = vpop.f32.mrb[0].mxu0
        %v4598 = vadd.f32 %v4558, %v4597
        %v4599 = vpop.f32.mrb[0].mxu0
        %v4600 = vpop.f32.mrb[0].mxu0
        %v4601 = vpop.f32.mrb[0].mxu0
        %4602 = vdwg.mxu0
        %v4603 = vmax.f32 %v4598, 0.0
        %v4604 = vpack.c.bf16 %v4603, %v4603
        %v4605 = vld [vmem:[%s12] sm:$0xf]
        %v4606 = vld [vmem:[%s12 + $0x4] sm:$0xf]
        %v4607 = vld [vmem:[%s12 + $0x8] sm:$0xf]
        %v4608 = vld [vmem:[%s12 + $0xc] sm:$0xf]
        %v4609 = vld [vmem:[%s12 + $0x10] sm:$0xf]
        %v4610 = vld [vmem:[%s12 + $0x14] sm:$0xf]
        %v4611 = vld [vmem:[%s12 + $0x18] sm:$0xf]
        %v4612 = vld [vmem:[%s12 + $0x1c] sm:$0xf]
        %v4613 = vld [vmem:[%s12 + $0x20] sm:$0xf]
        %v4614 = vld [vmem:[%s12 + $0x24] sm:$0xf]
        %v4615 = vld [vmem:[%s12 + $0x28] sm:$0xf]
        %v4616 = vld [vmem:[%s12 + $0x2c] sm:$0xf]
        %v4617 = vld [vmem:[%s12 + $0x30] sm:$0xf]
        %v4618 = vld [vmem:[%s12 + $0x34] sm:$0xf]
        %v4619 = vld [vmem:[%s12 + $0x38] sm:$0xf]
        %v4620 = vld [vmem:[#allocation14] sm:$0x1]
        %v4622 = vlaneseq
        %v4623 = vshrl.u32 %v4622, 7
        %v4624 = vsub.s32 0, %v4623
        %v4625 = vrot.slane %v4620, %v4624
        %v4642 = vunpack.c.l.b16 %v4605
        %v4643 = vunpack.c.l.b16 %v4606
        %v4644 = vunpack.c.l.b16 %v4607
        %v4645 = vunpack.c.l.b16 %v4608
        %v4646 = vunpack.c.l.b16 %v4609
        %v4647 = vunpack.c.l.b16 %v4610
        %v4648 = vunpack.c.l.b16 %v4611
        %v4649 = vunpack.c.l.b16 %v4612
        %v4650 = vunpack.c.l.b16 %v4613
        %v4651 = vunpack.c.l.b16 %v4614
        %v4652 = vunpack.c.l.b16 %v4615
        %v4653 = vunpack.c.l.b16 %v4616
        %v4654 = vunpack.c.l.b16 %v4617
        %v4655 = vunpack.c.l.b16 %v4618
        %v4656 = vunpack.c.l.b16 %v4619
        %v4657 = vpack.c.b16 %v4643, %v4642
        %v4658 = vpack.c.b16 %v4645, %v4644
        %v4659 = vpack.c.b16 %v4647, %v4646
        %v4660 = vpack.c.b16 %v4649, %v4648
        %v4661 = vpack.c.b16 %v4651, %v4650
        %v4662 = vpack.c.b16 %v4653, %v4652
        %v4663 = vpack.c.b16 %v4655, %v4654
        %v4664 = vpack.c.b16 %v4656, %v4656
        %vm4672 = vcmask 982016
        %v4674 = vsel %vm4672, %v4604, 0
        %v4677 = vsel %vm1203, %v4664, 0
        %4679 = vmatprep.subr.bf16.mxu0 0
        %4680 = vmatpush1.bf16.msra.mxu0 %v4657
        %4681 = vmatprep.subr.bf16.mxu0 0
        %4682 = vmatpush1.bf16.msra.mxu0 %v4658
        %4683 = vmatprep.subr.bf16.mxu0 0
        %4684 = vmatpush1.bf16.msra.mxu0 %v4659
        %4685 = vmatprep.subr.bf16.mxu0 0
        %4686 = vmatpush1.bf16.msra.mxu0 %v4660
        %4687 = vmatprep.subr.bf16.mxu0 0
        %4688 = vmatpush1.bf16.msra.mxu0 %v4661
        %4689 = vmatprep.subr.bf16.mxu0 0
        %4690 = vmatpush1.bf16.msra.mxu0 %v4662
        %4691 = vmatprep.subr.bf16.mxu0 0
        %4692 = vmatpush1.bf16.msra.mxu0 %v4663
        %4693 = vmatprep.subr.bf16.mxu0 0
        %4694 = vmatpush1.bf16.msra.mxu0 %v4677
        %4695 = vmatprep.subr.bf16.mxu0 0
        %4696 = vmatpush1.bf16.msra.mxu0 0
        %4697 = vmatprep.subr.bf16.mxu0 0
        %4698 = vmatpush1.bf16.msra.mxu0 0
        %4699 = vmatprep.subr.bf16.mxu0 0
        %4700 = vmatpush1.bf16.msra.mxu0 0
        %4701 = vmatprep.subr.bf16.mxu0 0
        %4702 = vmatpush1.bf16.msra.mxu0 0
        %4703 = vmatprep.subr.bf16.mxu0 0
        %4704 = vmatpush1.bf16.msra.mxu0 0
        %4705 = vmatprep.subr.bf16.mxu0 0
        %4706 = vmatpush1.bf16.msra.mxu0 0
        %4707 = vmatprep.subr.bf16.mxu0 0
        %4708 = vmatpush1.bf16.msra.mxu0 0
        %4709 = vmatprep.subr.bf16.mxu0 0
        %4710 = vmatpush1.bf16.msra.mxu0 0
        %4711 = vmatprep.mubr.bf16.mxu0 0
        %4712 = vmatmul.mubr.bf16.gmra.mrb[0].mxu0 %v4674
        %v4713 = vpop.f32.mrb[0].mxu0
        %v4714 = vadd.f32 %v4625, %v4713
        %v4715 = vpop.f32.mrb[0].mxu0
        %v4716 = vpop.f32.mrb[0].mxu0
        %v4717 = vpop.f32.mrb[0].mxu0
        %4718 = vdwg.mxu0
        %v4719 = vmax.f32 %v4714, 0.0
        %v4720 = vpack.c.bf16 %v4719, %v4719
        %v4721 = vld [vmem:[#allocation16] sm:$0xf]
        %v4722 = vld [vmem:[#allocation16 + $0x4] sm:$0xf]
        %v4723 = vld [vmem:[#allocation16 + $0x8] sm:$0xf]
        %v4724 = vld [vmem:[#allocation16 + $0xc] sm:$0xf]
        %v4725 = vld [vmem:[#allocation16 + $0x10] sm:$0xf]
        %v4726 = vld [vmem:[#allocation16 + $0x14] sm:$0xf]
        %v4727 = vld [vmem:[#allocation16 + $0x18] sm:$0xf]
        %v4728 = vld [vmem:[#allocation16 + $0x1c] sm:$0xf]
        %v4729 = vld [vmem:[#allocation16 + $0x20] sm:$0xf]
        %v4730 = vld [vmem:[#allocation16 + $0x24] sm:$0xf]
        %v4731 = vld [vmem:[#allocation16 + $0x28] sm:$0x3]
        %v4732 = vld [vmem:[#allocation17] sm:$0x1]
        %v4734 = vlaneseq
        %v4735 = vshrl.u32 %v4734, 7
        %v4736 = vsub.s32 0, %v4735
        %v4737 = vrot.slane %v4732, %v4736
        %v4750 = vunpack.c.l.b16 %v4721
        %v4751 = vunpack.c.l.b16 %v4722
        %v4752 = vunpack.c.l.b16 %v4723
        %v4753 = vunpack.c.l.b16 %v4724
        %v4754 = vunpack.c.l.b16 %v4725
        %v4755 = vunpack.c.l.b16 %v4726
        %v4756 = vunpack.c.l.b16 %v4727
        %v4757 = vunpack.c.l.b16 %v4728
        %v4758 = vunpack.c.l.b16 %v4729
        %v4759 = vunpack.c.l.b16 %v4730
        %v4760 = vunpack.c.l.b16 %v4731
        %v4761 = vpack.c.b16 %v4751, %v4750
        %v4762 = vpack.c.b16 %v4753, %v4752
        %v4763 = vpack.c.b16 %v4755, %v4754
        %v4764 = vpack.c.b16 %v4757, %v4756
        %v4765 = vpack.c.b16 %v4759, %v4758
        %v4766 = vpack.c.b16 %v4760, %v4760
        %v4773 = vsel %vm2991, %v4720, 0
        %v4776 = vsel %vm3429, %v4766, 0
        %4778 = vmatprep.subr.bf16.mxu0 0
        %4779 = vmatpush1.bf16.msra.mxu0 %v4761
        %4780 = vmatprep.subr.bf16.mxu0 0
        %4781 = vmatpush1.bf16.msra.mxu0 %v4762
        %4782 = vmatprep.subr.bf16.mxu0 0
        %4783 = vmatpush1.bf16.msra.mxu0 %v4763
        %4784 = vmatprep.subr.bf16.mxu0 0
        %4785 = vmatpush1.bf16.msra.mxu0 %v4764
        %4786 = vmatprep.subr.bf16.mxu0 0
        %4787 = vmatpush1.bf16.msra.mxu0 %v4765
        %4788 = vmatprep.subr.bf16.mxu0 0
        %4789 = vmatpush1.bf16.msra.mxu0 %v4776
        %4790 = vmatprep.subr.bf16.mxu0 0
        %4791 = vmatpush1.bf16.msra.mxu0 0
        %4792 = vmatprep.subr.bf16.mxu0 0
        %4793 = vmatpush1.bf16.msra.mxu0 0
        %4794 = vmatprep.subr.bf16.mxu0 0
        %4795 = vmatpush1.bf16.msra.mxu0 0
        %4796 = vmatprep.subr.bf16.mxu0 0
        %4797 = vmatpush1.bf16.msra.mxu0 0
        %4798 = vmatprep.subr.bf16.mxu0 0
        %4799 = vmatpush1.bf16.msra.mxu0 0
        %4800 = vmatprep.subr.bf16.mxu0 0
        %4801 = vmatpush1.bf16.msra.mxu0 0
        %4802 = vmatprep.subr.bf16.mxu0 0
        %4803 = vmatpush1.bf16.msra.mxu0 0
        %4804 = vmatprep.subr.bf16.mxu0 0
        %4805 = vmatpush1.bf16.msra.mxu0 0
        %4806 = vmatprep.subr.bf16.mxu0 0
        %4807 = vmatpush1.bf16.msra.mxu0 0
        %4808 = vmatprep.subr.bf16.mxu0 0
        %4809 = vmatpush1.bf16.msra.mxu0 0
        %4810 = vmatprep.mubr.bf16.mxu0 0
        %4811 = vmatmul.mubr.bf16.gmra.mrb[0].mxu0 %v4773
        %v4812 = vpop.f32.mrb[0].mxu0
        %v4813 = vadd.f32 %v4737, %v4812
        %v4814 = vpop.f32.mrb[0].mxu0
        %v4815 = vpop.f32.mrb[0].mxu0
        %v4816 = vpop.f32.mrb[0].mxu0
        %4817 = vdwg.mxu0
        %4818 = vst [vmem:[%s651] sm:$0xff] %v4813
        %s4819 = sand.u32 %s385, 1
        %s4820 = scalar_lea.sflag [#allocation4], %s4819
        %s4821 = sand.u32 %s385, 1
        %s4822 = smul.addr %s4821, 8
        %s4823 = scalar_lea.vmem [#allocation19], %s4822
        // Predicated region
        $region125: #{lenet_forward.1} parent=83 // pred_check
          %p4824 = pneg %p395
        $region126: #{lenet_forward.1} parent=83 // pred_check_branch
          %4826 = sbr.rel (%p4824) target = $region128
        $region127: #{lenet_forward.1} parent=83 // pred_region
          %s4828 = ssub.s32 128, 128
          %4829 = vsyncadd %s4820, %s4828
          %s4830 = smul.addr %s36, 128
          %s4831 = scalar_lea.hbm %s16, %s4830
          %s4833 = sshll.u32 %s4823, 4
          %s4834 = int_to_ptr.vmem [resolvable:$true] %s4833
          %4836 = dma.vmem_to_hbm [thread:$0]  %s4834, 128, %s4831, %s4820
        $region128: #{lenet_forward.1} parent=83 // pred_fallthru
          _
      $region84: #{lenet_forward.1} parent=5 // pred_fallthru
        _
      %p4837 = scmp.le.s32.totalorder 2, %s31
      // Predicated region
      $region129: #{lenet_forward.1} parent=5 // pred_check
        %p4838 = pneg %p4837
      $region130: #{lenet_forward.1} parent=5 // pred_check_branch
        %4840 = sbr.rel (%p4838) target = $region132
      $region131: #{lenet_forward.1} parent=5 // pred_region
        %s4841 = ssub.s32 %s31, 2
        // Predicated region
        $region133: #{lenet_forward.1} parent=131 // pred_check
          %p4842 = pneg %p401
        $region134: #{lenet_forward.1} parent=131 // pred_check_branch
          %4844 = sbr.rel (%p4842) target = $region136
        $region135: #{lenet_forward.1} parent=131 // pred_region
          %s4845 = sand.u32 %s386, 1
          %s4846 = scalar_lea.sflag [#allocation4], %s4845
          %s4847 = sand.u32 %s386, 1
          %s4848 = smul.addr %s4847, 8
          %s4849 = scalar_lea.vmem [#allocation19], %s4848
          %4850 = dma.done %s4846, 128
        $region136: #{lenet_forward.1} parent=131 // pred_fallthru
          _
      $region132: #{lenet_forward.1} parent=5 // pred_fallthru
        _
    $region6: #{lenet_forward.1} parent=1 // loop_footer
      %s35 = sadd.s32 1, %s31
    $region7: #{lenet_forward.1} parent=1 // loop_footer_branch
      %30 = sbr.rel target = $region3
    $region8: #{lenet_forward.1} parent=1 // loop_exit
      _
    %4851 = vsyncpa [#allocation3], 1
    %s4852 = scalar_lea.sflag [#allocation3], 1
    %4853 = vsyncpa %s4852, 1
    %4854 = vsyncpa [#allocation6], 1
    %4855 = vsyncpa [#allocation9], 1
    %4856 = vsyncpa [#allocation12], 1
    %4857 = vsyncpa [#allocation15], 1
    %4858 = vsyncpa [#allocation18], 1
    %4859 = vsyncpa [#allocation4], 1
    %s4860 = scalar_lea.sflag [#allocation4], 1
    %4861 = vsyncpa %s4860, 1

</llo_original>
